<compile_context>
chip_gen: v7x
topology: tpu7x:2x2x1
jax: 0.10.0
libtpu: 0.0.40
codegen_flags: <defaults>
</compile_context>

<pallas_src>
import functools

import jax
import jax.numpy as jnp
from jax.experimental import pallas as pl
from jax.experimental.pallas import tpu as pltpu

_LN_EPS = 1e-5  # PyTorch nn.LayerNorm default


def _gelu_tanh(x):
    c = 0.7978845608028654  # sqrt(2/pi)
    return 0.5 * x * (1.0 + jnp.tanh(c * (x + 0.044715 * x * x * x)))


def _batch_tile(b, cap=8):
    """Largest divisor of b <= cap, keeping >=2 grid steps when b >= 2 so the
    second TensorCore (v7x megacore) gets work."""
    cap = min(cap, max(1, b // 2))
    for t in range(min(b, max(cap, 1)), 0, -1):
        if b % t == 0:
            return t
    return 1


def _row_tile(rows, cap=512):
    """Row tile for the flattened FFN: the largest multiple of 8 dividing
    `rows` up to `cap` (bigger tiles -> closer to HBM roofline on v6e), while
    keeping >=2 grid steps for the v7x second TensorCore."""
    if rows <= 16:
        return rows
    cap = min(cap, rows // 2)
    best = 0
    for t in range(8, cap + 1, 8):
        if rows % t == 0:
            best = t
    if best:
        return best
    for t in range(cap, 0, -1):           # fallback: any divisor
        if rows % t == 0:
            return t
    return rows                            # last resort (prime row count)


def _vmem_limit_bytes(est):
    # 2x headroom for compiler temporaries; clamp to a range that is safe from
    # v5e (16 MiB default scoped) up to v7x (64 MiB physical VMEM).
    return int(min(max(2 * est, 16 * 1024 * 1024), 64 * 1024 * 1024))


# ---------------------------------------------------------------------------
# Embedding: cls-token concat + positional embedding (emb_dropout p=0 => id).
# Plain JAX per the perf review: tiny memory-bound elementwise op, XLA fuses
# it; a dedicated Pallas launch only adds pipeline-step overhead.
# ---------------------------------------------------------------------------
def embed_tokens(inp, cls_tok, pos_emb):
    b = inp.shape[0]
    cls = jnp.broadcast_to(cls_tok, (b,) + cls_tok.shape[1:])
    return jnp.concatenate([cls, inp], axis=1) + pos_emb


# ---------------------------------------------------------------------------
# One-time host-side parameter folding (hoisted out of the per-forward path).
#   LN(x) @ W = x_hat @ (diag(gamma) W) + beta @ W   (x_hat shared by q/k/v),
#   softmax scale folded into the Q columns, Q/K/V fused into one weight,
#   W_o split per head so per-head outputs accumulate into (seq, dim).
# Note: fold-then-quantize, so bf16 rounding differs slightly from the
# un-fused reference (covered by the loose bf16 tolerance).
# ---------------------------------------------------------------------------
def fold_params(params, *, heads, dim_head, compute_dtype=jnp.bfloat16):
    inner = heads * dim_head
    scale = dim_head ** -0.5
    layers = []
    for layer in params["layers"]:
        a = layer["attn"]
        dim = a["wq"].shape[0]
        wq = (a["gamma_q"][:, None] * a["wq"]) * scale
        wk = a["gamma_k"][:, None] * a["wk"]
        wv = a["gamma_v"][:, None] * a["wv"]
        bq = (a["beta_q"] @ a["wq"]) * scale
        bk = a["beta_k"] @ a["wk"]
        bv = a["beta_v"] @ a["wv"]
        attn = dict(
            w_qkv=jnp.concatenate([wq, wk, wv], axis=1).astype(compute_dtype),
            b_qkv=jnp.concatenate([bq, bk, bv]).reshape(1, 3 * inner).astype(jnp.float32),
            w_o=a["wo"].reshape(heads, dim_head, dim).astype(compute_dtype),
            b_o=a["bo"].reshape(1, dim).astype(jnp.float32),
        )
        f = layer["ffn"]
        hidden = f["w1"].shape[1]
        ffn = dict(
            w1=(f["gamma"][:, None] * f["w1"]).astype(compute_dtype),
            b1=(f["beta"] @ f["w1"] + f["b1"]).reshape(1, hidden).astype(jnp.float32),
            w2=f["w2"].astype(compute_dtype),
            b2=f["b2"].reshape(1, dim).astype(jnp.float32),
        )
        layers.append(dict(attn=attn, ffn=ffn))
    return dict(cls_token=params["cls_token"],
                pos_embedding=params["pos_embedding"],
                layers=layers)


# ---------------------------------------------------------------------------
# Kernel 1: fused attention block (LN stats + fused QKV matmul + per-head
#           softmax attention + per-head output projection accumulation +
#           bias + residual).
# ---------------------------------------------------------------------------
def _attention_block_kernel(x_ref, wqkv_ref, bqkv_ref, wo_ref, bo_ref, o_ref,
                            qkv_scr, *, heads, dim_head, eps):
    b_tile, seq, dim = x_ref.shape
    inner = heads * dim_head
    rows = b_tile * seq
    compute_dtype = wqkv_ref.dtype
    sub_hint = 8 if seq % 8 == 0 else 1

    # LayerNorm statistics only (gamma/beta + softmax scale folded host-side).
    x = x_ref[...].reshape(rows, dim).astype(jnp.float32)
    mu = jnp.mean(x, axis=-1, keepdims=True)
    xc = x - mu
    var = jnp.mean(xc * xc, axis=-1, keepdims=True)
    x_hat = xc * jax.lax.rsqrt(var + eps)

    # Single fused QKV projection (bf16 MXU operands, f32 accumulation).
    # Result parked in VMEM so per-head work only loads small slices.
    qkv = jnp.dot(x_hat.astype(compute_dtype), wqkv_ref[...],
                  preferred_element_type=jnp.float32) + bqkv_ref[...]
    qkv_scr[...] = qkv.astype(compute_dtype)

    # TODO(synk): flash-style KV blocking (online softmax) for long sequences
    #             so the (seq, seq) score block stays within v7x's 64 MiB.
    def batch_body(bi, carry):
        r0 = bi * seq
        if sub_hint > 1:
            r0 = pl.multiple_of(r0, sub_hint)
        y_b = jnp.zeros((seq, dim), jnp.float32)
        for h in range(heads):                      # static loop: static lane offsets
            c0 = h * dim_head
            qh = qkv_scr[pl.ds(r0, seq), c0:c0 + dim_head]
            kh = qkv_scr[pl.ds(r0, seq), inner + c0:inner + c0 + dim_head]
            vh = qkv_scr[pl.ds(r0, seq), 2 * inner + c0:2 * inner + c0 + dim_head]

            # q @ k^T without an explicit transpose: contract the last axes.
            dots = jax.lax.dot_general(qh, kh, (((1,), (1,)), ((), ())),
                                       preferred_element_type=jnp.float32)
            m = jnp.max(dots, axis=-1, keepdims=True)
            e = jnp.exp(dots - m)
            denom = jnp.sum(e, axis=-1, keepdims=True)
            p = e * pl.reciprocal(denom, approx=True)      # EUP slot

            oh = jnp.dot(p.astype(compute_dtype), vh,
                         preferred_element_type=jnp.float32)   # (seq, dim_head)
            # Fold the head straight through its W_o slab into (seq, dim):
            # no narrow masked store at a non-128 lane offset, no head scratch.
            y_b = y_b + jnp.dot(oh.astype(compute_dtype), wo_ref[h],
                                preferred_element_type=jnp.float32)
        x_res = x_ref[bi].astype(jnp.float32)
        o_ref[bi] = (y_b + bo_ref[...] + x_res).astype(o_ref.dtype)
        return carry

    jax.lax.fori_loop(0, b_tile, batch_body, 0)


def attention_block(x, p, *, heads, dim_head, eps=_LN_EPS):
    b, n, dim = x.shape
    inner = heads * dim_head
    w_qkv, b_qkv, w_o, b_o = p["w_qkv"], p["b_qkv"], p["w_o"], p["b_o"]
    compute_dtype = w_qkv.dtype
    cds = jnp.dtype(compute_dtype).itemsize

    b_tile = _batch_tile(b)
    rows = b_tile * n

    # TODO(synk): pad dim/inner/hidden to multiples of 128 host-side (with
    #             masked LN statistics) for fully lane-dense stores at
    #             production shapes (e.g. ViT seq=197, dim_head=64).
    vmem_est = (
        4 * b_tile * n * dim * x.dtype.itemsize          # x + out, double-buffered
        + dim * 3 * inner * cds + 3 * inner * 4          # fused W_qkv + b_qkv (single-buffered)
        + inner * dim * cds + dim * 4                    # W_o + b_o
        + rows * 3 * inner * cds                         # qkv VMEM scratch
        + rows * (2 * dim + 3 * inner) * 4               # in-kernel f32 temporaries
        + n * n * 4 + n * dim * 4                        # scores + per-batch accumulator
    )

    kernel = functools.partial(_attention_block_kernel, heads=heads,
                               dim_head=dim_head, eps=eps)

    def wspec(shape):
        # Grid-invariant weights/biases: single-buffered to halve their VMEM.
        return pl.BlockSpec(shape, lambda i: (0,) * len(shape),
                            pipeline_mode=pl.Buffered(1))

    return pl.pallas_call(
        kernel,
        out_shape=jax.ShapeDtypeStruct((b, n, dim), x.dtype),
        grid_spec=pltpu.PrefetchScalarGridSpec(
            num_scalar_prefetch=0,
            grid=(b // b_tile,),
            in_specs=[
                pl.BlockSpec((b_tile, n, dim), lambda i: (i, 0, 0)),   # x
                wspec((dim, 3 * inner)),                               # fused W_qkv
                wspec((1, 3 * inner)),                                 # fused b_qkv
                wspec((heads, dim_head, dim)),                         # W_o per head
                wspec((1, dim)),                                       # b_o
            ],
            out_specs=pl.BlockSpec((b_tile, n, dim), lambda i: (i, 0, 0)),
            scratch_shapes=[pltpu.VMEM((rows, 3 * inner), compute_dtype)],
        ),
        compiler_params=pltpu.CompilerParams(
            dimension_semantics=("parallel",),
            vmem_limit_bytes=_vmem_limit_bytes(vmem_est)),
    )(x, w_qkv, b_qkv, w_o, b_o)


# ---------------------------------------------------------------------------
# Kernel 2: fused FFN block (LN folded into W1, Linear + GELU + Linear,
#           residual) on flattened (b*n, dim) row tiles.
# ---------------------------------------------------------------------------
def _ffn_block_kernel(x_ref, w1_ref, b1_ref, w2_ref, b2_ref, o_ref, *, eps):
    compute_dtype = w1_ref.dtype
    x = x_ref[...].astype(jnp.float32)                         # (tm, dim)
    mu = jnp.mean(x, axis=-1, keepdims=True)
    xc = x - mu
    var = jnp.mean(xc * xc, axis=-1, keepdims=True)
    x_hat = xc * jax.lax.rsqrt(var + eps)

    h = jnp.dot(x_hat.astype(compute_dtype), w1_ref[...],
                preferred_element_type=jnp.float32) + b1_ref[...]
    h = _gelu_tanh(h)                                          # f32 VPU/EUP (v5e has no bf16 VPU/EUP)
    y = jnp.dot(h.astype(compute_dtype), w2_ref[...],
                preferred_element_type=jnp.float32) + b2_ref[...]
    o_ref[...] = (y + x).astype(o_ref.dtype)


def ffn_block(x, p, *, eps=_LN_EPS):
    b, n, dim = x.shape
    w1, b1, w2, b2 = p["w1"], p["b1"], p["w2"], p["b2"]
    hidden = w1.shape[1]
    compute_dtype = w1.dtype
    cds = jnp.dtype(compute_dtype).itemsize

    rows = b * n
    x2 = x.reshape(rows, dim)                  # lane/sublane-dense row tiles
    tm = _row_tile(rows)

    vmem_est = (
        4 * tm * dim * x.dtype.itemsize                        # x + out, double-buffered
        + 2 * dim * hidden * cds + (hidden + dim) * 4          # W1/W2 (single-buffered) + biases
        + tm * (2 * dim + 2 * hidden) * 4                      # f32 temporaries
    )

    kernel = functools.partial(_ffn_block_kernel, eps=eps)

    def wspec(shape):
        return pl.BlockSpec(shape, lambda i: (0,) * len(shape),
                            pipeline_mode=pl.Buffered(1))

    y = pl.pallas_call(
        kernel,
        out_shape=jax.ShapeDtypeStruct((rows, dim), x.dtype),
        grid_spec=pltpu.PrefetchScalarGridSpec(
            num_scalar_prefetch=0,
            grid=(rows // tm,),
            in_specs=[
                pl.BlockSpec((tm, dim), lambda i: (i, 0)),
                wspec((dim, hidden)),
                wspec((1, hidden)),
                wspec((hidden, dim)),
                wspec((1, dim)),
            ],
            out_specs=pl.BlockSpec((tm, dim), lambda i: (i, 0)),
        ),
        compiler_params=pltpu.CompilerParams(
            dimension_semantics=("parallel",),
            vmem_limit_bytes=_vmem_limit_bytes(vmem_est)),
    )(x2, w1, b1, w2, b2)
    return y.reshape(b, n, dim)


# ---------------------------------------------------------------------------
# Full ProjetTransformer forward (expects folded params from fold_params).
# ---------------------------------------------------------------------------
def projet_transformer_forward(inp, folded, *, heads, dim_head):
    x = embed_tokens(inp, folded["cls_token"], folded["pos_embedding"])
    # TODO(synk): optionally fuse each (attention, FFN) pair into one kernel
    #             (or alias x via input_output_aliases) to halve activation
    #             HBM round trips per layer — biggest win on v5e/v6e.
    for layer in folded["layers"]:
        x = attention_block(x, layer["attn"], heads=heads, dim_head=dim_head)
        x = ffn_block(x, layer["ffn"])
    return x


# ---------------------------------------------------------------------------
# Pure-JAX reference mirroring the PyTorch module (un-folded, un-fused).
# ---------------------------------------------------------------------------
def reference_forward(inp, params, *, heads, dim_head, eps=_LN_EPS):
    b = inp.shape[0]
    cls = jnp.broadcast_to(params["cls_token"],
                           (b,) + params["cls_token"].shape[1:])
    x = jnp.concatenate([cls, inp], axis=1) + params["pos_embedding"]

    def layer_norm(t, gamma, beta):
        mu = jnp.mean(t, axis=-1, keepdims=True)
        var = jnp.mean((t - mu) ** 2, axis=-1, keepdims=True)
        return (t - mu) / jnp.sqrt(var + eps) * gamma + beta

    scale = dim_head ** -0.5
    for layer in params["layers"]:
        a = layer["attn"]
        q = layer_norm(x, a["gamma_q"], a["beta_q"]) @ a["wq"]
        k = layer_norm(x, a["gamma_k"], a["beta_k"]) @ a["wk"]
        v = layer_norm(x, a["gamma_v"], a["beta_v"]) @ a["wv"]

        def split(t):  # 'b n (h d) -> b h n d'
            return t.reshape(b, -1, heads, dim_head).transpose(0, 2, 1, 3)

        qh, kh, vh = split(q), split(k), split(v)
        dots = jnp.einsum("bhid,bhjd->bhij", qh, kh) * scale
        attn = jax.nn.softmax(dots, axis=-1)
        out = jnp.einsum("bhij,bhjd->bhid", attn, vh)
        out = out.transpose(0, 2, 1, 3).reshape(b, -1, heads * dim_head)
        x = out @ a["wo"] + a["bo"] + x

        f = layer["ffn"]
        h = layer_norm(x, f["gamma"], f["beta"]) @ f["w1"] + f["b1"]
        h = _gelu_tanh(h)
        x = h @ f["w2"] + f["b2"] + x
    return x


if __name__ == "__main__":
    # Small shapes consistent with ProjetTransformer.forward: input (b, num_frames, dim).
    batch, num_frames, dim = 2, 16, 32
    depth, heads, dim_head, mlp_dim = 2, 4, 8, 64
    len_invariant, len_specific = 8, 8
    inner = heads * dim_head
    n_cls = len_invariant + len_specific
    n_tot = num_frames + n_cls

    keys = iter(jax.random.split(jax.random.PRNGKey(0), 64))

    def rnd(shape, s=1.0):
        return jax.random.normal(next(keys), shape, jnp.float32) * s

    def make_attn_params():
        return dict(
            gamma_q=1.0 + 0.1 * rnd((dim,)), beta_q=0.1 * rnd((dim,)),
            gamma_k=1.0 + 0.1 * rnd((dim,)), beta_k=0.1 * rnd((dim,)),
            gamma_v=1.0 + 0.1 * rnd((dim,)), beta_v=0.1 * rnd((dim,)),
            wq=rnd((dim, inner), dim ** -0.5),
            wk=rnd((dim, inner), dim ** -0.5),
            wv=rnd((dim, inner), dim ** -0.5),
            wo=rnd((inner, dim), inner ** -0.5),
            bo=0.1 * rnd((dim,)),
        )

    def make_ffn_params():
        return dict(
            gamma=1.0 + 0.1 * rnd((dim,)), beta=0.1 * rnd((dim,)),
            w1=rnd((dim, mlp_dim), dim ** -0.5), b1=0.1 * rnd((mlp_dim,)),
            w2=rnd((mlp_dim, dim), mlp_dim ** -0.5), b2=0.1 * rnd((dim,)),
        )

    params = dict(
        cls_token=rnd((1, n_cls, dim)),
        pos_embedding=rnd((1, n_tot, dim)),
        layers=[dict(attn=make_attn_params(), ffn=make_ffn_params())
                for _ in range(depth)],
    )
    inp = rnd((batch, num_frames, dim))

    ref = reference_forward(inp, params, heads=heads, dim_head=dim_head)

    fwd = jax.jit(functools.partial(projet_transformer_forward,
                                    heads=heads, dim_head=dim_head))

    # f32 MXU operands: tight parity with the reference.
    folded_f32 = fold_params(params, heads=heads, dim_head=dim_head,
                             compute_dtype=jnp.float32)
    out_f32 = jax.block_until_ready(fwd(inp, folded_f32))
    assert out_f32.shape == (batch, n_tot, dim)
    assert jnp.allclose(out_f32, ref, atol=2e-2, rtol=2e-2), (
        f"f32 mismatch, max abs err {float(jnp.max(jnp.abs(out_f32 - ref)))}")

    # Default path: bf16 MXU operands (v5e/v6e/v7x MXU peak), f32 accumulation,
    # f32 softmax / bias / residual.
    folded_bf16 = fold_params(params, heads=heads, dim_head=dim_head)
    out_bf16 = jax.block_until_ready(fwd(inp, folded_bf16))
    assert out_bf16.shape == (batch, n_tot, dim)
    assert jnp.allclose(out_bf16, ref, atol=1.5e-1, rtol=1.5e-1), (
        f"bf16 mismatch, max abs err {float(jnp.max(jnp.abs(out_bf16 - ref)))}")

    print("KERNEL_OK")
</pallas_src>

<mosaic_0001>
module attributes {stable_mosaic.version = 11 : i64} {
  func.func @_attention_block_kernel(%arg0: i32, %arg1: memref<1x32x32xf32, #tpu.memory_space<vmem>>, %arg2: memref<32x96xf32, #tpu.memory_space<vmem>>, %arg3: memref<1x96xf32, #tpu.memory_space<vmem>>, %arg4: memref<4x8x32xf32, #tpu.memory_space<vmem>>, %arg5: memref<1x32xf32, #tpu.memory_space<vmem>>, %arg6: memref<1x32x32xf32, #tpu.memory_space<vmem>>, %arg7: memref<32x96xf32, #tpu.memory_space<vmem>>) attributes {dimension_semantics = [#tpu.dimension_semantics<parallel>], iteration_bounds = array<i64: 2>, scalar_prefetch = 0 : i64, scratch_operands = 1 : i64, tpu.core_type = #tpu.core_type<tc>, window_params = [{transform_indices = @transform_0, window_bounds = array<i64: 1, 32, 32>}, {pipeline_mode = #tpu.pipeline_mode<synchronous>, transform_indices = @transform_1, window_bounds = array<i64: 32, 96>}, {pipeline_mode = #tpu.pipeline_mode<synchronous>, transform_indices = @transform_2, window_bounds = array<i64: 1, 96>}, {pipeline_mode = #tpu.pipeline_mode<synchronous>, transform_indices = @transform_3, window_bounds = array<i64: 4, 8, 32>}, {pipeline_mode = #tpu.pipeline_mode<synchronous>, transform_indices = @transform_4, window_bounds = array<i64: 1, 32>}, {transform_indices = @transform_5, window_bounds = array<i64: 1, 32, 32>}]} {
    %c0 = arith.constant 0 : index
    %c0_0 = arith.constant 0 : index
    %c0_1 = arith.constant 0 : index
    %0 = vector.load %arg1[%c0, %c0_0, %c0_1] : memref<1x32x32xf32, #tpu.memory_space<vmem>>, vector<1x32x32xf32>
    %1 = vector.shape_cast %0 : vector<1x32x32xf32> to vector<32x32xf32>
    %cst = arith.constant dense<0.000000e+00> : vector<32xf32>
    %2 = vector.multi_reduction <add>, %1, %cst [1] : vector<32x32xf32> to vector<32xf32>
    %3 = vector.shape_cast %2 : vector<32xf32> to vector<32x1xf32>
    %cst_2 = arith.constant 3.200000e+01 : f32
    %4 = vector.broadcast %cst_2 : f32 to vector<32x1xf32>
    %5 = arith.divf %3, %4 : vector<32x1xf32>
    %6 = vector.broadcast %5 : vector<32x1xf32> to vector<32x32xf32>
    %7 = arith.subf %1, %6 : vector<32x32xf32>
    %8 = arith.mulf %7, %7 : vector<32x32xf32>
    %cst_3 = arith.constant dense<0.000000e+00> : vector<32xf32>
    %9 = vector.multi_reduction <add>, %8, %cst_3 [1] : vector<32x32xf32> to vector<32xf32>
    %10 = vector.shape_cast %9 : vector<32xf32> to vector<32x1xf32>
    %cst_4 = arith.constant 3.200000e+01 : f32
    %11 = vector.broadcast %cst_4 : f32 to vector<32x1xf32>
    %12 = arith.divf %10, %11 : vector<32x1xf32>
    %cst_5 = arith.constant 9.99999974E-6 : f32
    %13 = vector.broadcast %cst_5 : f32 to vector<32x1xf32>
    %14 = arith.addf %12, %13 : vector<32x1xf32>
    %15 = math.rsqrt %14 : vector<32x1xf32>
    %16 = vector.broadcast %15 : vector<32x1xf32> to vector<32x32xf32>
    %17 = arith.mulf %7, %16 : vector<32x32xf32>
    %c0_6 = arith.constant 0 : index
    %c0_7 = arith.constant 0 : index
    %18 = vector.load %arg2[%c0_6, %c0_7] : memref<32x96xf32, #tpu.memory_space<vmem>>, vector<32x96xf32>
    %cst_8 = arith.constant dense<0.000000e+00> : vector<32x96xf32>
    %19 = tpu.matmul %17, %18, %cst_8 {dimension_numbers = #tpu.dot_dimension_numbers<[1], [0], [0], [1], [0, 0, 1, 1], [], []>} : vector<32x32xf32>, vector<32x96xf32>, vector<32x96xf32> -> vector<32x96xf32>
    %c0_9 = arith.constant 0 : index
    %c0_10 = arith.constant 0 : index
    %20 = vector.load %arg3[%c0_9, %c0_10] : memref<1x96xf32, #tpu.memory_space<vmem>>, vector<1x96xf32>
    %21 = vector.broadcast %20 : vector<1x96xf32> to vector<32x96xf32>
    %22 = arith.addf %19, %21 : vector<32x96xf32>
    %c0_11 = arith.constant 0 : index
    %c0_12 = arith.constant 0 : index
    %23 = vector.load %arg7[%c0_11, %c0_12] : memref<32x96xf32, #tpu.memory_space<vmem>>, vector<32x96xf32>
    tpu.vector_store %arg7[%c0_11, %c0_12], %22 {strides = array<i32>} : memref<32x96xf32, #tpu.memory_space<vmem>>, vector<32x96xf32>,
    %c0_i32 = arith.constant 0 : i32
    %c32_i32 = arith.constant 32 : i32
    %24 = arith.muli %c0_i32, %c32_i32 : i32
    %25 = tpu.assume_multiple %24, 8 : i32
    %cst_13 = arith.constant 0.000000e+00 : f32
    %26 = vector.broadcast %cst_13 : f32 to vector<32x32xf32>
    %27 = arith.index_cast %25 : i32 to index
    %c0_14 = arith.constant 0 : index
    %28 = vector.load %arg7[%27, %c0_14] : memref<32x96xf32, #tpu.memory_space<vmem>>, vector<32x8xf32>
    %29 = arith.index_cast %25 : i32 to index
    %c32 = arith.constant 32 : index
    %30 = vector.load %arg7[%29, %c32] : memref<32x96xf32, #tpu.memory_space<vmem>>, vector<32x8xf32>
    %31 = arith.index_cast %25 : i32 to index
    %c64 = arith.constant 64 : index
    %32 = vector.load %arg7[%31, %c64] : memref<32x96xf32, #tpu.memory_space<vmem>>, vector<32x8xf32>
    %cst_15 = arith.constant dense<0.000000e+00> : vector<32x32xf32>
    %33 = tpu.matmul %28, %30, %cst_15 {dimension_numbers = #tpu.dot_dimension_numbers<[1], [1], [0], [0], [0, 0, 1, 0], [], []>} : vector<32x8xf32>, vector<32x8xf32>, vector<32x32xf32> -> vector<32x32xf32>
    %cst_16 = arith.constant dense<0xFF800000> : vector<32xf32>
    %34 = vector.multi_reduction <maximumf>, %33, %cst_16 [1] : vector<32x32xf32> to vector<32xf32>
    %35 = vector.shape_cast %34 : vector<32xf32> to vector<32x1xf32>
    %36 = vector.broadcast %35 : vector<32x1xf32> to vector<32x32xf32>
    %37 = arith.subf %33, %36 : vector<32x32xf32>
    %38 = math.exp %37 : vector<32x32xf32>
    %cst_17 = arith.constant dense<0.000000e+00> : vector<32xf32>
    %39 = vector.multi_reduction <add>, %38, %cst_17 [1] : vector<32x32xf32> to vector<32xf32>
    %40 = vector.shape_cast %39 : vector<32xf32> to vector<32x1xf32>
    %41 = tpu.reciprocal %40 {approx = true} : vector<32x1xf32> -> vector<32x1xf32>
    %42 = vector.broadcast %41 : vector<32x1xf32> to vector<32x32xf32>
    %43 = arith.mulf %38, %42 : vector<32x32xf32>
    %cst_18 = arith.constant dense<0.000000e+00> : vector<32x8xf32>
    %44 = tpu.matmul %43, %32, %cst_18 {dimension_numbers = #tpu.dot_dimension_numbers<[1], [0], [0], [1], [0, 0, 1, 1], [], []>} : vector<32x32xf32>, vector<32x8xf32>, vector<32x8xf32> -> vector<32x8xf32>
    %c0_19 = arith.constant 0 : index
    %c0_20 = arith.constant 0 : index
    %c0_21 = arith.constant 0 : index
    %45 = vector.load %arg4[%c0_19, %c0_20, %c0_21] : memref<4x8x32xf32, #tpu.memory_space<vmem>>, vector<1x8x32xf32>
    %46 = vector.shape_cast %45 : vector<1x8x32xf32> to vector<8x32xf32>
    %cst_22 = arith.constant dense<0.000000e+00> : vector<32x32xf32>
    %47 = tpu.matmul %44, %46, %cst_22 {dimension_numbers = #tpu.dot_dimension_numbers<[1], [0], [0], [1], [0, 0, 1, 1], [], []>} : vector<32x8xf32>, vector<8x32xf32>, vector<32x32xf32> -> vector<32x32xf32>
    %48 = arith.addf %26, %47 : vector<32x32xf32>
    %49 = arith.index_cast %25 : i32 to index
    %c8 = arith.constant 8 : index
    %50 = vector.load %arg7[%49, %c8] : memref<32x96xf32, #tpu.memory_space<vmem>>, vector<32x8xf32>
    %51 = arith.index_cast %25 : i32 to index
    %c40 = arith.constant 40 : index
    %52 = vector.load %arg7[%51, %c40] : memref<32x96xf32, #tpu.memory_space<vmem>>, vector<32x8xf32>
    %53 = arith.index_cast %25 : i32 to index
    %c72 = arith.constant 72 : index
    %54 = vector.load %arg7[%53, %c72] : memref<32x96xf32, #tpu.memory_space<vmem>>, vector<32x8xf32>
    %cst_23 = arith.constant dense<0.000000e+00> : vector<32x32xf32>
    %55 = tpu.matmul %50, %52, %cst_23 {dimension_numbers = #tpu.dot_dimension_numbers<[1], [1], [0], [0], [0, 0, 1, 0], [], []>} : vector<32x8xf32>, vector<32x8xf32>, vector<32x32xf32> -> vector<32x32xf32>
    %cst_24 = arith.constant dense<0xFF800000> : vector<32xf32>
    %56 = vector.multi_reduction <maximumf>, %55, %cst_24 [1] : vector<32x32xf32> to vector<32xf32>
    %57 = vector.shape_cast %56 : vector<32xf32> to vector<32x1xf32>
    %58 = vector.broadcast %57 : vector<32x1xf32> to vector<32x32xf32>
    %59 = arith.subf %55, %58 : vector<32x32xf32>
    %60 = math.exp %59 : vector<32x32xf32>
    %cst_25 = arith.constant dense<0.000000e+00> : vector<32xf32>
    %61 = vector.multi_reduction <add>, %60, %cst_25 [1] : vector<32x32xf32> to vector<32xf32>
    %62 = vector.shape_cast %61 : vector<32xf32> to vector<32x1xf32>
    %63 = tpu.reciprocal %62 {approx = true} : vector<32x1xf32> -> vector<32x1xf32>
    %64 = vector.broadcast %63 : vector<32x1xf32> to vector<32x32xf32>
    %65 = arith.mulf %60, %64 : vector<32x32xf32>
    %cst_26 = arith.constant dense<0.000000e+00> : vector<32x8xf32>
    %66 = tpu.matmul %65, %54, %cst_26 {dimension_numbers = #tpu.dot_dimension_numbers<[1], [0], [0], [1], [0, 0, 1, 1], [], []>} : vector<32x32xf32>, vector<32x8xf32>, vector<32x8xf32> -> vector<32x8xf32>
    %c1 = arith.constant 1 : index
    %c0_27 = arith.constant 0 : index
    %c0_28 = arith.constant 0 : index
    %67 = vector.load %arg4[%c1, %c0_27, %c0_28] : memref<4x8x32xf32, #tpu.memory_space<vmem>>, vector<1x8x32xf32>
    %68 = vector.shape_cast %67 : vector<1x8x32xf32> to vector<8x32xf32>
    %cst_29 = arith.constant dense<0.000000e+00> : vector<32x32xf32>
    %69 = tpu.matmul %66, %68, %cst_29 {dimension_numbers = #tpu.dot_dimension_numbers<[1], [0], [0], [1], [0, 0, 1, 1], [], []>} : vector<32x8xf32>, vector<8x32xf32>, vector<32x32xf32> -> vector<32x32xf32>
    %70 = arith.addf %48, %69 : vector<32x32xf32>
    %71 = arith.index_cast %25 : i32 to index
    %c16 = arith.constant 16 : index
    %72 = vector.load %arg7[%71, %c16] : memref<32x96xf32, #tpu.memory_space<vmem>>, vector<32x8xf32>
    %73 = arith.index_cast %25 : i32 to index
    %c48 = arith.constant 48 : index
    %74 = vector.load %arg7[%73, %c48] : memref<32x96xf32, #tpu.memory_space<vmem>>, vector<32x8xf32>
    %75 = arith.index_cast %25 : i32 to index
    %c80 = arith.constant 80 : index
    %76 = vector.load %arg7[%75, %c80] : memref<32x96xf32, #tpu.memory_space<vmem>>, vector<32x8xf32>
    %cst_30 = arith.constant dense<0.000000e+00> : vector<32x32xf32>
    %77 = tpu.matmul %72, %74, %cst_30 {dimension_numbers = #tpu.dot_dimension_numbers<[1], [1], [0], [0], [0, 0, 1, 0], [], []>} : vector<32x8xf32>, vector<32x8xf32>, vector<32x32xf32> -> vector<32x32xf32>
    %cst_31 = arith.constant dense<0xFF800000> : vector<32xf32>
    %78 = vector.multi_reduction <maximumf>, %77, %cst_31 [1] : vector<32x32xf32> to vector<32xf32>
    %79 = vector.shape_cast %78 : vector<32xf32> to vector<32x1xf32>
    %80 = vector.broadcast %79 : vector<32x1xf32> to vector<32x32xf32>
    %81 = arith.subf %77, %80 : vector<32x32xf32>
    %82 = math.exp %81 : vector<32x32xf32>
    %cst_32 = arith.constant dense<0.000000e+00> : vector<32xf32>
    %83 = vector.multi_reduction <add>, %82, %cst_32 [1] : vector<32x32xf32> to vector<32xf32>
    %84 = vector.shape_cast %83 : vector<32xf32> to vector<32x1xf32>
    %85 = tpu.reciprocal %84 {approx = true} : vector<32x1xf32> -> vector<32x1xf32>
    %86 = vector.broadcast %85 : vector<32x1xf32> to vector<32x32xf32>
    %87 = arith.mulf %82, %86 : vector<32x32xf32>
    %cst_33 = arith.constant dense<0.000000e+00> : vector<32x8xf32>
    %88 = tpu.matmul %87, %76, %cst_33 {dimension_numbers = #tpu.dot_dimension_numbers<[1], [0], [0], [1], [0, 0, 1, 1], [], []>} : vector<32x32xf32>, vector<32x8xf32>, vector<32x8xf32> -> vector<32x8xf32>
    %c2 = arith.constant 2 : index
    %c0_34 = arith.constant 0 : index
    %c0_35 = arith.constant 0 : index
    %89 = vector.load %arg4[%c2, %c0_34, %c0_35] : memref<4x8x32xf32, #tpu.memory_space<vmem>>, vector<1x8x32xf32>
    %90 = vector.shape_cast %89 : vector<1x8x32xf32> to vector<8x32xf32>
    %cst_36 = arith.constant dense<0.000000e+00> : vector<32x32xf32>
    %91 = tpu.matmul %88, %90, %cst_36 {dimension_numbers = #tpu.dot_dimension_numbers<[1], [0], [0], [1], [0, 0, 1, 1], [], []>} : vector<32x8xf32>, vector<8x32xf32>, vector<32x32xf32> -> vector<32x32xf32>
    %92 = arith.addf %70, %91 : vector<32x32xf32>
    %93 = arith.index_cast %25 : i32 to index
    %c24 = arith.constant 24 : index
    %94 = vector.load %arg7[%93, %c24] : memref<32x96xf32, #tpu.memory_space<vmem>>, vector<32x8xf32>
    %95 = arith.index_cast %25 : i32 to index
    %c56 = arith.constant 56 : index
    %96 = vector.load %arg7[%95, %c56] : memref<32x96xf32, #tpu.memory_space<vmem>>, vector<32x8xf32>
    %97 = arith.index_cast %25 : i32 to index
    %c88 = arith.constant 88 : index
    %98 = vector.load %arg7[%97, %c88] : memref<32x96xf32, #tpu.memory_space<vmem>>, vector<32x8xf32>
    %cst_37 = arith.constant dense<0.000000e+00> : vector<32x32xf32>
    %99 = tpu.matmul %94, %96, %cst_37 {dimension_numbers = #tpu.dot_dimension_numbers<[1], [1], [0], [0], [0, 0, 1, 0], [], []>} : vector<32x8xf32>, vector<32x8xf32>, vector<32x32xf32> -> vector<32x32xf32>
    %cst_38 = arith.constant dense<0xFF800000> : vector<32xf32>
    %100 = vector.multi_reduction <maximumf>, %99, %cst_38 [1] : vector<32x32xf32> to vector<32xf32>
    %101 = vector.shape_cast %100 : vector<32xf32> to vector<32x1xf32>
    %102 = vector.broadcast %101 : vector<32x1xf32> to vector<32x32xf32>
    %103 = arith.subf %99, %102 : vector<32x32xf32>
    %104 = math.exp %103 : vector<32x32xf32>
    %cst_39 = arith.constant dense<0.000000e+00> : vector<32xf32>
    %105 = vector.multi_reduction <add>, %104, %cst_39 [1] : vector<32x32xf32> to vector<32xf32>
    %106 = vector.shape_cast %105 : vector<32xf32> to vector<32x1xf32>
    %107 = tpu.reciprocal %106 {approx = true} : vector<32x1xf32> -> vector<32x1xf32>
    %108 = vector.broadcast %107 : vector<32x1xf32> to vector<32x32xf32>
    %109 = arith.mulf %104, %108 : vector<32x32xf32>
    %cst_40 = arith.constant dense<0.000000e+00> : vector<32x8xf32>
    %110 = tpu.matmul %109, %98, %cst_40 {dimension_numbers = #tpu.dot_dimension_numbers<[1], [0], [0], [1], [0, 0, 1, 1], [], []>} : vector<32x32xf32>, vector<32x8xf32>, vector<32x8xf32> -> vector<32x8xf32>
    %c3 = arith.constant 3 : index
    %c0_41 = arith.constant 0 : index
    %c0_42 = arith.constant 0 : index
    %111 = vector.load %arg4[%c3, %c0_41, %c0_42] : memref<4x8x32xf32, #tpu.memory_space<vmem>>, vector<1x8x32xf32>
    %112 = vector.shape_cast %111 : vector<1x8x32xf32> to vector<8x32xf32>
    %cst_43 = arith.constant dense<0.000000e+00> : vector<32x32xf32>
    %113 = tpu.matmul %110, %112, %cst_43 {dimension_numbers = #tpu.dot_dimension_numbers<[1], [0], [0], [1], [0, 0, 1, 1], [], []>} : vector<32x8xf32>, vector<8x32xf32>, vector<32x32xf32> -> vector<32x32xf32>
    %114 = arith.addf %92, %113 : vector<32x32xf32>
    %115 = arith.index_cast %c0_i32 : i32 to index
    %c0_44 = arith.constant 0 : index
    %c0_45 = arith.constant 0 : index
    %116 = vector.load %arg1[%115, %c0_44, %c0_45] : memref<1x32x32xf32, #tpu.memory_space<vmem>>, vector<1x32x32xf32>
    %117 = vector.shape_cast %116 : vector<1x32x32xf32> to vector<32x32xf32>
    %c0_46 = arith.constant 0 : index
    %c0_47 = arith.constant 0 : index
    %118 = vector.load %arg5[%c0_46, %c0_47] : memref<1x32xf32, #tpu.memory_space<vmem>>, vector<1x32xf32>
    %119 = vector.broadcast %118 : vector<1x32xf32> to vector<32x32xf32>
    %120 = arith.addf %114, %119 : vector<32x32xf32>
    %121 = arith.addf %120, %117 : vector<32x32xf32>
    %122 = arith.index_cast %c0_i32 : i32 to index
    %c0_48 = arith.constant 0 : index
    %c0_49 = arith.constant 0 : index
    %123 = vector.load %arg6[%122, %c0_48, %c0_49] : memref<1x32x32xf32, #tpu.memory_space<vmem>>, vector<1x32x32xf32>
    %124 = vector.shape_cast %123 : vector<1x32x32xf32> to vector<32x32xf32>
    %125 = vector.shape_cast %121 : vector<32x32xf32> to vector<1x32x32xf32>
    tpu.vector_store %arg6[%122, %c0_48, %c0_49], %125 {strides = array<i32>} : memref<1x32x32xf32, #tpu.memory_space<vmem>>, vector<1x32x32xf32>,
    %c1_i32 = arith.constant 1 : i32
    return
  }
  func.func @transform_0(%arg0: i32) -> (i32, i32, i32) {
    %c0_i32 = arith.constant 0 : i32
    %c0_i32_0 = arith.constant 0 : i32
    %c0_i32_1 = arith.constant 0 : i32
    return %arg0, %c0_i32, %c0_i32_0 : i32, i32, i32
  }
  func.func @transform_1(%arg0: i32) -> (i32, i32) {
    %c0_i32 = arith.constant 0 : i32
    %c0_i32_0 = arith.constant 0 : i32
    %c0_i32_1 = arith.constant 0 : i32
    return %c0_i32, %c0_i32_0 : i32, i32
  }
  func.func @transform_2(%arg0: i32) -> (i32, i32) {
    %c0_i32 = arith.constant 0 : i32
    %c0_i32_0 = arith.constant 0 : i32
    %c0_i32_1 = arith.constant 0 : i32
    return %c0_i32, %c0_i32_0 : i32, i32
  }
  func.func @transform_3(%arg0: i32) -> (i32, i32, i32) {
    %c0_i32 = arith.constant 0 : i32
    %c0_i32_0 = arith.constant 0 : i32
    %c0_i32_1 = arith.constant 0 : i32
    %c0_i32_2 = arith.constant 0 : i32
    return %c0_i32, %c0_i32_0, %c0_i32_1 : i32, i32, i32
  }
  func.func @transform_4(%arg0: i32) -> (i32, i32) {
    %c0_i32 = arith.constant 0 : i32
    %c0_i32_0 = arith.constant 0 : i32
    %c0_i32_1 = arith.constant 0 : i32
    return %c0_i32, %c0_i32_0 : i32, i32
  }
  func.func @transform_5(%arg0: i32) -> (i32, i32, i32) {
    %c0_i32 = arith.constant 0 : i32
    %c0_i32_0 = arith.constant 0 : i32
    %c0_i32_1 = arith.constant 0 : i32
    return %arg0, %c0_i32, %c0_i32_0 : i32, i32, i32
  }
}

module attributes {stable_mosaic.version = 11 : i64} {
  func.func @_ffn_block_kernel(%arg0: i32, %arg1: memref<32x32xf32, #tpu.memory_space<vmem>>, %arg2: memref<32x64xf32, #tpu.memory_space<vmem>>, %arg3: memref<1x64xf32, #tpu.memory_space<vmem>>, %arg4: memref<64x32xf32, #tpu.memory_space<vmem>>, %arg5: memref<1x32xf32, #tpu.memory_space<vmem>>, %arg6: memref<32x32xf32, #tpu.memory_space<vmem>>) attributes {dimension_semantics = [#tpu.dimension_semantics<parallel>], iteration_bounds = array<i64: 2>, scalar_prefetch = 0 : i64, scratch_operands = 0 : i64, tpu.core_type = #tpu.core_type<tc>, window_params = [{transform_indices = @transform_0, window_bounds = array<i64: 32, 32>}, {pipeline_mode = #tpu.pipeline_mode<synchronous>, transform_indices = @transform_1, window_bounds = array<i64: 32, 64>}, {pipeline_mode = #tpu.pipeline_mode<synchronous>, transform_indices = @transform_2, window_bounds = array<i64: 1, 64>}, {pipeline_mode = #tpu.pipeline_mode<synchronous>, transform_indices = @transform_3, window_bounds = array<i64: 64, 32>}, {pipeline_mode = #tpu.pipeline_mode<synchronous>, transform_indices = @transform_4, window_bounds = array<i64: 1, 32>}, {transform_indices = @transform_5, window_bounds = array<i64: 32, 32>}]} {
    %c0 = arith.constant 0 : index
    %c0_0 = arith.constant 0 : index
    %0 = vector.load %arg1[%c0, %c0_0] : memref<32x32xf32, #tpu.memory_space<vmem>>, vector<32x32xf32>
    %cst = arith.constant dense<0.000000e+00> : vector<32xf32>
    %1 = vector.multi_reduction <add>, %0, %cst [1] : vector<32x32xf32> to vector<32xf32>
    %2 = vector.shape_cast %1 : vector<32xf32> to vector<32x1xf32>
    %cst_1 = arith.constant 3.200000e+01 : f32
    %3 = vector.broadcast %cst_1 : f32 to vector<32x1xf32>
    %4 = arith.divf %2, %3 : vector<32x1xf32>
    %5 = vector.broadcast %4 : vector<32x1xf32> to vector<32x32xf32>
    %6 = arith.subf %0, %5 : vector<32x32xf32>
    %7 = arith.mulf %6, %6 : vector<32x32xf32>
    %cst_2 = arith.constant dense<0.000000e+00> : vector<32xf32>
    %8 = vector.multi_reduction <add>, %7, %cst_2 [1] : vector<32x32xf32> to vector<32xf32>
    %9 = vector.shape_cast %8 : vector<32xf32> to vector<32x1xf32>
    %cst_3 = arith.constant 3.200000e+01 : f32
    %10 = vector.broadcast %cst_3 : f32 to vector<32x1xf32>
    %11 = arith.divf %9, %10 : vector<32x1xf32>
    %cst_4 = arith.constant 9.99999974E-6 : f32
    %12 = vector.broadcast %cst_4 : f32 to vector<32x1xf32>
    %13 = arith.addf %11, %12 : vector<32x1xf32>
    %14 = math.rsqrt %13 : vector<32x1xf32>
    %15 = vector.broadcast %14 : vector<32x1xf32> to vector<32x32xf32>
    %16 = arith.mulf %6, %15 : vector<32x32xf32>
    %c0_5 = arith.constant 0 : index
    %c0_6 = arith.constant 0 : index
    %17 = vector.load %arg2[%c0_5, %c0_6] : memref<32x64xf32, #tpu.memory_space<vmem>>, vector<32x64xf32>
    %cst_7 = arith.constant dense<0.000000e+00> : vector<32x64xf32>
    %18 = tpu.matmul %16, %17, %cst_7 {dimension_numbers = #tpu.dot_dimension_numbers<[1], [0], [0], [1], [0, 0, 1, 1], [], []>} : vector<32x32xf32>, vector<32x64xf32>, vector<32x64xf32> -> vector<32x64xf32>
    %c0_8 = arith.constant 0 : index
    %c0_9 = arith.constant 0 : index
    %19 = vector.load %arg3[%c0_8, %c0_9] : memref<1x64xf32, #tpu.memory_space<vmem>>, vector<1x64xf32>
    %20 = vector.broadcast %19 : vector<1x64xf32> to vector<32x64xf32>
    %21 = arith.addf %18, %20 : vector<32x64xf32>
    %cst_10 = arith.constant 5.000000e-01 : f32
    %22 = vector.broadcast %cst_10 : f32 to vector<32x64xf32>
    %23 = arith.mulf %22, %21 : vector<32x64xf32>
    %cst_11 = arith.constant 4.471500e-02 : f32
    %24 = vector.broadcast %cst_11 : f32 to vector<32x64xf32>
    %25 = arith.mulf %24, %21 : vector<32x64xf32>
    %26 = arith.mulf %25, %21 : vector<32x64xf32>
    %27 = arith.mulf %26, %21 : vector<32x64xf32>
    %28 = arith.addf %21, %27 : vector<32x64xf32>
    %cst_12 = arith.constant 0.797884583 : f32
    %29 = vector.broadcast %cst_12 : f32 to vector<32x64xf32>
    %30 = arith.mulf %29, %28 : vector<32x64xf32>
    %31 = math.tanh %30 : vector<32x64xf32>
    %cst_13 = arith.constant 1.000000e+00 : f32
    %32 = vector.broadcast %cst_13 : f32 to vector<32x64xf32>
    %33 = arith.addf %32, %31 : vector<32x64xf32>
    %34 = arith.mulf %23, %33 : vector<32x64xf32>
    %c0_14 = arith.constant 0 : index
    %c0_15 = arith.constant 0 : index
    %35 = vector.load %arg4[%c0_14, %c0_15] : memref<64x32xf32, #tpu.memory_space<vmem>>, vector<64x32xf32>
    %cst_16 = arith.constant dense<0.000000e+00> : vector<32x32xf32>
    %36 = tpu.matmul %34, %35, %cst_16 {dimension_numbers = #tpu.dot_dimension_numbers<[1], [0], [0], [1], [0, 0, 1, 1], [], []>} : vector<32x64xf32>, vector<64x32xf32>, vector<32x32xf32> -> vector<32x32xf32>
    %c0_17 = arith.constant 0 : index
    %c0_18 = arith.constant 0 : index
    %37 = vector.load %arg5[%c0_17, %c0_18] : memref<1x32xf32, #tpu.memory_space<vmem>>, vector<1x32xf32>
    %38 = vector.broadcast %37 : vector<1x32xf32> to vector<32x32xf32>
    %39 = arith.addf %36, %38 : vector<32x32xf32>
    %40 = arith.addf %39, %0 : vector<32x32xf32>
    %c0_19 = arith.constant 0 : index
    %c0_20 = arith.constant 0 : index
    %41 = vector.load %arg6[%c0_19, %c0_20] : memref<32x32xf32, #tpu.memory_space<vmem>>, vector<32x32xf32>
    tpu.vector_store %arg6[%c0_19, %c0_20], %40 {strides = array<i32>} : memref<32x32xf32, #tpu.memory_space<vmem>>, vector<32x32xf32>,
    return
  }
  func.func @transform_0(%arg0: i32) -> (i32, i32) {
    %c0_i32 = arith.constant 0 : i32
    %c0_i32_0 = arith.constant 0 : i32
    return %arg0, %c0_i32 : i32, i32
  }
  func.func @transform_1(%arg0: i32) -> (i32, i32) {
    %c0_i32 = arith.constant 0 : i32
    %c0_i32_0 = arith.constant 0 : i32
    %c0_i32_1 = arith.constant 0 : i32
    return %c0_i32, %c0_i32_0 : i32, i32
  }
  func.func @transform_2(%arg0: i32) -> (i32, i32) {
    %c0_i32 = arith.constant 0 : i32
    %c0_i32_0 = arith.constant 0 : i32
    %c0_i32_1 = arith.constant 0 : i32
    return %c0_i32, %c0_i32_0 : i32, i32
  }
  func.func @transform_3(%arg0: i32) -> (i32, i32) {
    %c0_i32 = arith.constant 0 : i32
    %c0_i32_0 = arith.constant 0 : i32
    %c0_i32_1 = arith.constant 0 : i32
    return %c0_i32, %c0_i32_0 : i32, i32
  }
  func.func @transform_4(%arg0: i32) -> (i32, i32) {
    %c0_i32 = arith.constant 0 : i32
    %c0_i32_0 = arith.constant 0 : i32
    %c0_i32_1 = arith.constant 0 : i32
    return %c0_i32, %c0_i32_0 : i32, i32
  }
  func.func @transform_5(%arg0: i32) -> (i32, i32) {
    %c0_i32 = arith.constant 0 : i32
    %c0_i32_0 = arith.constant 0 : i32
    return %arg0, %c0_i32 : i32, i32
  }
}

module attributes {stable_mosaic.version = 11 : i64} {
  func.func @_ffn_block_kernel(%arg0: i32, %arg1: memref<32x32xf32, #tpu.memory_space<vmem>>, %arg2: memref<32x64xf32, #tpu.memory_space<vmem>>, %arg3: memref<1x64xf32, #tpu.memory_space<vmem>>, %arg4: memref<64x32xf32, #tpu.memory_space<vmem>>, %arg5: memref<1x32xf32, #tpu.memory_space<vmem>>, %arg6: memref<32x32xf32, #tpu.memory_space<vmem>>) attributes {dimension_semantics = [#tpu.dimension_semantics<parallel>], iteration_bounds = array<i64: 2>, scalar_prefetch = 0 : i64, scratch_operands = 0 : i64, tpu.core_type = #tpu.core_type<tc>, window_params = [{transform_indices = @transform_0, window_bounds = array<i64: 32, 32>}, {pipeline_mode = #tpu.pipeline_mode<synchronous>, transform_indices = @transform_1, window_bounds = array<i64: 32, 64>}, {pipeline_mode = #tpu.pipeline_mode<synchronous>, transform_indices = @transform_2, window_bounds = array<i64: 1, 64>}, {pipeline_mode = #tpu.pipeline_mode<synchronous>, transform_indices = @transform_3, window_bounds = array<i64: 64, 32>}, {pipeline_mode = #tpu.pipeline_mode<synchronous>, transform_indices = @transform_4, window_bounds = array<i64: 1, 32>}, {transform_indices = @transform_5, window_bounds = array<i64: 32, 32>}]} {
    %c0 = arith.constant 0 : index
    %c0_0 = arith.constant 0 : index
    %0 = vector.load %arg1[%c0, %c0_0] : memref<32x32xf32, #tpu.memory_space<vmem>>, vector<32x32xf32>
    %cst = arith.constant dense<0.000000e+00> : vector<32xf32>
    %1 = vector.multi_reduction <add>, %0, %cst [1] : vector<32x32xf32> to vector<32xf32>
    %2 = vector.shape_cast %1 : vector<32xf32> to vector<32x1xf32>
    %cst_1 = arith.constant 3.200000e+01 : f32
    %3 = vector.broadcast %cst_1 : f32 to vector<32x1xf32>
    %4 = arith.divf %2, %3 : vector<32x1xf32>
    %5 = vector.broadcast %4 : vector<32x1xf32> to vector<32x32xf32>
    %6 = arith.subf %0, %5 : vector<32x32xf32>
    %7 = arith.mulf %6, %6 : vector<32x32xf32>
    %cst_2 = arith.constant dense<0.000000e+00> : vector<32xf32>
    %8 = vector.multi_reduction <add>, %7, %cst_2 [1] : vector<32x32xf32> to vector<32xf32>
    %9 = vector.shape_cast %8 : vector<32xf32> to vector<32x1xf32>
    %cst_3 = arith.constant 3.200000e+01 : f32
    %10 = vector.broadcast %cst_3 : f32 to vector<32x1xf32>
    %11 = arith.divf %9, %10 : vector<32x1xf32>
    %cst_4 = arith.constant 9.99999974E-6 : f32
    %12 = vector.broadcast %cst_4 : f32 to vector<32x1xf32>
    %13 = arith.addf %11, %12 : vector<32x1xf32>
    %14 = math.rsqrt %13 : vector<32x1xf32>
    %15 = vector.broadcast %14 : vector<32x1xf32> to vector<32x32xf32>
    %16 = arith.mulf %6, %15 : vector<32x32xf32>
    %c0_5 = arith.constant 0 : index
    %c0_6 = arith.constant 0 : index
    %17 = vector.load %arg2[%c0_5, %c0_6] : memref<32x64xf32, #tpu.memory_space<vmem>>, vector<32x64xf32>
    %cst_7 = arith.constant dense<0.000000e+00> : vector<32x64xf32>
    %18 = tpu.matmul %16, %17, %cst_7 {dimension_numbers = #tpu.dot_dimension_numbers<[1], [0], [0], [1], [0, 0, 1, 1], [], []>} : vector<32x32xf32>, vector<32x64xf32>, vector<32x64xf32> -> vector<32x64xf32>
    %c0_8 = arith.constant 0 : index
    %c0_9 = arith.constant 0 : index
    %19 = vector.load %arg3[%c0_8, %c0_9] : memref<1x64xf32, #tpu.memory_space<vmem>>, vector<1x64xf32>
    %20 = vector.broadcast %19 : vector<1x64xf32> to vector<32x64xf32>
    %21 = arith.addf %18, %20 : vector<32x64xf32>
    %cst_10 = arith.constant 5.000000e-01 : f32
    %22 = vector.broadcast %cst_10 : f32 to vector<32x64xf32>
    %23 = arith.mulf %22, %21 : vector<32x64xf32>
    %cst_11 = arith.constant 4.471500e-02 : f32
    %24 = vector.broadcast %cst_11 : f32 to vector<32x64xf32>
    %25 = arith.mulf %24, %21 : vector<32x64xf32>
    %26 = arith.mulf %25, %21 : vector<32x64xf32>
    %27 = arith.mulf %26, %21 : vector<32x64xf32>
    %28 = arith.addf %21, %27 : vector<32x64xf32>
    %cst_12 = arith.constant 0.797884583 : f32
    %29 = vector.broadcast %cst_12 : f32 to vector<32x64xf32>
    %30 = arith.mulf %29, %28 : vector<32x64xf32>
    %31 = math.tanh %30 : vector<32x64xf32>
    %cst_13 = arith.constant 1.000000e+00 : f32
    %32 = vector.broadcast %cst_13 : f32 to vector<32x64xf32>
    %33 = arith.addf %32, %31 : vector<32x64xf32>
    %34 = arith.mulf %23, %33 : vector<32x64xf32>
    %c0_14 = arith.constant 0 : index
    %c0_15 = arith.constant 0 : index
    %35 = vector.load %arg4[%c0_14, %c0_15] : memref<64x32xf32, #tpu.memory_space<vmem>>, vector<64x32xf32>
    %cst_16 = arith.constant dense<0.000000e+00> : vector<32x32xf32>
    %36 = tpu.matmul %34, %35, %cst_16 {dimension_numbers = #tpu.dot_dimension_numbers<[1], [0], [0], [1], [0, 0, 1, 1], [], []>} : vector<32x64xf32>, vector<64x32xf32>, vector<32x32xf32> -> vector<32x32xf32>
    %c0_17 = arith.constant 0 : index
    %c0_18 = arith.constant 0 : index
    %37 = vector.load %arg5[%c0_17, %c0_18] : memref<1x32xf32, #tpu.memory_space<vmem>>, vector<1x32xf32>
    %38 = vector.broadcast %37 : vector<1x32xf32> to vector<32x32xf32>
    %39 = arith.addf %36, %38 : vector<32x32xf32>
    %40 = arith.addf %39, %0 : vector<32x32xf32>
    %c0_19 = arith.constant 0 : index
    %c0_20 = arith.constant 0 : index
    %41 = vector.load %arg6[%c0_19, %c0_20] : memref<32x32xf32, #tpu.memory_space<vmem>>, vector<32x32xf32>
    tpu.vector_store %arg6[%c0_19, %c0_20], %40 {strides = array<i32>} : memref<32x32xf32, #tpu.memory_space<vmem>>, vector<32x32xf32>,
    return
  }
  func.func @transform_0(%arg0: i32) -> (i32, i32) {
    %c0_i32 = arith.constant 0 : i32
    %c0_i32_0 = arith.constant 0 : i32
    return %arg0, %c0_i32 : i32, i32
  }
  func.func @transform_1(%arg0: i32) -> (i32, i32) {
    %c0_i32 = arith.constant 0 : i32
    %c0_i32_0 = arith.constant 0 : i32
    %c0_i32_1 = arith.constant 0 : i32
    return %c0_i32, %c0_i32_0 : i32, i32
  }
  func.func @transform_2(%arg0: i32) -> (i32, i32) {
    %c0_i32 = arith.constant 0 : i32
    %c0_i32_0 = arith.constant 0 : i32
    %c0_i32_1 = arith.constant 0 : i32
    return %c0_i32, %c0_i32_0 : i32, i32
  }
  func.func @transform_3(%arg0: i32) -> (i32, i32) {
    %c0_i32 = arith.constant 0 : i32
    %c0_i32_0 = arith.constant 0 : i32
    %c0_i32_1 = arith.constant 0 : i32
    return %c0_i32, %c0_i32_0 : i32, i32
  }
  func.func @transform_4(%arg0: i32) -> (i32, i32) {
    %c0_i32 = arith.constant 0 : i32
    %c0_i32_0 = arith.constant 0 : i32
    %c0_i32_1 = arith.constant 0 : i32
    return %c0_i32, %c0_i32_0 : i32, i32
  }
  func.func @transform_5(%arg0: i32) -> (i32, i32) {
    %c0_i32 = arith.constant 0 : i32
    %c0_i32_0 = arith.constant 0 : i32
    return %arg0, %c0_i32 : i32, i32
  }
}

</mosaic_0001>

<llo_original>
// kernel: projet_transformer_forward.7
$region0: #{projet_transformer_forward.7}
  #allocation0 [shape = 'u32[]', space=smem, size = 0x4, offset = 0x4, fixed_abs, tag = 'smem constant byte address 0x4 - core index']
  #allocation1 [shape = 'u32[144,128]{1,0:T(1,128)}', space=vmem, size = 0x12000, scoped, tag = 'internal scratch']
  %s0 = inlined_call_operand.vmem [shape: f32[64,32], index: 0, kind: input, shape index: {}]
  %s1 = inlined_call_operand.vmem [shape: f32[32,64], index: 1, kind: input, shape index: {}]
  %s2 = inlined_call_operand.vmem [shape: f32[1,64], index: 2, kind: input, shape index: {}]
  %s3 = inlined_call_operand.vmem [shape: f32[64,32], index: 3, kind: input, shape index: {}]
  %s4 = inlined_call_operand.vmem [shape: f32[1,32], index: 4, kind: input, shape index: {}]
  %s5 = inlined_call_operand.hbm [shape: f32[64,32], index: 5, kind: output, shape index: {}]
  %s6 = sld [smem:[#allocation0]]
  $region53: #{projet_transformer_forward.7} parent=0
    _
  %s8 = ssub.s32 1, %s6
  %s9 = scalar_select 0, %s8, %s6
  $region1: #{projet_transformer_forward.7} parent=0
    #allocation2 [shape = 'u8[32768]{0}', space=vmem, size = 0x8000, scoped, tag = 'output window, operand 0']
    #allocation3 [shape = 's32[2]{0}', space=sflag, size = 0x8, scoped, tag = 'scoped memory for projet_transformer_forward.7']
    %10 = vsyncpa [#allocation3], 0
    %s11 = scalar_lea.sflag [#allocation3], 1
    %12 = vsyncpa %s11, 0
    loop: start=0, step=1, limit=4
    $region2: #{projet_transformer_forward.7} parent=1 // loop_pre_header
      _
    $region3: #{projet_transformer_forward.7} parent=1 // loop_header
      %s14 = sphi 0, %s18
      %p15 = scmp.ge.s32.totalorder %s14, 4
      %s24 = sphi 0, %s26
      %s27 = sphi 0, %s24
      %s28 = sphi 0, %s27
      %s44 = sphi 0, %s28
      %s48 = sphi 0, %s48
      %s50 = sphi 0, %s48
      %s51 = sphi 0, %s50
      %s65 = sphi 0, %s51
      %s69 = sphi 0, %s69
      %s71 = sphi 0, %s69
      %s72 = sphi 0, %s71
      %s86 = sphi 0, %s72
      %s90 = sphi 0, %s90
      %s92 = sphi 0, %s90
      %s93 = sphi 0, %s92
      %s107 = sphi 0, %s93
      %s111 = sphi 0, %s111
      %s113 = sphi 0, %s111
      %s114 = sphi 0, %s113
      %s128 = sphi 0, %s114
      %s134 = sphi 0, %s136
      %s137 = sphi 0, %s134
      %s138 = sphi 0, %s137
      %s154 = sphi 0, %s138
    $region4: #{projet_transformer_forward.7} parent=1 // loop_header_branch
      %17 = sbr.rel (%p15) target = $region8
    $region5: #{projet_transformer_forward.7} parent=1 // loop_body
      %s19 = ssub.s32 %s14, 1
      %s20 = ssub.s32 %s14, 2
      %s21 = sadd.s32 %s14, 1
      %s22 = ssub.s32 %s14, %s21
      %p23 = scmp.eq.s32.totalorder %s22, 0
      %s25 = sadd.s32 %s24, 1
      %s26 = scalar_select %p23, %s24, %s25
      %p29 = pneg %p23
      %p30 = scmp.eq.s32.totalorder %s14, 1
      %p31 = por %p29, %p30
      %p32 = scmp.ne.s32.totalorder %s24, %s27
      %p33 = scmp.eq.s32.totalorder %s14, 0
      %p34 = por %p32, %p33
      %p35 = scmp.ne.s32.totalorder %s24, %s27
      %p36 = scmp.eq.s32.totalorder %s19, 1
      %p37 = por %p35, %p36
      %p38 = scmp.ne.s32.totalorder %s27, %s28
      %p39 = scmp.eq.s32.totalorder %s19, 0
      %p40 = por %p38, %p39
      %p41 = scmp.ne.s32.totalorder %s27, %s28
      %p42 = scmp.eq.s32.totalorder %s20, 1
      %p43 = por %p41, %p42
      %p45 = scmp.ne.s32.totalorder %s28, %s44
      %p46 = scmp.eq.s32.totalorder %s20, 0
      %p47 = por %p45, %p46
      %s49 = sadd.s32 %s48, 1
      %p52 = scmp.eq.s32.totalorder %s14, 1
      %p53 = scmp.ne.s32.totalorder %s48, %s50
      %p54 = scmp.eq.s32.totalorder %s14, 0
      %p55 = por %p53, %p54
      %p56 = scmp.ne.s32.totalorder %s48, %s50
      %p57 = scmp.eq.s32.totalorder %s19, 1
      %p58 = por %p56, %p57
      %p59 = scmp.ne.s32.totalorder %s50, %s51
      %p60 = scmp.eq.s32.totalorder %s19, 0
      %p61 = por %p59, %p60
      %p62 = scmp.ne.s32.totalorder %s50, %s51
      %p63 = scmp.eq.s32.totalorder %s20, 1
      %p64 = por %p62, %p63
      %p66 = scmp.ne.s32.totalorder %s51, %s65
      %p67 = scmp.eq.s32.totalorder %s20, 0
      %p68 = por %p66, %p67
      %s70 = sadd.s32 %s69, 1
      %p73 = scmp.eq.s32.totalorder %s14, 1
      %p74 = scmp.ne.s32.totalorder %s69, %s71
      %p75 = scmp.eq.s32.totalorder %s14, 0
      %p76 = por %p74, %p75
      %p77 = scmp.ne.s32.totalorder %s69, %s71
      %p78 = scmp.eq.s32.totalorder %s19, 1
      %p79 = por %p77, %p78
      %p80 = scmp.ne.s32.totalorder %s71, %s72
      %p81 = scmp.eq.s32.totalorder %s19, 0
      %p82 = por %p80, %p81
      %p83 = scmp.ne.s32.totalorder %s71, %s72
      %p84 = scmp.eq.s32.totalorder %s20, 1
      %p85 = por %p83, %p84
      %p87 = scmp.ne.s32.totalorder %s72, %s86
      %p88 = scmp.eq.s32.totalorder %s20, 0
      %p89 = por %p87, %p88
      %s91 = sadd.s32 %s90, 1
      %p94 = scmp.eq.s32.totalorder %s14, 1
      %p95 = scmp.ne.s32.totalorder %s90, %s92
      %p96 = scmp.eq.s32.totalorder %s14, 0
      %p97 = por %p95, %p96
      %p98 = scmp.ne.s32.totalorder %s90, %s92
      %p99 = scmp.eq.s32.totalorder %s19, 1
      %p100 = por %p98, %p99
      %p101 = scmp.ne.s32.totalorder %s92, %s93
      %p102 = scmp.eq.s32.totalorder %s19, 0
      %p103 = por %p101, %p102
      %p104 = scmp.ne.s32.totalorder %s92, %s93
      %p105 = scmp.eq.s32.totalorder %s20, 1
      %p106 = por %p104, %p105
      %p108 = scmp.ne.s32.totalorder %s93, %s107
      %p109 = scmp.eq.s32.totalorder %s20, 0
      %p110 = por %p108, %p109
      %s112 = sadd.s32 %s111, 1
      %p115 = scmp.eq.s32.totalorder %s14, 1
      %p116 = scmp.ne.s32.totalorder %s111, %s113
      %p117 = scmp.eq.s32.totalorder %s14, 0
      %p118 = por %p116, %p117
      %p119 = scmp.ne.s32.totalorder %s111, %s113
      %p120 = scmp.eq.s32.totalorder %s19, 1
      %p121 = por %p119, %p120
      %p122 = scmp.ne.s32.totalorder %s113, %s114
      %p123 = scmp.eq.s32.totalorder %s19, 0
      %p124 = por %p122, %p123
      %p125 = scmp.ne.s32.totalorder %s113, %s114
      %p126 = scmp.eq.s32.totalorder %s20, 1
      %p127 = por %p125, %p126
      %p129 = scmp.ne.s32.totalorder %s114, %s128
      %p130 = scmp.eq.s32.totalorder %s20, 0
      %p131 = por %p129, %p130
      %s132 = ssub.s32 %s14, %s21
      %p133 = scmp.eq.s32.totalorder %s132, 0
      %s135 = sadd.s32 %s134, 1
      %s136 = scalar_select %p133, %s134, %s135
      %p139 = pneg %p133
      %p140 = scmp.eq.s32.totalorder %s14, 1
      %p141 = por %p139, %p140
      %p142 = scmp.ne.s32.totalorder %s134, %s137
      %p143 = scmp.eq.s32.totalorder %s14, 0
      %p144 = por %p142, %p143
      %p145 = scmp.ne.s32.totalorder %s134, %s137
      %p146 = scmp.eq.s32.totalorder %s19, 1
      %p147 = por %p145, %p146
      %p148 = scmp.ne.s32.totalorder %s137, %s138
      %p149 = scmp.eq.s32.totalorder %s19, 0
      %p150 = por %p148, %p149
      %p151 = scmp.ne.s32.totalorder %s137, %s138
      %p152 = scmp.eq.s32.totalorder %s20, 1
      %p153 = por %p151, %p152
      %p155 = scmp.ne.s32.totalorder %s138, %s154
      %p156 = scmp.eq.s32.totalorder %s20, 0
      %p157 = por %p155, %p156
      %p158 = scmp.le.s32.totalorder 1, %s14
      %p159 = scmp.lt.s32.totalorder %s14, 3
      %p160 = pnand %p158, %p159
      %p161 = pneg %p160
      // Predicated region
      $region9: #{projet_transformer_forward.7} parent=5 // pred_check
        _
      $region10: #{projet_transformer_forward.7} parent=5 // pred_check_branch
        %163 = sbr.rel (%p160) target = $region12
      $region11: #{projet_transformer_forward.7} parent=5 // pred_region
        %s164 = ssub.s32 %s14, 1
        // Predicated region
        $region13: #{projet_transformer_forward.7} parent=11 // pred_check
          %p165 = pneg %p61
        $region14: #{projet_transformer_forward.7} parent=11 // pred_check_branch
          %167 = sbr.rel (%p165) target = $region16
        $region15: #{projet_transformer_forward.7} parent=11 // pred_region
          _
        $region16: #{projet_transformer_forward.7} parent=11 // pred_fallthru
          _
        // Predicated region
        $region17: #{projet_transformer_forward.7} parent=11 // pred_check
          %p168 = pneg %p82
        $region18: #{projet_transformer_forward.7} parent=11 // pred_check_branch
          %170 = sbr.rel (%p168) target = $region20
        $region19: #{projet_transformer_forward.7} parent=11 // pred_region
          _
        $region20: #{projet_transformer_forward.7} parent=11 // pred_fallthru
          _
        // Predicated region
        $region21: #{projet_transformer_forward.7} parent=11 // pred_check
          %p171 = pneg %p103
        $region22: #{projet_transformer_forward.7} parent=11 // pred_check_branch
          %173 = sbr.rel (%p171) target = $region24
        $region23: #{projet_transformer_forward.7} parent=11 // pred_region
          _
        $region24: #{projet_transformer_forward.7} parent=11 // pred_fallthru
          _
        // Predicated region
        $region25: #{projet_transformer_forward.7} parent=11 // pred_check
          %p174 = pneg %p124
        $region26: #{projet_transformer_forward.7} parent=11 // pred_check_branch
          %176 = sbr.rel (%p174) target = $region28
        $region27: #{projet_transformer_forward.7} parent=11 // pred_region
          _
        $region28: #{projet_transformer_forward.7} parent=11 // pred_fallthru
          _
      $region12: #{projet_transformer_forward.7} parent=5 // pred_fallthru
        _
      %p177 = scmp.lt.s32.totalorder %s14, 2
      // Predicated region
      $region29: #{projet_transformer_forward.7} parent=5 // pred_check
        %p178 = pneg %p177
      $region30: #{projet_transformer_forward.7} parent=5 // pred_check_branch
        %180 = sbr.rel (%p178) target = $region32
      $region31: #{projet_transformer_forward.7} parent=5 // pred_region
        // Predicated region
        $region33: #{projet_transformer_forward.7} parent=31 // pred_check
          %p181 = pneg %p34
        $region34: #{projet_transformer_forward.7} parent=31 // pred_check_branch
          %183 = sbr.rel (%p181) target = $region36
        $region35: #{projet_transformer_forward.7} parent=31 // pred_region
          %s184 = smul.u32 4, %s14
          %p185 = scmp.lt.s32.totalorder %s184, 7
          %s186 = scalar_select %p185, %s184, 7
          %s187 = smul.addr %s186, 8
          %s188 = scalar_lea.vmem %s0, %s187
          %s189 = smul.u32 4, %s14
        $region36: #{projet_transformer_forward.7} parent=31 // pred_fallthru
          _
      $region32: #{projet_transformer_forward.7} parent=5 // pred_fallthru
        _
      %p190 = scmp.le.s32.totalorder 1, %s14
      %p191 = scmp.lt.s32.totalorder %s14, 3
      %p192 = pnand %p190, %p191
      %p193 = pneg %p192
      // Predicated region
      $region37: #{projet_transformer_forward.7} parent=5 // pred_check
        _
      $region38: #{projet_transformer_forward.7} parent=5 // pred_check_branch
        %195 = sbr.rel (%p192) target = $region40
      $region39: #{projet_transformer_forward.7} parent=5 // pred_region
        %s196 = ssub.s32 %s14, 1
        %s197 = smul.u32 4, %s19
        %p198 = scmp.lt.s32.totalorder %s197, 7
        %s199 = scalar_select %p198, %s197, 7
        %s200 = smul.addr %s199, 8
        %s201 = scalar_lea.vmem %s0, %s200
        %p202 = pneg %p40
        %p203 = pneg %p37
        %p204 = pneg %p61
        %p205 = pneg %p58
        %p206 = pneg %p82
        %p207 = pneg %p79
        %p208 = pneg %p103
        %p209 = pneg %p100
        %p210 = pneg %p124
        %p211 = pneg %p121
        %p212 = pneg %p150
        %p213 = pneg %p147
        %s214 = sand.u32 %s137, 1
        %s215 = scalar_lea.sflag [#allocation3], %s214
        %s216 = sand.u32 %s137, 1
        %s217 = smul.addr %s216, 32
        %s218 = scalar_lea.vmem [#allocation2], %s217
        %s219 = smul.u32 4, %s19
        %p220 = scmp.lt.s32.totalorder %s219, 7
        %s221 = scalar_select %p220, %s219, 7
        %s222 = smul.addr %s221, 8
        %s223 = scalar_lea.vmem %s0, %s222
        %s224 = smul.u32 4, %s19
        %s225 = smul.u32 4, %s19
        %v226 = vld [vmem:[%s223] sm:$0xff]
        %v227 = vld [vmem:[%s223 + $0x8] sm:$0xff]
        %v228 = vld [vmem:[%s223 + $0x10] sm:$0xff]
        %v229 = vld [vmem:[%s223 + $0x18] sm:$0xff]
        %vm230 = vcmask 261120
        %v231 = vsel %vm230, %v226, 0.0
        %232 = vadd.xlane.f32.xlu0 %v231
        %v233 = vpop.xlane.xlu0 %232
        %v234 = vsel %vm230, %v227, 0.0
        %235 = vadd.xlane.f32.xlu0 %v234
        %v236 = vpop.xlane.xlu0 %235
        %v237 = vsel %vm230, %v228, 0.0
        %238 = vadd.xlane.f32.xlu0 %v237
        %v239 = vpop.xlane.xlu0 %238
        %v240 = vsel %vm230, %v229, 0.0
        %241 = vadd.xlane.f32.xlu0 %v240
        %v242 = vpop.xlane.xlu0 %241
        %v243 = vrcp.pop 32.0
        %v244 = vmul.f32 %v233, %v243
        %v245 = vmul.f32 %v236, %v243
        %v246 = vmul.f32 %v239, %v243
        %v247 = vmul.f32 %v242, %v243
        %v248 = vsub.f32 %v226, %v244
        %v249 = vsub.f32 %v227, %v245
        %v250 = vsub.f32 %v228, %v246
        %v251 = vsub.f32 %v229, %v247
        %v252 = vmul.f32 %v248, %v248
        %v253 = vmul.f32 %v249, %v249
        %v254 = vmul.f32 %v250, %v250
        %v255 = vmul.f32 %v251, %v251
        %v256 = vsel %vm230, %v252, 0.0
        %257 = vadd.xlane.f32.xlu0 %v256
        %v258 = vpop.xlane.xlu0 %257
        %v259 = vsel %vm230, %v253, 0.0
        %260 = vadd.xlane.f32.xlu0 %v259
        %v261 = vpop.xlane.xlu0 %260
        %v262 = vsel %vm230, %v254, 0.0
        %263 = vadd.xlane.f32.xlu0 %v262
        %v264 = vpop.xlane.xlu0 %263
        %v265 = vsel %vm230, %v255, 0.0
        %266 = vadd.xlane.f32.xlu0 %v265
        %v267 = vpop.xlane.xlu0 %266
        %v268 = vmul.f32 %v258, %v243
        %v269 = vmul.f32 %v261, %v243
        %v270 = vmul.f32 %v264, %v243
        %v271 = vmul.f32 %v267, %v243
        %v272 = vadd.f32 %v268, 1e-05
        %v273 = vadd.f32 %v269, 1e-05
        %v274 = vadd.f32 %v270, 1e-05
        %v275 = vadd.f32 %v271, 1e-05
        %v276 = vrsqrt.pop %v272
        %v277 = vrsqrt.pop %v273
        %v278 = vrsqrt.pop %v274
        %v279 = vrsqrt.pop %v275
        %v280 = vmul.f32 %v248, %v276
        %v281 = vmul.f32 %v249, %v277
        %v282 = vmul.f32 %v250, %v278
        %v283 = vmul.f32 %v251, %v279
        %v284 = vld [vmem:[%s1] sm:$0xff]
        %v285 = vld [vmem:[%s1 + $0x8] sm:$0xff]
        %v286 = vld [vmem:[%s1 + $0x10] sm:$0xff]
        %v287 = vld [vmem:[%s1 + $0x18] sm:$0xff]
        %v288 = vld [vmem:[%s2] sm:$0x1]
        %v290 = vlaneseq
        %v291 = vshrl.u32 %v290, 7
        %v292 = vsub.s32 0, %v291
        %v293 = vrot.slane %v288, %v292
        %v296 = vsel %vm230, %v280, 0
        %v299 = vsel %vm230, %v281, 0
        %v302 = vsel %vm230, %v282, 0
        %v305 = vsel %vm230, %v283, 0
        %307 = vmatprep.subr.mxu0 0.0
        %308 = vmatpush1.msra.mxu0 %v284
        %309 = vmatprep.subr.mxu0 0.0
        %310 = vmatpush1.msra.mxu0 %v285
        %311 = vmatprep.subr.mxu0 0.0
        %312 = vmatpush1.msra.mxu0 %v286
        %313 = vmatprep.subr.mxu0 0.0
        %314 = vmatpush1.msra.mxu0 %v287
        %315 = vmatprep.subr.mxu0 0.0
        %316 = vmatpush1.msra.mxu0 0.0
        %317 = vmatprep.subr.mxu0 0.0
        %318 = vmatpush1.msra.mxu0 0.0
        %319 = vmatprep.subr.mxu0 0.0
        %320 = vmatpush1.msra.mxu0 0.0
        %321 = vmatprep.subr.mxu0 0.0
        %322 = vmatpush1.msra.mxu0 0.0
        %323 = vmatprep.subr.mxu0 0.0
        %324 = vmatpush1.msra.mxu0 0.0
        %325 = vmatprep.subr.mxu0 0.0
        %326 = vmatpush1.msra.mxu0 0.0
        %327 = vmatprep.subr.mxu0 0.0
        %328 = vmatpush1.msra.mxu0 0.0
        %329 = vmatprep.subr.mxu0 0.0
        %330 = vmatpush1.msra.mxu0 0.0
        %331 = vmatprep.subr.mxu0 0.0
        %332 = vmatpush1.msra.mxu0 0.0
        %333 = vmatprep.subr.mxu0 0.0
        %334 = vmatpush1.msra.mxu0 0.0
        %335 = vmatprep.subr.mxu0 0.0
        %336 = vmatpush1.msra.mxu0 0.0
        %337 = vmatprep.subr.mxu0 0.0
        %338 = vmatpush1.msra.mxu0 0.0
        %339 = vmatprep.subr.mxu0 0.0
        %340 = vmatpush1.msra.mxu0 0.0
        %341 = vmatprep.subr.mxu0 0.0
        %342 = vmatpush1.msra.mxu0 0.0
        %343 = vmatprep.subr.mxu0 0.0
        %344 = vmatpush1.msra.mxu0 0.0
        %345 = vmatprep.subr.mxu0 0.0
        %346 = vmatpush1.msra.mxu0 0.0
        %347 = vmatprep.subr.mxu0 0.0
        %348 = vmatpush1.msra.mxu0 0.0
        %349 = vmatprep.subr.mxu0 0.0
        %350 = vmatpush1.msra.mxu0 0.0
        %351 = vmatprep.subr.mxu0 0.0
        %352 = vmatpush1.msra.mxu0 0.0
        %353 = vmatprep.subr.mxu0 0.0
        %354 = vmatpush1.msra.mxu0 0.0
        %355 = vmatprep.subr.mxu0 0.0
        %356 = vmatpush1.msra.mxu0 0.0
        %357 = vmatprep.subr.mxu0 0.0
        %358 = vmatpush1.msra.mxu0 0.0
        %359 = vmatprep.subr.mxu0 0.0
        %360 = vmatpush1.msra.mxu0 0.0
        %361 = vmatprep.subr.mxu0 0.0
        %362 = vmatpush1.msra.mxu0 0.0
        %363 = vmatprep.subr.mxu0 0.0
        %364 = vmatpush1.msra.mxu0 0.0
        %365 = vmatprep.subr.mxu0 0.0
        %366 = vmatpush1.msra.mxu0 0.0
        %367 = vmatprep.subr.mxu0 0.0
        %368 = vmatpush1.msra.mxu0 0.0
        %369 = vmatprep.subr.mxu0 0.0
        %370 = vmatpush1.msra.mxu0 0.0
        %371 = vmatprep.mubr.f32.mxu0 0.0
        %372 = vmatmul.mubr.f32.gmra.mrb[0].mxu0 %v296
        %v373 = vpop.f32.mrb[0].mxu0
        %v374 = vadd.f32 %v293, %v373
        %v375 = vpop.f32.mrb[0].mxu0
        %376 = vmatprep.mubr.f32.mxu0 0.0
        %377 = vmatmul.mubr.f32.gmra.mrb[0].mxu0 %v299
        %v378 = vpop.f32.mrb[0].mxu0
        %v379 = vadd.f32 %v293, %v378
        %v380 = vpop.f32.mrb[0].mxu0
        %381 = vmatprep.mubr.f32.mxu0 0.0
        %382 = vmatmul.mubr.f32.gmra.mrb[0].mxu0 %v302
        %v383 = vpop.f32.mrb[0].mxu0
        %v384 = vadd.f32 %v293, %v383
        %v385 = vpop.f32.mrb[0].mxu0
        %386 = vmatprep.mubr.f32.mxu0 0.0
        %387 = vmatmul.mubr.f32.gmra.mrb[0].mxu0 %v305
        %v388 = vpop.f32.mrb[0].mxu0
        %v389 = vadd.f32 %v293, %v388
        %v390 = vpop.f32.mrb[0].mxu0
        %391 = vdwg.mxu0
        %v392 = vmul.f32 %v374, 0.5
        %v393 = vmul.f32 %v379, 0.5
        %v394 = vmul.f32 %v384, 0.5
        %v395 = vmul.f32 %v389, 0.5
        %v396 = vmul.f32 %v374, 0.044715
        %v397 = vmul.f32 %v379, 0.044715
        %v398 = vmul.f32 %v384, 0.044715
        %v399 = vmul.f32 %v389, 0.044715
        %v400 = vmul.f32 %v396, %v374
        %v401 = vmul.f32 %v397, %v379
        %v402 = vmul.f32 %v398, %v384
        %v403 = vmul.f32 %v399, %v389
        %v404 = vmul.f32 %v400, %v374
        %v405 = vmul.f32 %v401, %v379
        %v406 = vmul.f32 %v402, %v384
        %v407 = vmul.f32 %v403, %v389
        %v408 = vadd.f32 %v374, %v404
        %v409 = vadd.f32 %v379, %v405
        %v410 = vadd.f32 %v384, %v406
        %v411 = vadd.f32 %v389, %v407
        %v412 = vmul.f32 %v408, 0.7978846
        %v413 = vmul.f32 %v409, 0.7978846
        %v414 = vmul.f32 %v410, 0.7978846
        %v415 = vmul.f32 %v411, 0.7978846
        %v416 = vtanh.pop %v412
        %v417 = vtanh.pop %v413
        %v418 = vtanh.pop %v414
        %v419 = vtanh.pop %v415
        %v420 = vadd.f32 %v416, 1.0
        %v421 = vadd.f32 %v417, 1.0
        %v422 = vadd.f32 %v418, 1.0
        %v423 = vadd.f32 %v419, 1.0
        %v424 = vmul.f32 %v392, %v420
        %v425 = vmul.f32 %v393, %v421
        %v426 = vmul.f32 %v394, %v422
        %v427 = vmul.f32 %v395, %v423
        %v428 = vld [vmem:[%s3] sm:$0xff]
        %v429 = vld [vmem:[%s3 + $0x8] sm:$0xff]
        %v430 = vld [vmem:[%s3 + $0x10] sm:$0xff]
        %v431 = vld [vmem:[%s3 + $0x18] sm:$0xff]
        %v432 = vld [vmem:[%s3 + $0x20] sm:$0xff]
        %v433 = vld [vmem:[%s3 + $0x28] sm:$0xff]
        %v434 = vld [vmem:[%s3 + $0x30] sm:$0xff]
        %v435 = vld [vmem:[%s3 + $0x38] sm:$0xff]
        %v436 = vld [vmem:[%s4] sm:$0x1]
        %v438 = vlaneseq
        %v439 = vshrl.u32 %v438, 7
        %v440 = vsub.s32 0, %v439
        %v441 = vrot.slane %v436, %v440
        %vm443 = vcmask 523264
        %v445 = vsel %vm443, %v424, 0
        %v448 = vsel %vm443, %v425, 0
        %v451 = vsel %vm443, %v426, 0
        %v454 = vsel %vm443, %v427, 0
        %456 = vmatprep.subr.mxu0 0.0
        %457 = vmatpush1.msra.mxu0 %v428
        %458 = vmatprep.subr.mxu0 0.0
        %459 = vmatpush1.msra.mxu0 %v429
        %460 = vmatprep.subr.mxu0 0.0
        %461 = vmatpush1.msra.mxu0 %v430
        %462 = vmatprep.subr.mxu0 0.0
        %463 = vmatpush1.msra.mxu0 %v431
        %464 = vmatprep.subr.mxu0 0.0
        %465 = vmatpush1.msra.mxu0 %v432
        %466 = vmatprep.subr.mxu0 0.0
        %467 = vmatpush1.msra.mxu0 %v433
        %468 = vmatprep.subr.mxu0 0.0
        %469 = vmatpush1.msra.mxu0 %v434
        %470 = vmatprep.subr.mxu0 0.0
        %471 = vmatpush1.msra.mxu0 %v435
        %472 = vmatprep.subr.mxu0 0.0
        %473 = vmatpush1.msra.mxu0 0.0
        %474 = vmatprep.subr.mxu0 0.0
        %475 = vmatpush1.msra.mxu0 0.0
        %476 = vmatprep.subr.mxu0 0.0
        %477 = vmatpush1.msra.mxu0 0.0
        %478 = vmatprep.subr.mxu0 0.0
        %479 = vmatpush1.msra.mxu0 0.0
        %480 = vmatprep.subr.mxu0 0.0
        %481 = vmatpush1.msra.mxu0 0.0
        %482 = vmatprep.subr.mxu0 0.0
        %483 = vmatpush1.msra.mxu0 0.0
        %484 = vmatprep.subr.mxu0 0.0
        %485 = vmatpush1.msra.mxu0 0.0
        %486 = vmatprep.subr.mxu0 0.0
        %487 = vmatpush1.msra.mxu0 0.0
        %488 = vmatprep.subr.mxu0 0.0
        %489 = vmatpush1.msra.mxu0 0.0
        %490 = vmatprep.subr.mxu0 0.0
        %491 = vmatpush1.msra.mxu0 0.0
        %492 = vmatprep.subr.mxu0 0.0
        %493 = vmatpush1.msra.mxu0 0.0
        %494 = vmatprep.subr.mxu0 0.0
        %495 = vmatpush1.msra.mxu0 0.0
        %496 = vmatprep.subr.mxu0 0.0
        %497 = vmatpush1.msra.mxu0 0.0
        %498 = vmatprep.subr.mxu0 0.0
        %499 = vmatpush1.msra.mxu0 0.0
        %500 = vmatprep.subr.mxu0 0.0
        %501 = vmatpush1.msra.mxu0 0.0
        %502 = vmatprep.subr.mxu0 0.0
        %503 = vmatpush1.msra.mxu0 0.0
        %504 = vmatprep.subr.mxu0 0.0
        %505 = vmatpush1.msra.mxu0 0.0
        %506 = vmatprep.subr.mxu0 0.0
        %507 = vmatpush1.msra.mxu0 0.0
        %508 = vmatprep.subr.mxu0 0.0
        %509 = vmatpush1.msra.mxu0 0.0
        %510 = vmatprep.subr.mxu0 0.0
        %511 = vmatpush1.msra.mxu0 0.0
        %512 = vmatprep.subr.mxu0 0.0
        %513 = vmatpush1.msra.mxu0 0.0
        %514 = vmatprep.subr.mxu0 0.0
        %515 = vmatpush1.msra.mxu0 0.0
        %516 = vmatprep.subr.mxu0 0.0
        %517 = vmatpush1.msra.mxu0 0.0
        %518 = vmatprep.subr.mxu0 0.0
        %519 = vmatpush1.msra.mxu0 0.0
        %520 = vmatprep.mubr.f32.mxu0 0.0
        %521 = vmatmul.mubr.f32.gmra.mrb[0].mxu0 %v445
        %v522 = vpop.f32.mrb[0].mxu0
        %v523 = vadd.f32 %v441, %v522
        %v524 = vpop.f32.mrb[0].mxu0
        %525 = vmatprep.mubr.f32.mxu0 0.0
        %526 = vmatmul.mubr.f32.gmra.mrb[0].mxu0 %v448
        %v527 = vpop.f32.mrb[0].mxu0
        %v528 = vadd.f32 %v441, %v527
        %v529 = vpop.f32.mrb[0].mxu0
        %530 = vmatprep.mubr.f32.mxu0 0.0
        %531 = vmatmul.mubr.f32.gmra.mrb[0].mxu0 %v451
        %v532 = vpop.f32.mrb[0].mxu0
        %v533 = vadd.f32 %v441, %v532
        %v534 = vpop.f32.mrb[0].mxu0
        %535 = vmatprep.mubr.f32.mxu0 0.0
        %536 = vmatmul.mubr.f32.gmra.mrb[0].mxu0 %v454
        %v537 = vpop.f32.mrb[0].mxu0
        %v538 = vadd.f32 %v441, %v537
        %v539 = vpop.f32.mrb[0].mxu0
        %540 = vdwg.mxu0
        %v541 = vadd.f32 %v523, %v226
        %v542 = vadd.f32 %v528, %v227
        %v543 = vadd.f32 %v533, %v228
        %v544 = vadd.f32 %v538, %v229
        %545 = vst.msk [vmem:[%s218] sm:$0xff] %vm230, %v541
        %546 = vst.msk [vmem:[%s218 + $0x8] sm:$0xff] %vm230, %v542
        %547 = vst.msk [vmem:[%s218 + $0x10] sm:$0xff] %vm230, %v543
        %548 = vst.msk [vmem:[%s218 + $0x18] sm:$0xff] %vm230, %v544
        %s549 = sand.u32 %s137, 1
        %s550 = scalar_lea.sflag [#allocation3], %s549
        %s551 = sand.u32 %s137, 1
        %s552 = smul.addr %s551, 32
        %s553 = scalar_lea.vmem [#allocation2], %s552
        // Predicated region
        $region41: #{projet_transformer_forward.7} parent=39 // pred_check
          %p554 = pneg %p147
        $region42: #{projet_transformer_forward.7} parent=39 // pred_check_branch
          %556 = sbr.rel (%p554) target = $region44
        $region43: #{projet_transformer_forward.7} parent=39 // pred_region
          %s557 = smul.u32 4, %s19
          %s559 = ssub.s32 512, 512
          %560 = vsyncadd %s550, %s559
          %s561 = smul.addr %s557, 128
          %s562 = scalar_lea.hbm %s5, %s561
          %s563 = sshll.u32 %s553, 4
          %s564 = int_to_ptr.vmem [resolvable:$true] %s563
          %569 = dma.vmem_to_hbm [thread:$0]  %s564, 512, %s562, %s550, 128, 128, 8
        $region44: #{projet_transformer_forward.7} parent=39 // pred_fallthru
          _
      $region40: #{projet_transformer_forward.7} parent=5 // pred_fallthru
        _
      %p570 = scmp.le.s32.totalorder 2, %s14
      // Predicated region
      $region45: #{projet_transformer_forward.7} parent=5 // pred_check
        %p571 = pneg %p570
      $region46: #{projet_transformer_forward.7} parent=5 // pred_check_branch
        %573 = sbr.rel (%p571) target = $region48
      $region47: #{projet_transformer_forward.7} parent=5 // pred_region
        %s574 = ssub.s32 %s14, 2
        // Predicated region
        $region49: #{projet_transformer_forward.7} parent=47 // pred_check
          %p575 = pneg %p153
        $region50: #{projet_transformer_forward.7} parent=47 // pred_check_branch
          %577 = sbr.rel (%p575) target = $region52
        $region51: #{projet_transformer_forward.7} parent=47 // pred_region
          %s578 = sand.u32 %s138, 1
          %s579 = scalar_lea.sflag [#allocation3], %s578
          %s580 = sand.u32 %s138, 1
          %s581 = smul.addr %s580, 32
          %s582 = scalar_lea.vmem [#allocation2], %s581
          %583 = dma.done %s579, 512
        $region52: #{projet_transformer_forward.7} parent=47 // pred_fallthru
          _
      $region48: #{projet_transformer_forward.7} parent=5 // pred_fallthru
        _
    $region6: #{projet_transformer_forward.7} parent=1 // loop_footer
      %s18 = sadd.s32 1, %s14
    $region7: #{projet_transformer_forward.7} parent=1 // loop_footer_branch
      %13 = sbr.rel target = $region3
    $region8: #{projet_transformer_forward.7} parent=1 // loop_exit
      _
    %584 = vsyncpa [#allocation3], 1
    %s585 = scalar_lea.sflag [#allocation3], 1
    %586 = vsyncpa %s585, 1

// kernel: projet_transformer_forward.5
$region0: #{projet_transformer_forward.5}
  #allocation0 [shape = 'u32[]', space=smem, size = 0x4, offset = 0x4, fixed_abs, tag = 'smem constant byte address 0x4 - core index']
  #allocation1 [shape = 'u32[144,128]{1,0:T(1,128)}', space=vmem, size = 0x12000, scoped, tag = 'internal scratch']
  %s0 = inlined_call_operand.vmem [shape: f32[64,32], index: 0, kind: input, shape index: {}]
  %s1 = inlined_call_operand.vmem [shape: f32[32,64], index: 1, kind: input, shape index: {}]
  %s2 = inlined_call_operand.vmem [shape: f32[1,64], index: 2, kind: input, shape index: {}]
  %s3 = inlined_call_operand.vmem [shape: f32[64,32], index: 3, kind: input, shape index: {}]
  %s4 = inlined_call_operand.vmem [shape: f32[1,32], index: 4, kind: input, shape index: {}]
  %s5 = inlined_call_operand.vmem [shape: f32[64,32], index: 5, kind: output, shape index: {}]
  %s6 = sld [smem:[#allocation0]]
  $region53: #{projet_transformer_forward.5} parent=0
    _
  %s8 = ssub.s32 1, %s6
  %s9 = scalar_select 0, %s8, %s6
  loop: start=0, step=1, limit=4
  $region2: #{projet_transformer_forward.5} parent=0 // loop_pre_header
    _
  $region3: #{projet_transformer_forward.5} parent=0 // loop_header
    %s11 = sphi 0, %s15
    %p12 = scmp.ge.s32.totalorder %s11, 4
    %s21 = sphi 0, %s23
    %s24 = sphi 0, %s21
    %s25 = sphi 0, %s24
    %s41 = sphi 0, %s25
    %s45 = sphi 0, %s45
    %s47 = sphi 0, %s45
    %s48 = sphi 0, %s47
    %s62 = sphi 0, %s48
    %s66 = sphi 0, %s66
    %s68 = sphi 0, %s66
    %s69 = sphi 0, %s68
    %s83 = sphi 0, %s69
    %s87 = sphi 0, %s87
    %s89 = sphi 0, %s87
    %s90 = sphi 0, %s89
    %s104 = sphi 0, %s90
    %s108 = sphi 0, %s108
    %s110 = sphi 0, %s108
    %s111 = sphi 0, %s110
    %s125 = sphi 0, %s111
    %s131 = sphi 0, %s133
    %s134 = sphi 0, %s131
    %s135 = sphi 0, %s134
    %s151 = sphi 0, %s135
  $region4: #{projet_transformer_forward.5} parent=0 // loop_header_branch
    %14 = sbr.rel (%p12) target = $region8
  $region5: #{projet_transformer_forward.5} parent=0 // loop_body
    %s16 = ssub.s32 %s11, 1
    %s17 = ssub.s32 %s11, 2
    %s18 = sadd.s32 %s11, 1
    %s19 = ssub.s32 %s11, %s18
    %p20 = scmp.eq.s32.totalorder %s19, 0
    %s22 = sadd.s32 %s21, 1
    %s23 = scalar_select %p20, %s21, %s22
    %p26 = pneg %p20
    %p27 = scmp.eq.s32.totalorder %s11, 1
    %p28 = por %p26, %p27
    %p29 = scmp.ne.s32.totalorder %s21, %s24
    %p30 = scmp.eq.s32.totalorder %s11, 0
    %p31 = por %p29, %p30
    %p32 = scmp.ne.s32.totalorder %s21, %s24
    %p33 = scmp.eq.s32.totalorder %s16, 1
    %p34 = por %p32, %p33
    %p35 = scmp.ne.s32.totalorder %s24, %s25
    %p36 = scmp.eq.s32.totalorder %s16, 0
    %p37 = por %p35, %p36
    %p38 = scmp.ne.s32.totalorder %s24, %s25
    %p39 = scmp.eq.s32.totalorder %s17, 1
    %p40 = por %p38, %p39
    %p42 = scmp.ne.s32.totalorder %s25, %s41
    %p43 = scmp.eq.s32.totalorder %s17, 0
    %p44 = por %p42, %p43
    %s46 = sadd.s32 %s45, 1
    %p49 = scmp.eq.s32.totalorder %s11, 1
    %p50 = scmp.ne.s32.totalorder %s45, %s47
    %p51 = scmp.eq.s32.totalorder %s11, 0
    %p52 = por %p50, %p51
    %p53 = scmp.ne.s32.totalorder %s45, %s47
    %p54 = scmp.eq.s32.totalorder %s16, 1
    %p55 = por %p53, %p54
    %p56 = scmp.ne.s32.totalorder %s47, %s48
    %p57 = scmp.eq.s32.totalorder %s16, 0
    %p58 = por %p56, %p57
    %p59 = scmp.ne.s32.totalorder %s47, %s48
    %p60 = scmp.eq.s32.totalorder %s17, 1
    %p61 = por %p59, %p60
    %p63 = scmp.ne.s32.totalorder %s48, %s62
    %p64 = scmp.eq.s32.totalorder %s17, 0
    %p65 = por %p63, %p64
    %s67 = sadd.s32 %s66, 1
    %p70 = scmp.eq.s32.totalorder %s11, 1
    %p71 = scmp.ne.s32.totalorder %s66, %s68
    %p72 = scmp.eq.s32.totalorder %s11, 0
    %p73 = por %p71, %p72
    %p74 = scmp.ne.s32.totalorder %s66, %s68
    %p75 = scmp.eq.s32.totalorder %s16, 1
    %p76 = por %p74, %p75
    %p77 = scmp.ne.s32.totalorder %s68, %s69
    %p78 = scmp.eq.s32.totalorder %s16, 0
    %p79 = por %p77, %p78
    %p80 = scmp.ne.s32.totalorder %s68, %s69
    %p81 = scmp.eq.s32.totalorder %s17, 1
    %p82 = por %p80, %p81
    %p84 = scmp.ne.s32.totalorder %s69, %s83
    %p85 = scmp.eq.s32.totalorder %s17, 0
    %p86 = por %p84, %p85
    %s88 = sadd.s32 %s87, 1
    %p91 = scmp.eq.s32.totalorder %s11, 1
    %p92 = scmp.ne.s32.totalorder %s87, %s89
    %p93 = scmp.eq.s32.totalorder %s11, 0
    %p94 = por %p92, %p93
    %p95 = scmp.ne.s32.totalorder %s87, %s89
    %p96 = scmp.eq.s32.totalorder %s16, 1
    %p97 = por %p95, %p96
    %p98 = scmp.ne.s32.totalorder %s89, %s90
    %p99 = scmp.eq.s32.totalorder %s16, 0
    %p100 = por %p98, %p99
    %p101 = scmp.ne.s32.totalorder %s89, %s90
    %p102 = scmp.eq.s32.totalorder %s17, 1
    %p103 = por %p101, %p102
    %p105 = scmp.ne.s32.totalorder %s90, %s104
    %p106 = scmp.eq.s32.totalorder %s17, 0
    %p107 = por %p105, %p106
    %s109 = sadd.s32 %s108, 1
    %p112 = scmp.eq.s32.totalorder %s11, 1
    %p113 = scmp.ne.s32.totalorder %s108, %s110
    %p114 = scmp.eq.s32.totalorder %s11, 0
    %p115 = por %p113, %p114
    %p116 = scmp.ne.s32.totalorder %s108, %s110
    %p117 = scmp.eq.s32.totalorder %s16, 1
    %p118 = por %p116, %p117
    %p119 = scmp.ne.s32.totalorder %s110, %s111
    %p120 = scmp.eq.s32.totalorder %s16, 0
    %p121 = por %p119, %p120
    %p122 = scmp.ne.s32.totalorder %s110, %s111
    %p123 = scmp.eq.s32.totalorder %s17, 1
    %p124 = por %p122, %p123
    %p126 = scmp.ne.s32.totalorder %s111, %s125
    %p127 = scmp.eq.s32.totalorder %s17, 0
    %p128 = por %p126, %p127
    %s129 = ssub.s32 %s11, %s18
    %p130 = scmp.eq.s32.totalorder %s129, 0
    %s132 = sadd.s32 %s131, 1
    %s133 = scalar_select %p130, %s131, %s132
    %p136 = pneg %p130
    %p137 = scmp.eq.s32.totalorder %s11, 1
    %p138 = por %p136, %p137
    %p139 = scmp.ne.s32.totalorder %s131, %s134
    %p140 = scmp.eq.s32.totalorder %s11, 0
    %p141 = por %p139, %p140
    %p142 = scmp.ne.s32.totalorder %s131, %s134
    %p143 = scmp.eq.s32.totalorder %s16, 1
    %p144 = por %p142, %p143
    %p145 = scmp.ne.s32.totalorder %s134, %s135
    %p146 = scmp.eq.s32.totalorder %s16, 0
    %p147 = por %p145, %p146
    %p148 = scmp.ne.s32.totalorder %s134, %s135
    %p149 = scmp.eq.s32.totalorder %s17, 1
    %p150 = por %p148, %p149
    %p152 = scmp.ne.s32.totalorder %s135, %s151
    %p153 = scmp.eq.s32.totalorder %s17, 0
    %p154 = por %p152, %p153
    %p155 = scmp.le.s32.totalorder 1, %s11
    %p156 = scmp.lt.s32.totalorder %s11, 3
    %p157 = pnand %p155, %p156
    %p158 = pneg %p157
    // Predicated region
    $region9: #{projet_transformer_forward.5} parent=5 // pred_check
      _
    $region10: #{projet_transformer_forward.5} parent=5 // pred_check_branch
      %160 = sbr.rel (%p157) target = $region12
    $region11: #{projet_transformer_forward.5} parent=5 // pred_region
      %s161 = ssub.s32 %s11, 1
      // Predicated region
      $region13: #{projet_transformer_forward.5} parent=11 // pred_check
        %p162 = pneg %p58
      $region14: #{projet_transformer_forward.5} parent=11 // pred_check_branch
        %164 = sbr.rel (%p162) target = $region16
      $region15: #{projet_transformer_forward.5} parent=11 // pred_region
        _
      $region16: #{projet_transformer_forward.5} parent=11 // pred_fallthru
        _
      // Predicated region
      $region17: #{projet_transformer_forward.5} parent=11 // pred_check
        %p165 = pneg %p79
      $region18: #{projet_transformer_forward.5} parent=11 // pred_check_branch
        %167 = sbr.rel (%p165) target = $region20
      $region19: #{projet_transformer_forward.5} parent=11 // pred_region
        _
      $region20: #{projet_transformer_forward.5} parent=11 // pred_fallthru
        _
      // Predicated region
      $region21: #{projet_transformer_forward.5} parent=11 // pred_check
        %p168 = pneg %p100
      $region22: #{projet_transformer_forward.5} parent=11 // pred_check_branch
        %170 = sbr.rel (%p168) target = $region24
      $region23: #{projet_transformer_forward.5} parent=11 // pred_region
        _
      $region24: #{projet_transformer_forward.5} parent=11 // pred_fallthru
        _
      // Predicated region
      $region25: #{projet_transformer_forward.5} parent=11 // pred_check
        %p171 = pneg %p121
      $region26: #{projet_transformer_forward.5} parent=11 // pred_check_branch
        %173 = sbr.rel (%p171) target = $region28
      $region27: #{projet_transformer_forward.5} parent=11 // pred_region
        _
      $region28: #{projet_transformer_forward.5} parent=11 // pred_fallthru
        _
    $region12: #{projet_transformer_forward.5} parent=5 // pred_fallthru
      _
    %p174 = scmp.lt.s32.totalorder %s11, 2
    // Predicated region
    $region29: #{projet_transformer_forward.5} parent=5 // pred_check
      %p175 = pneg %p174
    $region30: #{projet_transformer_forward.5} parent=5 // pred_check_branch
      %177 = sbr.rel (%p175) target = $region32
    $region31: #{projet_transformer_forward.5} parent=5 // pred_region
      // Predicated region
      $region33: #{projet_transformer_forward.5} parent=31 // pred_check
        %p178 = pneg %p31
      $region34: #{projet_transformer_forward.5} parent=31 // pred_check_branch
        %180 = sbr.rel (%p178) target = $region36
      $region35: #{projet_transformer_forward.5} parent=31 // pred_region
        %s181 = smul.u32 4, %s11
        %p182 = scmp.lt.s32.totalorder %s181, 7
        %s183 = scalar_select %p182, %s181, 7
        %s184 = smul.addr %s183, 8
        %s185 = scalar_lea.vmem %s0, %s184
        %s186 = smul.u32 4, %s11
      $region36: #{projet_transformer_forward.5} parent=31 // pred_fallthru
        _
    $region32: #{projet_transformer_forward.5} parent=5 // pred_fallthru
      _
    %p187 = scmp.le.s32.totalorder 1, %s11
    %p188 = scmp.lt.s32.totalorder %s11, 3
    %p189 = pnand %p187, %p188
    %p190 = pneg %p189
    // Predicated region
    $region37: #{projet_transformer_forward.5} parent=5 // pred_check
      _
    $region38: #{projet_transformer_forward.5} parent=5 // pred_check_branch
      %192 = sbr.rel (%p189) target = $region40
    $region39: #{projet_transformer_forward.5} parent=5 // pred_region
      %s193 = ssub.s32 %s11, 1
      %s194 = smul.u32 4, %s16
      %p195 = scmp.lt.s32.totalorder %s194, 7
      %s196 = scalar_select %p195, %s194, 7
      %s197 = smul.addr %s196, 8
      %s198 = scalar_lea.vmem %s0, %s197
      %p199 = pneg %p37
      %p200 = pneg %p34
      %p201 = pneg %p58
      %p202 = pneg %p55
      %p203 = pneg %p79
      %p204 = pneg %p76
      %p205 = pneg %p100
      %p206 = pneg %p97
      %p207 = pneg %p121
      %p208 = pneg %p118
      %p209 = pneg %p147
      %p210 = pneg %p144
      %s211 = smul.u32 4, %s16
      %p212 = scmp.lt.s32.totalorder %s211, 7
      %s213 = scalar_select %p212, %s211, 7
      %s214 = smul.addr %s213, 8
      %s215 = scalar_lea.vmem %s5, %s214
      %s216 = smul.u32 4, %s16
      %p217 = scmp.lt.s32.totalorder %s216, 7
      %s218 = scalar_select %p217, %s216, 7
      %s219 = smul.addr %s218, 8
      %s220 = scalar_lea.vmem %s0, %s219
      %s221 = smul.u32 4, %s16
      %s222 = smul.u32 4, %s16
      %p223 = scmp.lt.s32.totalorder %s222, 7
      %s224 = scalar_select %p223, %s222, 7
      %s225 = smul.addr %s224, 8
      %s226 = scalar_lea.vmem %s5, %s225
      %s227 = smul.u32 4, %s16
      %v228 = vld [vmem:[%s220] sm:$0xff]
      %v229 = vld [vmem:[%s220 + $0x8] sm:$0xff]
      %v230 = vld [vmem:[%s220 + $0x10] sm:$0xff]
      %v231 = vld [vmem:[%s220 + $0x18] sm:$0xff]
      %vm232 = vcmask 261120
      %v233 = vsel %vm232, %v228, 0.0
      %234 = vadd.xlane.f32.xlu0 %v233
      %v235 = vpop.xlane.xlu0 %234
      %v236 = vsel %vm232, %v229, 0.0
      %237 = vadd.xlane.f32.xlu0 %v236
      %v238 = vpop.xlane.xlu0 %237
      %v239 = vsel %vm232, %v230, 0.0
      %240 = vadd.xlane.f32.xlu0 %v239
      %v241 = vpop.xlane.xlu0 %240
      %v242 = vsel %vm232, %v231, 0.0
      %243 = vadd.xlane.f32.xlu0 %v242
      %v244 = vpop.xlane.xlu0 %243
      %v245 = vrcp.pop 32.0
      %v246 = vmul.f32 %v235, %v245
      %v247 = vmul.f32 %v238, %v245
      %v248 = vmul.f32 %v241, %v245
      %v249 = vmul.f32 %v244, %v245
      %v250 = vsub.f32 %v228, %v246
      %v251 = vsub.f32 %v229, %v247
      %v252 = vsub.f32 %v230, %v248
      %v253 = vsub.f32 %v231, %v249
      %v254 = vmul.f32 %v250, %v250
      %v255 = vmul.f32 %v251, %v251
      %v256 = vmul.f32 %v252, %v252
      %v257 = vmul.f32 %v253, %v253
      %v258 = vsel %vm232, %v254, 0.0
      %259 = vadd.xlane.f32.xlu0 %v258
      %v260 = vpop.xlane.xlu0 %259
      %v261 = vsel %vm232, %v255, 0.0
      %262 = vadd.xlane.f32.xlu0 %v261
      %v263 = vpop.xlane.xlu0 %262
      %v264 = vsel %vm232, %v256, 0.0
      %265 = vadd.xlane.f32.xlu0 %v264
      %v266 = vpop.xlane.xlu0 %265
      %v267 = vsel %vm232, %v257, 0.0
      %268 = vadd.xlane.f32.xlu0 %v267
      %v269 = vpop.xlane.xlu0 %268
      %v270 = vmul.f32 %v260, %v245
      %v271 = vmul.f32 %v263, %v245
      %v272 = vmul.f32 %v266, %v245
      %v273 = vmul.f32 %v269, %v245
      %v274 = vadd.f32 %v270, 1e-05
      %v275 = vadd.f32 %v271, 1e-05
      %v276 = vadd.f32 %v272, 1e-05
      %v277 = vadd.f32 %v273, 1e-05
      %v278 = vrsqrt.pop %v274
      %v279 = vrsqrt.pop %v275
      %v280 = vrsqrt.pop %v276
      %v281 = vrsqrt.pop %v277
      %v282 = vmul.f32 %v250, %v278
      %v283 = vmul.f32 %v251, %v279
      %v284 = vmul.f32 %v252, %v280
      %v285 = vmul.f32 %v253, %v281
      %v286 = vld [vmem:[%s1] sm:$0xff]
      %v287 = vld [vmem:[%s1 + $0x8] sm:$0xff]
      %v288 = vld [vmem:[%s1 + $0x10] sm:$0xff]
      %v289 = vld [vmem:[%s1 + $0x18] sm:$0xff]
      %v290 = vld [vmem:[%s2] sm:$0x1]
      %v292 = vlaneseq
      %v293 = vshrl.u32 %v292, 7
      %v294 = vsub.s32 0, %v293
      %v295 = vrot.slane %v290, %v294
      %v298 = vsel %vm232, %v282, 0
      %v301 = vsel %vm232, %v283, 0
      %v304 = vsel %vm232, %v284, 0
      %v307 = vsel %vm232, %v285, 0
      %309 = vmatprep.subr.mxu0 0.0
      %310 = vmatpush1.msra.mxu0 %v286
      %311 = vmatprep.subr.mxu0 0.0
      %312 = vmatpush1.msra.mxu0 %v287
      %313 = vmatprep.subr.mxu0 0.0
      %314 = vmatpush1.msra.mxu0 %v288
      %315 = vmatprep.subr.mxu0 0.0
      %316 = vmatpush1.msra.mxu0 %v289
      %317 = vmatprep.subr.mxu0 0.0
      %318 = vmatpush1.msra.mxu0 0.0
      %319 = vmatprep.subr.mxu0 0.0
      %320 = vmatpush1.msra.mxu0 0.0
      %321 = vmatprep.subr.mxu0 0.0
      %322 = vmatpush1.msra.mxu0 0.0
      %323 = vmatprep.subr.mxu0 0.0
      %324 = vmatpush1.msra.mxu0 0.0
      %325 = vmatprep.subr.mxu0 0.0
      %326 = vmatpush1.msra.mxu0 0.0
      %327 = vmatprep.subr.mxu0 0.0
      %328 = vmatpush1.msra.mxu0 0.0
      %329 = vmatprep.subr.mxu0 0.0
      %330 = vmatpush1.msra.mxu0 0.0
      %331 = vmatprep.subr.mxu0 0.0
      %332 = vmatpush1.msra.mxu0 0.0
      %333 = vmatprep.subr.mxu0 0.0
      %334 = vmatpush1.msra.mxu0 0.0
      %335 = vmatprep.subr.mxu0 0.0
      %336 = vmatpush1.msra.mxu0 0.0
      %337 = vmatprep.subr.mxu0 0.0
      %338 = vmatpush1.msra.mxu0 0.0
      %339 = vmatprep.subr.mxu0 0.0
      %340 = vmatpush1.msra.mxu0 0.0
      %341 = vmatprep.subr.mxu0 0.0
      %342 = vmatpush1.msra.mxu0 0.0
      %343 = vmatprep.subr.mxu0 0.0
      %344 = vmatpush1.msra.mxu0 0.0
      %345 = vmatprep.subr.mxu0 0.0
      %346 = vmatpush1.msra.mxu0 0.0
      %347 = vmatprep.subr.mxu0 0.0
      %348 = vmatpush1.msra.mxu0 0.0
      %349 = vmatprep.subr.mxu0 0.0
      %350 = vmatpush1.msra.mxu0 0.0
      %351 = vmatprep.subr.mxu0 0.0
      %352 = vmatpush1.msra.mxu0 0.0
      %353 = vmatprep.subr.mxu0 0.0
      %354 = vmatpush1.msra.mxu0 0.0
      %355 = vmatprep.subr.mxu0 0.0
      %356 = vmatpush1.msra.mxu0 0.0
      %357 = vmatprep.subr.mxu0 0.0
      %358 = vmatpush1.msra.mxu0 0.0
      %359 = vmatprep.subr.mxu0 0.0
      %360 = vmatpush1.msra.mxu0 0.0
      %361 = vmatprep.subr.mxu0 0.0
      %362 = vmatpush1.msra.mxu0 0.0
      %363 = vmatprep.subr.mxu0 0.0
      %364 = vmatpush1.msra.mxu0 0.0
      %365 = vmatprep.subr.mxu0 0.0
      %366 = vmatpush1.msra.mxu0 0.0
      %367 = vmatprep.subr.mxu0 0.0
      %368 = vmatpush1.msra.mxu0 0.0
      %369 = vmatprep.subr.mxu0 0.0
      %370 = vmatpush1.msra.mxu0 0.0
      %371 = vmatprep.subr.mxu0 0.0
      %372 = vmatpush1.msra.mxu0 0.0
      %373 = vmatprep.mubr.f32.mxu0 0.0
      %374 = vmatmul.mubr.f32.gmra.mrb[0].mxu0 %v298
      %v375 = vpop.f32.mrb[0].mxu0
      %v376 = vadd.f32 %v295, %v375
      %v377 = vpop.f32.mrb[0].mxu0
      %378 = vmatprep.mubr.f32.mxu0 0.0
      %379 = vmatmul.mubr.f32.gmra.mrb[0].mxu0 %v301
      %v380 = vpop.f32.mrb[0].mxu0
      %v381 = vadd.f32 %v295, %v380
      %v382 = vpop.f32.mrb[0].mxu0
      %383 = vmatprep.mubr.f32.mxu0 0.0
      %384 = vmatmul.mubr.f32.gmra.mrb[0].mxu0 %v304
      %v385 = vpop.f32.mrb[0].mxu0
      %v386 = vadd.f32 %v295, %v385
      %v387 = vpop.f32.mrb[0].mxu0
      %388 = vmatprep.mubr.f32.mxu0 0.0
      %389 = vmatmul.mubr.f32.gmra.mrb[0].mxu0 %v307
      %v390 = vpop.f32.mrb[0].mxu0
      %v391 = vadd.f32 %v295, %v390
      %v392 = vpop.f32.mrb[0].mxu0
      %393 = vdwg.mxu0
      %v394 = vmul.f32 %v376, 0.5
      %v395 = vmul.f32 %v381, 0.5
      %v396 = vmul.f32 %v386, 0.5
      %v397 = vmul.f32 %v391, 0.5
      %v398 = vmul.f32 %v376, 0.044715
      %v399 = vmul.f32 %v381, 0.044715
      %v400 = vmul.f32 %v386, 0.044715
      %v401 = vmul.f32 %v391, 0.044715
      %v402 = vmul.f32 %v398, %v376
      %v403 = vmul.f32 %v399, %v381
      %v404 = vmul.f32 %v400, %v386
      %v405 = vmul.f32 %v401, %v391
      %v406 = vmul.f32 %v402, %v376
      %v407 = vmul.f32 %v403, %v381
      %v408 = vmul.f32 %v404, %v386
      %v409 = vmul.f32 %v405, %v391
      %v410 = vadd.f32 %v376, %v406
      %v411 = vadd.f32 %v381, %v407
      %v412 = vadd.f32 %v386, %v408
      %v413 = vadd.f32 %v391, %v409
      %v414 = vmul.f32 %v410, 0.7978846
      %v415 = vmul.f32 %v411, 0.7978846
      %v416 = vmul.f32 %v412, 0.7978846
      %v417 = vmul.f32 %v413, 0.7978846
      %v418 = vtanh.pop %v414
      %v419 = vtanh.pop %v415
      %v420 = vtanh.pop %v416
      %v421 = vtanh.pop %v417
      %v422 = vadd.f32 %v418, 1.0
      %v423 = vadd.f32 %v419, 1.0
      %v424 = vadd.f32 %v420, 1.0
      %v425 = vadd.f32 %v421, 1.0
      %v426 = vmul.f32 %v394, %v422
      %v427 = vmul.f32 %v395, %v423
      %v428 = vmul.f32 %v396, %v424
      %v429 = vmul.f32 %v397, %v425
      %v430 = vld [vmem:[%s3] sm:$0xff]
      %v431 = vld [vmem:[%s3 + $0x8] sm:$0xff]
      %v432 = vld [vmem:[%s3 + $0x10] sm:$0xff]
      %v433 = vld [vmem:[%s3 + $0x18] sm:$0xff]
      %v434 = vld [vmem:[%s3 + $0x20] sm:$0xff]
      %v435 = vld [vmem:[%s3 + $0x28] sm:$0xff]
      %v436 = vld [vmem:[%s3 + $0x30] sm:$0xff]
      %v437 = vld [vmem:[%s3 + $0x38] sm:$0xff]
      %v438 = vld [vmem:[%s4] sm:$0x1]
      %v440 = vlaneseq
      %v441 = vshrl.u32 %v440, 7
      %v442 = vsub.s32 0, %v441
      %v443 = vrot.slane %v438, %v442
      %vm445 = vcmask 523264
      %v447 = vsel %vm445, %v426, 0
      %v450 = vsel %vm445, %v427, 0
      %v453 = vsel %vm445, %v428, 0
      %v456 = vsel %vm445, %v429, 0
      %458 = vmatprep.subr.mxu0 0.0
      %459 = vmatpush1.msra.mxu0 %v430
      %460 = vmatprep.subr.mxu0 0.0
      %461 = vmatpush1.msra.mxu0 %v431
      %462 = vmatprep.subr.mxu0 0.0
      %463 = vmatpush1.msra.mxu0 %v432
      %464 = vmatprep.subr.mxu0 0.0
      %465 = vmatpush1.msra.mxu0 %v433
      %466 = vmatprep.subr.mxu0 0.0
      %467 = vmatpush1.msra.mxu0 %v434
      %468 = vmatprep.subr.mxu0 0.0
      %469 = vmatpush1.msra.mxu0 %v435
      %470 = vmatprep.subr.mxu0 0.0
      %471 = vmatpush1.msra.mxu0 %v436
      %472 = vmatprep.subr.mxu0 0.0
      %473 = vmatpush1.msra.mxu0 %v437
      %474 = vmatprep.subr.mxu0 0.0
      %475 = vmatpush1.msra.mxu0 0.0
      %476 = vmatprep.subr.mxu0 0.0
      %477 = vmatpush1.msra.mxu0 0.0
      %478 = vmatprep.subr.mxu0 0.0
      %479 = vmatpush1.msra.mxu0 0.0
      %480 = vmatprep.subr.mxu0 0.0
      %481 = vmatpush1.msra.mxu0 0.0
      %482 = vmatprep.subr.mxu0 0.0
      %483 = vmatpush1.msra.mxu0 0.0
      %484 = vmatprep.subr.mxu0 0.0
      %485 = vmatpush1.msra.mxu0 0.0
      %486 = vmatprep.subr.mxu0 0.0
      %487 = vmatpush1.msra.mxu0 0.0
      %488 = vmatprep.subr.mxu0 0.0
      %489 = vmatpush1.msra.mxu0 0.0
      %490 = vmatprep.subr.mxu0 0.0
      %491 = vmatpush1.msra.mxu0 0.0
      %492 = vmatprep.subr.mxu0 0.0
      %493 = vmatpush1.msra.mxu0 0.0
      %494 = vmatprep.subr.mxu0 0.0
      %495 = vmatpush1.msra.mxu0 0.0
      %496 = vmatprep.subr.mxu0 0.0
      %497 = vmatpush1.msra.mxu0 0.0
      %498 = vmatprep.subr.mxu0 0.0
      %499 = vmatpush1.msra.mxu0 0.0
      %500 = vmatprep.subr.mxu0 0.0
      %501 = vmatpush1.msra.mxu0 0.0
      %502 = vmatprep.subr.mxu0 0.0
      %503 = vmatpush1.msra.mxu0 0.0
      %504 = vmatprep.subr.mxu0 0.0
      %505 = vmatpush1.msra.mxu0 0.0
      %506 = vmatprep.subr.mxu0 0.0
      %507 = vmatpush1.msra.mxu0 0.0
      %508 = vmatprep.subr.mxu0 0.0
      %509 = vmatpush1.msra.mxu0 0.0
      %510 = vmatprep.subr.mxu0 0.0
      %511 = vmatpush1.msra.mxu0 0.0
      %512 = vmatprep.subr.mxu0 0.0
      %513 = vmatpush1.msra.mxu0 0.0
      %514 = vmatprep.subr.mxu0 0.0
      %515 = vmatpush1.msra.mxu0 0.0
      %516 = vmatprep.subr.mxu0 0.0
      %517 = vmatpush1.msra.mxu0 0.0
      %518 = vmatprep.subr.mxu0 0.0
      %519 = vmatpush1.msra.mxu0 0.0
      %520 = vmatprep.subr.mxu0 0.0
      %521 = vmatpush1.msra.mxu0 0.0
      %522 = vmatprep.mubr.f32.mxu0 0.0
      %523 = vmatmul.mubr.f32.gmra.mrb[0].mxu0 %v447
      %v524 = vpop.f32.mrb[0].mxu0
      %v525 = vadd.f32 %v443, %v524
      %v526 = vpop.f32.mrb[0].mxu0
      %527 = vmatprep.mubr.f32.mxu0 0.0
      %528 = vmatmul.mubr.f32.gmra.mrb[0].mxu0 %v450
      %v529 = vpop.f32.mrb[0].mxu0
      %v530 = vadd.f32 %v443, %v529
      %v531 = vpop.f32.mrb[0].mxu0
      %532 = vmatprep.mubr.f32.mxu0 0.0
      %533 = vmatmul.mubr.f32.gmra.mrb[0].mxu0 %v453
      %v534 = vpop.f32.mrb[0].mxu0
      %v535 = vadd.f32 %v443, %v534
      %v536 = vpop.f32.mrb[0].mxu0
      %537 = vmatprep.mubr.f32.mxu0 0.0
      %538 = vmatmul.mubr.f32.gmra.mrb[0].mxu0 %v456
      %v539 = vpop.f32.mrb[0].mxu0
      %v540 = vadd.f32 %v443, %v539
      %v541 = vpop.f32.mrb[0].mxu0
      %542 = vdwg.mxu0
      %v543 = vadd.f32 %v525, %v228
      %v544 = vadd.f32 %v530, %v229
      %v545 = vadd.f32 %v535, %v230
      %v546 = vadd.f32 %v540, %v231
      %547 = vst.msk [vmem:[%s226] sm:$0xff] %vm232, %v543
      %548 = vst.msk [vmem:[%s226 + $0x8] sm:$0xff] %vm232, %v544
      %549 = vst.msk [vmem:[%s226 + $0x10] sm:$0xff] %vm232, %v545
      %550 = vst.msk [vmem:[%s226 + $0x18] sm:$0xff] %vm232, %v546
      %s551 = smul.u32 4, %s16
      %p552 = scmp.lt.s32.totalorder %s551, 7
      %s553 = scalar_select %p552, %s551, 7
      %s554 = smul.addr %s553, 8
      %s555 = scalar_lea.vmem %s5, %s554
      // Predicated region
      $region41: #{projet_transformer_forward.5} parent=39 // pred_check
        %p556 = pneg %p144
      $region42: #{projet_transformer_forward.5} parent=39 // pred_check_branch
        %558 = sbr.rel (%p556) target = $region44
      $region43: #{projet_transformer_forward.5} parent=39 // pred_region
        %s559 = smul.u32 4, %s16
      $region44: #{projet_transformer_forward.5} parent=39 // pred_fallthru
        _
    $region40: #{projet_transformer_forward.5} parent=5 // pred_fallthru
      _
    %p560 = scmp.le.s32.totalorder 2, %s11
    // Predicated region
    $region45: #{projet_transformer_forward.5} parent=5 // pred_check
      %p561 = pneg %p560
    $region46: #{projet_transformer_forward.5} parent=5 // pred_check_branch
      %563 = sbr.rel (%p561) target = $region48
    $region47: #{projet_transformer_forward.5} parent=5 // pred_region
      %s564 = ssub.s32 %s11, 2
      // Predicated region
      $region49: #{projet_transformer_forward.5} parent=47 // pred_check
        %p565 = pneg %p150
      $region50: #{projet_transformer_forward.5} parent=47 // pred_check_branch
        %567 = sbr.rel (%p565) target = $region52
      $region51: #{projet_transformer_forward.5} parent=47 // pred_region
        %s568 = smul.u32 4, %s17
        %p569 = scmp.lt.s32.totalorder %s568, 7
        %s570 = scalar_select %p569, %s568, 7
        %s571 = smul.addr %s570, 8
        %s572 = scalar_lea.vmem %s5, %s571
      $region52: #{projet_transformer_forward.5} parent=47 // pred_fallthru
        _
    $region48: #{projet_transformer_forward.5} parent=5 // pred_fallthru
      _
  $region6: #{projet_transformer_forward.5} parent=0 // loop_footer
    %s15 = sadd.s32 1, %s11
  $region7: #{projet_transformer_forward.5} parent=0 // loop_footer_branch
    %10 = sbr.rel target = $region3
  $region8: #{projet_transformer_forward.5} parent=0 // loop_exit
    _

// kernel: projet_transformer_forward.4
$region0: #{projet_transformer_forward.4}
  #allocation0 [shape = 'u32[]', space=smem, size = 0x4, offset = 0x4, fixed_abs, tag = 'smem constant byte address 0x4 - core index']
  #allocation1 [shape = 'u32[144,128]{1,0:T(1,128)}', space=vmem, size = 0x12000, scoped, tag = 'internal scratch']
  #allocation2 [shape = 'f32[32,96]{1,0:T(8,128)}', space=vmem, size = 0x4000, scoped, tag = 'scratch operand']
  %s0 = inlined_call_operand.vmem [shape: f32[2,32,32], index: 0, kind: input, shape index: {}]
  %s1 = inlined_call_operand.vmem [shape: f32[32,96], index: 1, kind: input, shape index: {}]
  %s2 = inlined_call_operand.vmem [shape: f32[1,96], index: 2, kind: input, shape index: {}]
  %s3 = inlined_call_operand.vmem [shape: f32[4,8,32], index: 3, kind: input, shape index: {}]
  %s4 = inlined_call_operand.vmem [shape: f32[1,32], index: 4, kind: input, shape index: {}]
  %s5 = inlined_call_operand.vmem [shape: f32[2,32,32], index: 5, kind: output, shape index: {}]
  %s6 = sld [smem:[#allocation0]]
  $region53: #{projet_transformer_forward.4} parent=0
    _
  %s8 = ssub.s32 1, %s6
  %s9 = scalar_select 0, %s8, %s6
  loop: start=0, step=1, limit=4
  $region2: #{projet_transformer_forward.4} parent=0 // loop_pre_header
    _
  $region3: #{projet_transformer_forward.4} parent=0 // loop_header
    %s11 = sphi 0, %s15
    %p12 = scmp.ge.s32.totalorder %s11, 4
    %s21 = sphi 0, %s23
    %s24 = sphi 0, %s21
    %s25 = sphi 0, %s24
    %s41 = sphi 0, %s25
    %s45 = sphi 0, %s45
    %s47 = sphi 0, %s45
    %s48 = sphi 0, %s47
    %s62 = sphi 0, %s48
    %s66 = sphi 0, %s66
    %s68 = sphi 0, %s66
    %s69 = sphi 0, %s68
    %s83 = sphi 0, %s69
    %s87 = sphi 0, %s87
    %s89 = sphi 0, %s87
    %s90 = sphi 0, %s89
    %s104 = sphi 0, %s90
    %s108 = sphi 0, %s108
    %s110 = sphi 0, %s108
    %s111 = sphi 0, %s110
    %s125 = sphi 0, %s111
    %s131 = sphi 0, %s133
    %s134 = sphi 0, %s131
    %s135 = sphi 0, %s134
    %s151 = sphi 0, %s135
  $region4: #{projet_transformer_forward.4} parent=0 // loop_header_branch
    %14 = sbr.rel (%p12) target = $region8
  $region5: #{projet_transformer_forward.4} parent=0 // loop_body
    %s16 = ssub.s32 %s11, 1
    %s17 = ssub.s32 %s11, 2
    %s18 = sadd.s32 %s11, 1
    %s19 = ssub.s32 %s11, %s18
    %p20 = scmp.eq.s32.totalorder %s19, 0
    %s22 = sadd.s32 %s21, 1
    %s23 = scalar_select %p20, %s21, %s22
    %p26 = pneg %p20
    %p27 = scmp.eq.s32.totalorder %s11, 1
    %p28 = por %p26, %p27
    %p29 = scmp.ne.s32.totalorder %s21, %s24
    %p30 = scmp.eq.s32.totalorder %s11, 0
    %p31 = por %p29, %p30
    %p32 = scmp.ne.s32.totalorder %s21, %s24
    %p33 = scmp.eq.s32.totalorder %s16, 1
    %p34 = por %p32, %p33
    %p35 = scmp.ne.s32.totalorder %s24, %s25
    %p36 = scmp.eq.s32.totalorder %s16, 0
    %p37 = por %p35, %p36
    %p38 = scmp.ne.s32.totalorder %s24, %s25
    %p39 = scmp.eq.s32.totalorder %s17, 1
    %p40 = por %p38, %p39
    %p42 = scmp.ne.s32.totalorder %s25, %s41
    %p43 = scmp.eq.s32.totalorder %s17, 0
    %p44 = por %p42, %p43
    %s46 = sadd.s32 %s45, 1
    %p49 = scmp.eq.s32.totalorder %s11, 1
    %p50 = scmp.ne.s32.totalorder %s45, %s47
    %p51 = scmp.eq.s32.totalorder %s11, 0
    %p52 = por %p50, %p51
    %p53 = scmp.ne.s32.totalorder %s45, %s47
    %p54 = scmp.eq.s32.totalorder %s16, 1
    %p55 = por %p53, %p54
    %p56 = scmp.ne.s32.totalorder %s47, %s48
    %p57 = scmp.eq.s32.totalorder %s16, 0
    %p58 = por %p56, %p57
    %p59 = scmp.ne.s32.totalorder %s47, %s48
    %p60 = scmp.eq.s32.totalorder %s17, 1
    %p61 = por %p59, %p60
    %p63 = scmp.ne.s32.totalorder %s48, %s62
    %p64 = scmp.eq.s32.totalorder %s17, 0
    %p65 = por %p63, %p64
    %s67 = sadd.s32 %s66, 1
    %p70 = scmp.eq.s32.totalorder %s11, 1
    %p71 = scmp.ne.s32.totalorder %s66, %s68
    %p72 = scmp.eq.s32.totalorder %s11, 0
    %p73 = por %p71, %p72
    %p74 = scmp.ne.s32.totalorder %s66, %s68
    %p75 = scmp.eq.s32.totalorder %s16, 1
    %p76 = por %p74, %p75
    %p77 = scmp.ne.s32.totalorder %s68, %s69
    %p78 = scmp.eq.s32.totalorder %s16, 0
    %p79 = por %p77, %p78
    %p80 = scmp.ne.s32.totalorder %s68, %s69
    %p81 = scmp.eq.s32.totalorder %s17, 1
    %p82 = por %p80, %p81
    %p84 = scmp.ne.s32.totalorder %s69, %s83
    %p85 = scmp.eq.s32.totalorder %s17, 0
    %p86 = por %p84, %p85
    %s88 = sadd.s32 %s87, 1
    %p91 = scmp.eq.s32.totalorder %s11, 1
    %p92 = scmp.ne.s32.totalorder %s87, %s89
    %p93 = scmp.eq.s32.totalorder %s11, 0
    %p94 = por %p92, %p93
    %p95 = scmp.ne.s32.totalorder %s87, %s89
    %p96 = scmp.eq.s32.totalorder %s16, 1
    %p97 = por %p95, %p96
    %p98 = scmp.ne.s32.totalorder %s89, %s90
    %p99 = scmp.eq.s32.totalorder %s16, 0
    %p100 = por %p98, %p99
    %p101 = scmp.ne.s32.totalorder %s89, %s90
    %p102 = scmp.eq.s32.totalorder %s17, 1
    %p103 = por %p101, %p102
    %p105 = scmp.ne.s32.totalorder %s90, %s104
    %p106 = scmp.eq.s32.totalorder %s17, 0
    %p107 = por %p105, %p106
    %s109 = sadd.s32 %s108, 1
    %p112 = scmp.eq.s32.totalorder %s11, 1
    %p113 = scmp.ne.s32.totalorder %s108, %s110
    %p114 = scmp.eq.s32.totalorder %s11, 0
    %p115 = por %p113, %p114
    %p116 = scmp.ne.s32.totalorder %s108, %s110
    %p117 = scmp.eq.s32.totalorder %s16, 1
    %p118 = por %p116, %p117
    %p119 = scmp.ne.s32.totalorder %s110, %s111
    %p120 = scmp.eq.s32.totalorder %s16, 0
    %p121 = por %p119, %p120
    %p122 = scmp.ne.s32.totalorder %s110, %s111
    %p123 = scmp.eq.s32.totalorder %s17, 1
    %p124 = por %p122, %p123
    %p126 = scmp.ne.s32.totalorder %s111, %s125
    %p127 = scmp.eq.s32.totalorder %s17, 0
    %p128 = por %p126, %p127
    %s129 = ssub.s32 %s11, %s18
    %p130 = scmp.eq.s32.totalorder %s129, 0
    %s132 = sadd.s32 %s131, 1
    %s133 = scalar_select %p130, %s131, %s132
    %p136 = pneg %p130
    %p137 = scmp.eq.s32.totalorder %s11, 1
    %p138 = por %p136, %p137
    %p139 = scmp.ne.s32.totalorder %s131, %s134
    %p140 = scmp.eq.s32.totalorder %s11, 0
    %p141 = por %p139, %p140
    %p142 = scmp.ne.s32.totalorder %s131, %s134
    %p143 = scmp.eq.s32.totalorder %s16, 1
    %p144 = por %p142, %p143
    %p145 = scmp.ne.s32.totalorder %s134, %s135
    %p146 = scmp.eq.s32.totalorder %s16, 0
    %p147 = por %p145, %p146
    %p148 = scmp.ne.s32.totalorder %s134, %s135
    %p149 = scmp.eq.s32.totalorder %s17, 1
    %p150 = por %p148, %p149
    %p152 = scmp.ne.s32.totalorder %s135, %s151
    %p153 = scmp.eq.s32.totalorder %s17, 0
    %p154 = por %p152, %p153
    %p155 = scmp.le.s32.totalorder 1, %s11
    %p156 = scmp.lt.s32.totalorder %s11, 3
    %p157 = pnand %p155, %p156
    %p158 = pneg %p157
    // Predicated region
    $region9: #{projet_transformer_forward.4} parent=5 // pred_check
      _
    $region10: #{projet_transformer_forward.4} parent=5 // pred_check_branch
      %160 = sbr.rel (%p157) target = $region12
    $region11: #{projet_transformer_forward.4} parent=5 // pred_region
      %s161 = ssub.s32 %s11, 1
      // Predicated region
      $region13: #{projet_transformer_forward.4} parent=11 // pred_check
        %p162 = pneg %p58
      $region14: #{projet_transformer_forward.4} parent=11 // pred_check_branch
        %164 = sbr.rel (%p162) target = $region16
      $region15: #{projet_transformer_forward.4} parent=11 // pred_region
        _
      $region16: #{projet_transformer_forward.4} parent=11 // pred_fallthru
        _
      // Predicated region
      $region17: #{projet_transformer_forward.4} parent=11 // pred_check
        %p165 = pneg %p79
      $region18: #{projet_transformer_forward.4} parent=11 // pred_check_branch
        %167 = sbr.rel (%p165) target = $region20
      $region19: #{projet_transformer_forward.4} parent=11 // pred_region
        _
      $region20: #{projet_transformer_forward.4} parent=11 // pred_fallthru
        _
      // Predicated region
      $region21: #{projet_transformer_forward.4} parent=11 // pred_check
        %p168 = pneg %p100
      $region22: #{projet_transformer_forward.4} parent=11 // pred_check_branch
        %170 = sbr.rel (%p168) target = $region24
      $region23: #{projet_transformer_forward.4} parent=11 // pred_region
        _
      $region24: #{projet_transformer_forward.4} parent=11 // pred_fallthru
        _
      // Predicated region
      $region25: #{projet_transformer_forward.4} parent=11 // pred_check
        %p171 = pneg %p121
      $region26: #{projet_transformer_forward.4} parent=11 // pred_check_branch
        %173 = sbr.rel (%p171) target = $region28
      $region27: #{projet_transformer_forward.4} parent=11 // pred_region
        _
      $region28: #{projet_transformer_forward.4} parent=11 // pred_fallthru
        _
    $region12: #{projet_transformer_forward.4} parent=5 // pred_fallthru
      _
    %p174 = scmp.lt.s32.totalorder %s11, 2
    // Predicated region
    $region29: #{projet_transformer_forward.4} parent=5 // pred_check
      %p175 = pneg %p174
    $region30: #{projet_transformer_forward.4} parent=5 // pred_check_branch
      %177 = sbr.rel (%p175) target = $region32
    $region31: #{projet_transformer_forward.4} parent=5 // pred_region
      // Predicated region
      $region33: #{projet_transformer_forward.4} parent=31 // pred_check
        %p178 = pneg %p31
      $region34: #{projet_transformer_forward.4} parent=31 // pred_check_branch
        %180 = sbr.rel (%p178) target = $region36
      $region35: #{projet_transformer_forward.4} parent=31 // pred_region
        %p181 = scmp.lt.s32.totalorder %s11, 1
        %s182 = scalar_select %p181, %s11, 1
        %s183 = smul.addr %s182, 4
        %s184 = smul.addr %s183, 8
        %s185 = scalar_lea.vmem %s0, %s184
      $region36: #{projet_transformer_forward.4} parent=31 // pred_fallthru
        _
    $region32: #{projet_transformer_forward.4} parent=5 // pred_fallthru
      _
    %p186 = scmp.le.s32.totalorder 1, %s11
    %p187 = scmp.lt.s32.totalorder %s11, 3
    %p188 = pnand %p186, %p187
    %p189 = pneg %p188
    // Predicated region
    $region37: #{projet_transformer_forward.4} parent=5 // pred_check
      _
    $region38: #{projet_transformer_forward.4} parent=5 // pred_check_branch
      %191 = sbr.rel (%p188) target = $region40
    $region39: #{projet_transformer_forward.4} parent=5 // pred_region
      %s192 = ssub.s32 %s11, 1
      %p193 = scmp.lt.s32.totalorder %s16, 1
      %s194 = scalar_select %p193, %s16, 1
      %s195 = smul.addr %s194, 4
      %s196 = smul.addr %s195, 8
      %s197 = scalar_lea.vmem %s0, %s196
      %p198 = pneg %p37
      %p199 = pneg %p34
      %p200 = pneg %p58
      %p201 = pneg %p55
      %p202 = pneg %p79
      %p203 = pneg %p76
      %p204 = pneg %p100
      %p205 = pneg %p97
      %p206 = pneg %p121
      %p207 = pneg %p118
      %p208 = pneg %p147
      %p209 = pneg %p144
      %p210 = scmp.lt.s32.totalorder %s16, 1
      %s211 = scalar_select %p210, %s16, 1
      %s212 = smul.addr %s211, 4
      %s213 = smul.addr %s212, 8
      %s214 = scalar_lea.vmem %s5, %s213
      %p215 = scmp.lt.s32.totalorder %s16, 1
      %s216 = scalar_select %p215, %s16, 1
      %s217 = smul.addr %s216, 4
      %s218 = smul.addr %s217, 8
      %s219 = scalar_lea.vmem %s0, %s218
      %p220 = scmp.lt.s32.totalorder %s16, 1
      %s221 = scalar_select %p220, %s16, 1
      %s222 = smul.addr %s221, 4
      %s223 = smul.addr %s222, 8
      %s224 = scalar_lea.vmem %s5, %s223
      %v225 = vld [vmem:[%s219] sm:$0xff]
      %v226 = vld [vmem:[%s219 + $0x8] sm:$0xff]
      %v227 = vld [vmem:[%s219 + $0x10] sm:$0xff]
      %v228 = vld [vmem:[%s219 + $0x18] sm:$0xff]
      %vm229 = vcmask 261120
      %v230 = vsel %vm229, %v225, 0.0
      %231 = vadd.xlane.f32.xlu0 %v230
      %v232 = vpop.xlane.xlu0 %231
      %v233 = vsel %vm229, %v226, 0.0
      %234 = vadd.xlane.f32.xlu0 %v233
      %v235 = vpop.xlane.xlu0 %234
      %v236 = vsel %vm229, %v227, 0.0
      %237 = vadd.xlane.f32.xlu0 %v236
      %v238 = vpop.xlane.xlu0 %237
      %v239 = vsel %vm229, %v228, 0.0
      %240 = vadd.xlane.f32.xlu0 %v239
      %v241 = vpop.xlane.xlu0 %240
      %v242 = vrcp.pop 32.0
      %v243 = vmul.f32 %v232, %v242
      %v244 = vmul.f32 %v235, %v242
      %v245 = vmul.f32 %v238, %v242
      %v246 = vmul.f32 %v241, %v242
      %v247 = vsub.f32 %v225, %v243
      %v248 = vsub.f32 %v226, %v244
      %v249 = vsub.f32 %v227, %v245
      %v250 = vsub.f32 %v228, %v246
      %v251 = vmul.f32 %v247, %v247
      %v252 = vmul.f32 %v248, %v248
      %v253 = vmul.f32 %v249, %v249
      %v254 = vmul.f32 %v250, %v250
      %v255 = vsel %vm229, %v251, 0.0
      %256 = vadd.xlane.f32.xlu0 %v255
      %v257 = vpop.xlane.xlu0 %256
      %v258 = vsel %vm229, %v252, 0.0
      %259 = vadd.xlane.f32.xlu0 %v258
      %v260 = vpop.xlane.xlu0 %259
      %v261 = vsel %vm229, %v253, 0.0
      %262 = vadd.xlane.f32.xlu0 %v261
      %v263 = vpop.xlane.xlu0 %262
      %v264 = vsel %vm229, %v254, 0.0
      %265 = vadd.xlane.f32.xlu0 %v264
      %v266 = vpop.xlane.xlu0 %265
      %v267 = vmul.f32 %v257, %v242
      %v268 = vmul.f32 %v260, %v242
      %v269 = vmul.f32 %v263, %v242
      %v270 = vmul.f32 %v266, %v242
      %v271 = vadd.f32 %v267, 1e-05
      %v272 = vadd.f32 %v268, 1e-05
      %v273 = vadd.f32 %v269, 1e-05
      %v274 = vadd.f32 %v270, 1e-05
      %v275 = vrsqrt.pop %v271
      %v276 = vrsqrt.pop %v272
      %v277 = vrsqrt.pop %v273
      %v278 = vrsqrt.pop %v274
      %v279 = vmul.f32 %v247, %v275
      %v280 = vmul.f32 %v248, %v276
      %v281 = vmul.f32 %v249, %v277
      %v282 = vmul.f32 %v250, %v278
      %v283 = vld [vmem:[%s1] sm:$0xff]
      %v284 = vld [vmem:[%s1 + $0x8] sm:$0xff]
      %v285 = vld [vmem:[%s1 + $0x10] sm:$0xff]
      %v286 = vld [vmem:[%s1 + $0x18] sm:$0xff]
      %v287 = vld [vmem:[%s2] sm:$0x1]
      %v289 = vlaneseq
      %v290 = vshrl.u32 %v289, 7
      %v291 = vsub.s32 0, %v290
      %v292 = vrot.slane %v287, %v291
      %v295 = vsel %vm229, %v279, 0
      %v298 = vsel %vm229, %v280, 0
      %v301 = vsel %vm229, %v281, 0
      %v304 = vsel %vm229, %v282, 0
      %306 = vmatprep.subr.mxu0 0.0
      %307 = vmatpush1.msra.mxu0 %v283
      %308 = vmatprep.subr.mxu0 0.0
      %309 = vmatpush1.msra.mxu0 %v284
      %310 = vmatprep.subr.mxu0 0.0
      %311 = vmatpush1.msra.mxu0 %v285
      %312 = vmatprep.subr.mxu0 0.0
      %313 = vmatpush1.msra.mxu0 %v286
      %314 = vmatprep.subr.mxu0 0.0
      %315 = vmatpush1.msra.mxu0 0.0
      %316 = vmatprep.subr.mxu0 0.0
      %317 = vmatpush1.msra.mxu0 0.0
      %318 = vmatprep.subr.mxu0 0.0
      %319 = vmatpush1.msra.mxu0 0.0
      %320 = vmatprep.subr.mxu0 0.0
      %321 = vmatpush1.msra.mxu0 0.0
      %322 = vmatprep.subr.mxu0 0.0
      %323 = vmatpush1.msra.mxu0 0.0
      %324 = vmatprep.subr.mxu0 0.0
      %325 = vmatpush1.msra.mxu0 0.0
      %326 = vmatprep.subr.mxu0 0.0
      %327 = vmatpush1.msra.mxu0 0.0
      %328 = vmatprep.subr.mxu0 0.0
      %329 = vmatpush1.msra.mxu0 0.0
      %330 = vmatprep.subr.mxu0 0.0
      %331 = vmatpush1.msra.mxu0 0.0
      %332 = vmatprep.subr.mxu0 0.0
      %333 = vmatpush1.msra.mxu0 0.0
      %334 = vmatprep.subr.mxu0 0.0
      %335 = vmatpush1.msra.mxu0 0.0
      %336 = vmatprep.subr.mxu0 0.0
      %337 = vmatpush1.msra.mxu0 0.0
      %338 = vmatprep.subr.mxu0 0.0
      %339 = vmatpush1.msra.mxu0 0.0
      %340 = vmatprep.subr.mxu0 0.0
      %341 = vmatpush1.msra.mxu0 0.0
      %342 = vmatprep.subr.mxu0 0.0
      %343 = vmatpush1.msra.mxu0 0.0
      %344 = vmatprep.subr.mxu0 0.0
      %345 = vmatpush1.msra.mxu0 0.0
      %346 = vmatprep.subr.mxu0 0.0
      %347 = vmatpush1.msra.mxu0 0.0
      %348 = vmatprep.subr.mxu0 0.0
      %349 = vmatpush1.msra.mxu0 0.0
      %350 = vmatprep.subr.mxu0 0.0
      %351 = vmatpush1.msra.mxu0 0.0
      %352 = vmatprep.subr.mxu0 0.0
      %353 = vmatpush1.msra.mxu0 0.0
      %354 = vmatprep.subr.mxu0 0.0
      %355 = vmatpush1.msra.mxu0 0.0
      %356 = vmatprep.subr.mxu0 0.0
      %357 = vmatpush1.msra.mxu0 0.0
      %358 = vmatprep.subr.mxu0 0.0
      %359 = vmatpush1.msra.mxu0 0.0
      %360 = vmatprep.subr.mxu0 0.0
      %361 = vmatpush1.msra.mxu0 0.0
      %362 = vmatprep.subr.mxu0 0.0
      %363 = vmatpush1.msra.mxu0 0.0
      %364 = vmatprep.subr.mxu0 0.0
      %365 = vmatpush1.msra.mxu0 0.0
      %366 = vmatprep.subr.mxu0 0.0
      %367 = vmatpush1.msra.mxu0 0.0
      %368 = vmatprep.subr.mxu0 0.0
      %369 = vmatpush1.msra.mxu0 0.0
      %370 = vmatprep.mubr.f32.mxu0 0.0
      %371 = vmatmul.mubr.f32.gmra.mrb[0].mxu0 %v295
      %v372 = vpop.f32.mrb[0].mxu0
      %v373 = vadd.f32 %v292, %v372
      %v374 = vpop.f32.mrb[0].mxu0
      %375 = vmatprep.mubr.f32.mxu0 0.0
      %376 = vmatmul.mubr.f32.gmra.mrb[0].mxu0 %v298
      %v377 = vpop.f32.mrb[0].mxu0
      %v378 = vadd.f32 %v292, %v377
      %v379 = vpop.f32.mrb[0].mxu0
      %380 = vmatprep.mubr.f32.mxu0 0.0
      %381 = vmatmul.mubr.f32.gmra.mrb[0].mxu0 %v301
      %v382 = vpop.f32.mrb[0].mxu0
      %v383 = vadd.f32 %v292, %v382
      %v384 = vpop.f32.mrb[0].mxu0
      %385 = vmatprep.mubr.f32.mxu0 0.0
      %386 = vmatmul.mubr.f32.gmra.mrb[0].mxu0 %v304
      %v387 = vpop.f32.mrb[0].mxu0
      %v388 = vadd.f32 %v292, %v387
      %v389 = vpop.f32.mrb[0].mxu0
      %390 = vdwg.mxu0
      %vm391 = vcmask 785408
      %392 = vst.msk [vmem:[#allocation2] sm:$0xff] %vm391, %v373
      %393 = vst.msk [vmem:[#allocation2 + $0x8] sm:$0xff] %vm391, %v378
      %394 = vst.msk [vmem:[#allocation2 + $0x10] sm:$0xff] %vm391, %v383
      %395 = vst.msk [vmem:[#allocation2 + $0x18] sm:$0xff] %vm391, %v388
      %v396 = vld [vmem:[#allocation2] sm:$0xff]
      %v397 = vld [vmem:[#allocation2 + $0x8] sm:$0xff]
      %v398 = vld [vmem:[#allocation2 + $0x10] sm:$0xff]
      %v399 = vld [vmem:[#allocation2 + $0x18] sm:$0xff]
      %404 = vrot.lane.b32.xlu0 %v396, 96
      %v405 = vpop.permute.xlu0 %404
      %406 = vrot.lane.b32.xlu0 %v397, 96
      %v407 = vpop.permute.xlu0 %406
      %408 = vrot.lane.b32.xlu0 %v398, 96
      %v409 = vpop.permute.xlu0 %408
      %410 = vrot.lane.b32.xlu0 %v399, 96
      %v411 = vpop.permute.xlu0 %410
      %vm412 = vcmask 64512
      %v413 = vsel %vm412, %v396, 0
      %v415 = vsel %vm412, %v397, 0
      %v417 = vsel %vm412, %v398, 0
      %v419 = vsel %vm412, %v399, 0
      %v421 = vsel %vm412, %v405, 0
      %v423 = vsel %vm412, %v407, 0
      %v425 = vsel %vm412, %v409, 0
      %v427 = vsel %vm412, %v411, 0
      %429 = vmatprep.subr.mxu0 0.0
      %430 = vmatpush1.xpose.msra.mxu0 %v421
      %431 = vmatprep.subr.mxu0 0.0
      %432 = vmatpush1.xpose.msra.mxu0 %v423
      %433 = vmatprep.subr.mxu0 0.0
      %434 = vmatpush1.xpose.msra.mxu0 %v425
      %435 = vmatprep.subr.mxu0 0.0
      %436 = vmatpush1.xpose.msra.mxu0 %v427
      %437 = vmatprep.subr.mxu0 0.0
      %438 = vmatpush1.xpose.msra.mxu0 0.0
      %439 = vmatprep.subr.mxu0 0.0
      %440 = vmatpush1.xpose.msra.mxu0 0.0
      %441 = vmatprep.subr.mxu0 0.0
      %442 = vmatpush1.xpose.msra.mxu0 0.0
      %443 = vmatprep.subr.mxu0 0.0
      %444 = vmatpush1.xpose.msra.mxu0 0.0
      %445 = vmatprep.subr.mxu0 0.0
      %446 = vmatpush1.xpose.msra.mxu0 0.0
      %447 = vmatprep.subr.mxu0 0.0
      %448 = vmatpush1.xpose.msra.mxu0 0.0
      %449 = vmatprep.subr.mxu0 0.0
      %450 = vmatpush1.xpose.msra.mxu0 0.0
      %451 = vmatprep.subr.mxu0 0.0
      %452 = vmatpush1.xpose.msra.mxu0 0.0
      %453 = vmatprep.subr.mxu0 0.0
      %454 = vmatpush1.xpose.msra.mxu0 0.0
      %455 = vmatprep.subr.mxu0 0.0
      %456 = vmatpush1.xpose.msra.mxu0 0.0
      %457 = vmatprep.subr.mxu0 0.0
      %458 = vmatpush1.xpose.msra.mxu0 0.0
      %459 = vmatprep.subr.mxu0 0.0
      %460 = vmatpush1.xpose.msra.mxu0 0.0
      %461 = vmatprep.subr.mxu0 0.0
      %462 = vmatpush1.xpose.msra.mxu0 0.0
      %463 = vmatprep.subr.mxu0 0.0
      %464 = vmatpush1.xpose.msra.mxu0 0.0
      %465 = vmatprep.subr.mxu0 0.0
      %466 = vmatpush1.xpose.msra.mxu0 0.0
      %467 = vmatprep.subr.mxu0 0.0
      %468 = vmatpush1.xpose.msra.mxu0 0.0
      %469 = vmatprep.subr.mxu0 0.0
      %470 = vmatpush1.xpose.msra.mxu0 0.0
      %471 = vmatprep.subr.mxu0 0.0
      %472 = vmatpush1.xpose.msra.mxu0 0.0
      %473 = vmatprep.subr.mxu0 0.0
      %474 = vmatpush1.xpose.msra.mxu0 0.0
      %475 = vmatprep.subr.mxu0 0.0
      %476 = vmatpush1.xpose.msra.mxu0 0.0
      %477 = vmatprep.subr.mxu0 0.0
      %478 = vmatpush1.xpose.msra.mxu0 0.0
      %479 = vmatprep.subr.mxu0 0.0
      %480 = vmatpush1.xpose.msra.mxu0 0.0
      %481 = vmatprep.subr.mxu0 0.0
      %482 = vmatpush1.xpose.msra.mxu0 0.0
      %483 = vmatprep.subr.mxu0 0.0
      %484 = vmatpush1.xpose.msra.mxu0 0.0
      %485 = vmatprep.subr.mxu0 0.0
      %486 = vmatpush1.xpose.msra.mxu0 0.0
      %487 = vmatprep.subr.mxu0 0.0
      %488 = vmatpush1.xpose.msra.mxu0 0.0
      %489 = vmatprep.subr.mxu0 0.0
      %490 = vmatpush1.xpose.msra.mxu0 0.0
      %491 = vmatprep.subr.mxu0 0.0
      %492 = vmatpush1.xpose.msra.mxu0 0.0
      %493 = vmatprep.mubr.f32.mxu0 0.0
      %494 = vmatmul.mubr.f32.gmra.mrb[0].mxu0 %v413
      %v495 = vpop.f32.mrb[0].mxu0
      %v496 = vadd.f32 0.0, %v495
      %v497 = vpop.f32.mrb[0].mxu0
      %498 = vmatprep.mubr.f32.mxu0 0.0
      %499 = vmatmul.mubr.f32.gmra.mrb[0].mxu0 %v415
      %v500 = vpop.f32.mrb[0].mxu0
      %v501 = vadd.f32 0.0, %v500
      %v502 = vpop.f32.mrb[0].mxu0
      %503 = vmatprep.mubr.f32.mxu0 0.0
      %504 = vmatmul.mubr.f32.gmra.mrb[0].mxu0 %v417
      %v505 = vpop.f32.mrb[0].mxu0
      %v506 = vadd.f32 0.0, %v505
      %v507 = vpop.f32.mrb[0].mxu0
      %508 = vmatprep.mubr.f32.mxu0 0.0
      %509 = vmatmul.mubr.f32.gmra.mrb[0].mxu0 %v419
      %v510 = vpop.f32.mrb[0].mxu0
      %v511 = vadd.f32 0.0, %v510
      %v512 = vpop.f32.mrb[0].mxu0
      %513 = vdwg.mxu0
      %v514 = vsel %vm229, %v496, -inf
      %515 = vmax.xlane.f32.xlu0 %v514
      %v516 = vpop.xlane.xlu0 %515
      %v517 = vsel %vm229, %v501, -inf
      %518 = vmax.xlane.f32.xlu0 %v517
      %v519 = vpop.xlane.xlu0 %518
      %v520 = vsel %vm229, %v506, -inf
      %521 = vmax.xlane.f32.xlu0 %v520
      %v522 = vpop.xlane.xlu0 %521
      %v523 = vsel %vm229, %v511, -inf
      %524 = vmax.xlane.f32.xlu0 %v523
      %v525 = vpop.xlane.xlu0 %524
      %v526 = vsub.f32 %v496, %v516
      %v527 = vsub.f32 %v501, %v519
      %v528 = vsub.f32 %v506, %v522
      %v529 = vsub.f32 %v511, %v525
      %v530 = vmul.f32 %v526, 1.442695
      %v531 = vpow.pop %v530
      %v532 = vmul.f32 %v527, 1.442695
      %v533 = vpow.pop %v532
      %v534 = vmul.f32 %v528, 1.442695
      %v535 = vpow.pop %v534
      %v536 = vmul.f32 %v529, 1.442695
      %v537 = vpow.pop %v536
      %v538 = vsel %vm229, %v531, 0.0
      %539 = vadd.xlane.f32.xlu0 %v538
      %v540 = vpop.xlane.xlu0 %539
      %v541 = vsel %vm229, %v533, 0.0
      %542 = vadd.xlane.f32.xlu0 %v541
      %v543 = vpop.xlane.xlu0 %542
      %v544 = vsel %vm229, %v535, 0.0
      %545 = vadd.xlane.f32.xlu0 %v544
      %v546 = vpop.xlane.xlu0 %545
      %v547 = vsel %vm229, %v537, 0.0
      %548 = vadd.xlane.f32.xlu0 %v547
      %v549 = vpop.xlane.xlu0 %548
      %v550 = vrcp.pop %v540
      %v551 = vrcp.pop %v543
      %v552 = vrcp.pop %v546
      %v553 = vrcp.pop %v549
      %v554 = vmul.f32 %v531, %v550
      %v555 = vmul.f32 %v533, %v551
      %v556 = vmul.f32 %v535, %v552
      %v557 = vmul.f32 %v537, %v553
      %558 = vrot.lane.b32.xlu0 %v396, 64
      %v559 = vpop.permute.xlu0 %558
      %560 = vrot.lane.b32.xlu0 %v397, 64
      %v561 = vpop.permute.xlu0 %560
      %562 = vrot.lane.b32.xlu0 %v398, 64
      %v563 = vpop.permute.xlu0 %562
      %564 = vrot.lane.b32.xlu0 %v399, 64
      %v565 = vpop.permute.xlu0 %564
      %v571 = vsel %vm229, %v554, 0
      %v574 = vsel %vm229, %v555, 0
      %v577 = vsel %vm229, %v556, 0
      %v580 = vsel %vm229, %v557, 0
      %582 = vmatprep.subr.mxu0 0.0
      %583 = vmatpush1.msra.mxu0 %v559
      %584 = vmatprep.subr.mxu0 0.0
      %585 = vmatpush1.msra.mxu0 %v561
      %586 = vmatprep.subr.mxu0 0.0
      %587 = vmatpush1.msra.mxu0 %v563
      %588 = vmatprep.subr.mxu0 0.0
      %589 = vmatpush1.msra.mxu0 %v565
      %590 = vmatprep.subr.mxu0 0.0
      %591 = vmatpush1.msra.mxu0 0.0
      %592 = vmatprep.subr.mxu0 0.0
      %593 = vmatpush1.msra.mxu0 0.0
      %594 = vmatprep.subr.mxu0 0.0
      %595 = vmatpush1.msra.mxu0 0.0
      %596 = vmatprep.subr.mxu0 0.0
      %597 = vmatpush1.msra.mxu0 0.0
      %598 = vmatprep.subr.mxu0 0.0
      %599 = vmatpush1.msra.mxu0 0.0
      %600 = vmatprep.subr.mxu0 0.0
      %601 = vmatpush1.msra.mxu0 0.0
      %602 = vmatprep.subr.mxu0 0.0
      %603 = vmatpush1.msra.mxu0 0.0
      %604 = vmatprep.subr.mxu0 0.0
      %605 = vmatpush1.msra.mxu0 0.0
      %606 = vmatprep.subr.mxu0 0.0
      %607 = vmatpush1.msra.mxu0 0.0
      %608 = vmatprep.subr.mxu0 0.0
      %609 = vmatpush1.msra.mxu0 0.0
      %610 = vmatprep.subr.mxu0 0.0
      %611 = vmatpush1.msra.mxu0 0.0
      %612 = vmatprep.subr.mxu0 0.0
      %613 = vmatpush1.msra.mxu0 0.0
      %614 = vmatprep.subr.mxu0 0.0
      %615 = vmatpush1.msra.mxu0 0.0
      %616 = vmatprep.subr.mxu0 0.0
      %617 = vmatpush1.msra.mxu0 0.0
      %618 = vmatprep.subr.mxu0 0.0
      %619 = vmatpush1.msra.mxu0 0.0
      %620 = vmatprep.subr.mxu0 0.0
      %621 = vmatpush1.msra.mxu0 0.0
      %622 = vmatprep.subr.mxu0 0.0
      %623 = vmatpush1.msra.mxu0 0.0
      %624 = vmatprep.subr.mxu0 0.0
      %625 = vmatpush1.msra.mxu0 0.0
      %626 = vmatprep.subr.mxu0 0.0
      %627 = vmatpush1.msra.mxu0 0.0
      %628 = vmatprep.subr.mxu0 0.0
      %629 = vmatpush1.msra.mxu0 0.0
      %630 = vmatprep.subr.mxu0 0.0
      %631 = vmatpush1.msra.mxu0 0.0
      %632 = vmatprep.subr.mxu0 0.0
      %633 = vmatpush1.msra.mxu0 0.0
      %634 = vmatprep.subr.mxu0 0.0
      %635 = vmatpush1.msra.mxu0 0.0
      %636 = vmatprep.subr.mxu0 0.0
      %637 = vmatpush1.msra.mxu0 0.0
      %638 = vmatprep.subr.mxu0 0.0
      %639 = vmatpush1.msra.mxu0 0.0
      %640 = vmatprep.subr.mxu0 0.0
      %641 = vmatpush1.msra.mxu0 0.0
      %642 = vmatprep.subr.mxu0 0.0
      %643 = vmatpush1.msra.mxu0 0.0
      %644 = vmatprep.subr.mxu0 0.0
      %645 = vmatpush1.msra.mxu0 0.0
      %646 = vmatprep.mubr.f32.mxu0 0.0
      %647 = vmatmul.mubr.f32.gmra.mrb[0].mxu0 %v571
      %v648 = vpop.f32.mrb[0].mxu0
      %v649 = vadd.f32 0.0, %v648
      %v650 = vpop.f32.mrb[0].mxu0
      %651 = vmatprep.mubr.f32.mxu0 0.0
      %652 = vmatmul.mubr.f32.gmra.mrb[0].mxu0 %v574
      %v653 = vpop.f32.mrb[0].mxu0
      %v654 = vadd.f32 0.0, %v653
      %v655 = vpop.f32.mrb[0].mxu0
      %656 = vmatprep.mubr.f32.mxu0 0.0
      %657 = vmatmul.mubr.f32.gmra.mrb[0].mxu0 %v577
      %v658 = vpop.f32.mrb[0].mxu0
      %v659 = vadd.f32 0.0, %v658
      %v660 = vpop.f32.mrb[0].mxu0
      %661 = vmatprep.mubr.f32.mxu0 0.0
      %662 = vmatmul.mubr.f32.gmra.mrb[0].mxu0 %v580
      %v663 = vpop.f32.mrb[0].mxu0
      %v664 = vadd.f32 0.0, %v663
      %v665 = vpop.f32.mrb[0].mxu0
      %666 = vdwg.mxu0
      %v667 = vld [vmem:[%s3] sm:$0xff]
      %668 = vrot.lane.b32.xlu0 %v396, 120
      %v669 = vpop.permute.xlu0 %668
      %670 = vrot.lane.b32.xlu0 %v397, 120
      %v671 = vpop.permute.xlu0 %670
      %672 = vrot.lane.b32.xlu0 %v398, 120
      %v673 = vpop.permute.xlu0 %672
      %674 = vrot.lane.b32.xlu0 %v399, 120
      %v675 = vpop.permute.xlu0 %674
      %676 = vrot.lane.b32.xlu0 %v396, 88
      %v677 = vpop.permute.xlu0 %676
      %678 = vrot.lane.b32.xlu0 %v397, 88
      %v679 = vpop.permute.xlu0 %678
      %680 = vrot.lane.b32.xlu0 %v398, 88
      %v681 = vpop.permute.xlu0 %680
      %682 = vrot.lane.b32.xlu0 %v399, 88
      %v683 = vpop.permute.xlu0 %682
      %v684 = vsel %vm412, %v669, 0
      %v686 = vsel %vm412, %v671, 0
      %v688 = vsel %vm412, %v673, 0
      %v690 = vsel %vm412, %v675, 0
      %v692 = vsel %vm412, %v677, 0
      %v694 = vsel %vm412, %v679, 0
      %v696 = vsel %vm412, %v681, 0
      %v698 = vsel %vm412, %v683, 0
      %700 = vmatprep.subr.mxu0 0.0
      %701 = vmatpush1.xpose.msra.mxu0 %v692
      %702 = vmatprep.subr.mxu0 0.0
      %703 = vmatpush1.xpose.msra.mxu0 %v694
      %704 = vmatprep.subr.mxu0 0.0
      %705 = vmatpush1.xpose.msra.mxu0 %v696
      %706 = vmatprep.subr.mxu0 0.0
      %707 = vmatpush1.xpose.msra.mxu0 %v698
      %708 = vmatprep.subr.mxu0 0.0
      %709 = vmatpush1.xpose.msra.mxu0 0.0
      %710 = vmatprep.subr.mxu0 0.0
      %711 = vmatpush1.xpose.msra.mxu0 0.0
      %712 = vmatprep.subr.mxu0 0.0
      %713 = vmatpush1.xpose.msra.mxu0 0.0
      %714 = vmatprep.subr.mxu0 0.0
      %715 = vmatpush1.xpose.msra.mxu0 0.0
      %716 = vmatprep.subr.mxu0 0.0
      %717 = vmatpush1.xpose.msra.mxu0 0.0
      %718 = vmatprep.subr.mxu0 0.0
      %719 = vmatpush1.xpose.msra.mxu0 0.0
      %720 = vmatprep.subr.mxu0 0.0
      %721 = vmatpush1.xpose.msra.mxu0 0.0
      %722 = vmatprep.subr.mxu0 0.0
      %723 = vmatpush1.xpose.msra.mxu0 0.0
      %724 = vmatprep.subr.mxu0 0.0
      %725 = vmatpush1.xpose.msra.mxu0 0.0
      %726 = vmatprep.subr.mxu0 0.0
      %727 = vmatpush1.xpose.msra.mxu0 0.0
      %728 = vmatprep.subr.mxu0 0.0
      %729 = vmatpush1.xpose.msra.mxu0 0.0
      %730 = vmatprep.subr.mxu0 0.0
      %731 = vmatpush1.xpose.msra.mxu0 0.0
      %732 = vmatprep.subr.mxu0 0.0
      %733 = vmatpush1.xpose.msra.mxu0 0.0
      %734 = vmatprep.subr.mxu0 0.0
      %735 = vmatpush1.xpose.msra.mxu0 0.0
      %736 = vmatprep.subr.mxu0 0.0
      %737 = vmatpush1.xpose.msra.mxu0 0.0
      %738 = vmatprep.subr.mxu0 0.0
      %739 = vmatpush1.xpose.msra.mxu0 0.0
      %740 = vmatprep.subr.mxu0 0.0
      %741 = vmatpush1.xpose.msra.mxu0 0.0
      %742 = vmatprep.subr.mxu0 0.0
      %743 = vmatpush1.xpose.msra.mxu0 0.0
      %744 = vmatprep.subr.mxu0 0.0
      %745 = vmatpush1.xpose.msra.mxu0 0.0
      %746 = vmatprep.subr.mxu0 0.0
      %747 = vmatpush1.xpose.msra.mxu0 0.0
      %748 = vmatprep.subr.mxu0 0.0
      %749 = vmatpush1.xpose.msra.mxu0 0.0
      %750 = vmatprep.subr.mxu0 0.0
      %751 = vmatpush1.xpose.msra.mxu0 0.0
      %752 = vmatprep.subr.mxu0 0.0
      %753 = vmatpush1.xpose.msra.mxu0 0.0
      %754 = vmatprep.subr.mxu0 0.0
      %755 = vmatpush1.xpose.msra.mxu0 0.0
      %756 = vmatprep.subr.mxu0 0.0
      %757 = vmatpush1.xpose.msra.mxu0 0.0
      %758 = vmatprep.subr.mxu0 0.0
      %759 = vmatpush1.xpose.msra.mxu0 0.0
      %760 = vmatprep.subr.mxu0 0.0
      %761 = vmatpush1.xpose.msra.mxu0 0.0
      %762 = vmatprep.subr.mxu0 0.0
      %763 = vmatpush1.xpose.msra.mxu0 0.0
      %764 = vmatprep.mubr.f32.mxu0 0.0
      %765 = vmatmul.mubr.f32.gmra.mrb[0].mxu0 %v684
      %v766 = vpop.f32.mrb[0].mxu0
      %v767 = vadd.f32 0.0, %v766
      %v768 = vpop.f32.mrb[0].mxu0
      %769 = vmatprep.mubr.f32.mxu0 0.0
      %770 = vmatmul.mubr.f32.gmra.mrb[0].mxu0 %v686
      %v771 = vpop.f32.mrb[0].mxu0
      %v772 = vadd.f32 0.0, %v771
      %v773 = vpop.f32.mrb[0].mxu0
      %774 = vmatprep.mubr.f32.mxu0 0.0
      %775 = vmatmul.mubr.f32.gmra.mrb[0].mxu0 %v688
      %v776 = vpop.f32.mrb[0].mxu0
      %v777 = vadd.f32 0.0, %v776
      %v778 = vpop.f32.mrb[0].mxu0
      %779 = vmatprep.mubr.f32.mxu0 0.0
      %780 = vmatmul.mubr.f32.gmra.mrb[0].mxu0 %v690
      %v781 = vpop.f32.mrb[0].mxu0
      %v782 = vadd.f32 0.0, %v781
      %v783 = vpop.f32.mrb[0].mxu0
      %784 = vdwg.mxu0
      %v785 = vsel %vm229, %v767, -inf
      %786 = vmax.xlane.f32.xlu0 %v785
      %v787 = vpop.xlane.xlu0 %786
      %v788 = vsel %vm229, %v772, -inf
      %789 = vmax.xlane.f32.xlu0 %v788
      %v790 = vpop.xlane.xlu0 %789
      %v791 = vsel %vm229, %v777, -inf
      %792 = vmax.xlane.f32.xlu0 %v791
      %v793 = vpop.xlane.xlu0 %792
      %v794 = vsel %vm229, %v782, -inf
      %795 = vmax.xlane.f32.xlu0 %v794
      %v796 = vpop.xlane.xlu0 %795
      %v797 = vsub.f32 %v767, %v787
      %v798 = vsub.f32 %v772, %v790
      %v799 = vsub.f32 %v777, %v793
      %v800 = vsub.f32 %v782, %v796
      %v801 = vmul.f32 %v797, 1.442695
      %v802 = vpow.pop %v801
      %v803 = vmul.f32 %v798, 1.442695
      %v804 = vpow.pop %v803
      %v805 = vmul.f32 %v799, 1.442695
      %v806 = vpow.pop %v805
      %v807 = vmul.f32 %v800, 1.442695
      %v808 = vpow.pop %v807
      %v809 = vsel %vm229, %v802, 0.0
      %810 = vadd.xlane.f32.xlu0 %v809
      %v811 = vpop.xlane.xlu0 %810
      %v812 = vsel %vm229, %v804, 0.0
      %813 = vadd.xlane.f32.xlu0 %v812
      %v814 = vpop.xlane.xlu0 %813
      %v815 = vsel %vm229, %v806, 0.0
      %816 = vadd.xlane.f32.xlu0 %v815
      %v817 = vpop.xlane.xlu0 %816
      %v818 = vsel %vm229, %v808, 0.0
      %819 = vadd.xlane.f32.xlu0 %v818
      %v820 = vpop.xlane.xlu0 %819
      %v821 = vrcp.pop %v811
      %v822 = vrcp.pop %v814
      %v823 = vrcp.pop %v817
      %v824 = vrcp.pop %v820
      %v825 = vmul.f32 %v802, %v821
      %v826 = vmul.f32 %v804, %v822
      %v827 = vmul.f32 %v806, %v823
      %v828 = vmul.f32 %v808, %v824
      %829 = vrot.lane.b32.xlu0 %v396, 56
      %v830 = vpop.permute.xlu0 %829
      %831 = vrot.lane.b32.xlu0 %v397, 56
      %v832 = vpop.permute.xlu0 %831
      %833 = vrot.lane.b32.xlu0 %v398, 56
      %v834 = vpop.permute.xlu0 %833
      %835 = vrot.lane.b32.xlu0 %v399, 56
      %v836 = vpop.permute.xlu0 %835
      %v842 = vsel %vm229, %v825, 0
      %v845 = vsel %vm229, %v826, 0
      %v848 = vsel %vm229, %v827, 0
      %v851 = vsel %vm229, %v828, 0
      %853 = vmatprep.subr.mxu0 0.0
      %854 = vmatpush1.msra.mxu0 %v830
      %855 = vmatprep.subr.mxu0 0.0
      %856 = vmatpush1.msra.mxu0 %v832
      %857 = vmatprep.subr.mxu0 0.0
      %858 = vmatpush1.msra.mxu0 %v834
      %859 = vmatprep.subr.mxu0 0.0
      %860 = vmatpush1.msra.mxu0 %v836
      %861 = vmatprep.subr.mxu0 0.0
      %862 = vmatpush1.msra.mxu0 0.0
      %863 = vmatprep.subr.mxu0 0.0
      %864 = vmatpush1.msra.mxu0 0.0
      %865 = vmatprep.subr.mxu0 0.0
      %866 = vmatpush1.msra.mxu0 0.0
      %867 = vmatprep.subr.mxu0 0.0
      %868 = vmatpush1.msra.mxu0 0.0
      %869 = vmatprep.subr.mxu0 0.0
      %870 = vmatpush1.msra.mxu0 0.0
      %871 = vmatprep.subr.mxu0 0.0
      %872 = vmatpush1.msra.mxu0 0.0
      %873 = vmatprep.subr.mxu0 0.0
      %874 = vmatpush1.msra.mxu0 0.0
      %875 = vmatprep.subr.mxu0 0.0
      %876 = vmatpush1.msra.mxu0 0.0
      %877 = vmatprep.subr.mxu0 0.0
      %878 = vmatpush1.msra.mxu0 0.0
      %879 = vmatprep.subr.mxu0 0.0
      %880 = vmatpush1.msra.mxu0 0.0
      %881 = vmatprep.subr.mxu0 0.0
      %882 = vmatpush1.msra.mxu0 0.0
      %883 = vmatprep.subr.mxu0 0.0
      %884 = vmatpush1.msra.mxu0 0.0
      %885 = vmatprep.subr.mxu0 0.0
      %886 = vmatpush1.msra.mxu0 0.0
      %887 = vmatprep.subr.mxu0 0.0
      %888 = vmatpush1.msra.mxu0 0.0
      %889 = vmatprep.subr.mxu0 0.0
      %890 = vmatpush1.msra.mxu0 0.0
      %891 = vmatprep.subr.mxu0 0.0
      %892 = vmatpush1.msra.mxu0 0.0
      %893 = vmatprep.subr.mxu0 0.0
      %894 = vmatpush1.msra.mxu0 0.0
      %895 = vmatprep.subr.mxu0 0.0
      %896 = vmatpush1.msra.mxu0 0.0
      %897 = vmatprep.subr.mxu0 0.0
      %898 = vmatpush1.msra.mxu0 0.0
      %899 = vmatprep.subr.mxu0 0.0
      %900 = vmatpush1.msra.mxu0 0.0
      %901 = vmatprep.subr.mxu0 0.0
      %902 = vmatpush1.msra.mxu0 0.0
      %903 = vmatprep.subr.mxu0 0.0
      %904 = vmatpush1.msra.mxu0 0.0
      %905 = vmatprep.subr.mxu0 0.0
      %906 = vmatpush1.msra.mxu0 0.0
      %907 = vmatprep.subr.mxu0 0.0
      %908 = vmatpush1.msra.mxu0 0.0
      %909 = vmatprep.subr.mxu0 0.0
      %910 = vmatpush1.msra.mxu0 0.0
      %911 = vmatprep.subr.mxu0 0.0
      %912 = vmatpush1.msra.mxu0 0.0
      %913 = vmatprep.subr.mxu0 0.0
      %914 = vmatpush1.msra.mxu0 0.0
      %915 = vmatprep.subr.mxu0 0.0
      %916 = vmatpush1.msra.mxu0 0.0
      %917 = vmatprep.mubr.f32.mxu0 0.0
      %918 = vmatmul.mubr.f32.gmra.mrb[0].mxu0 %v842
      %v919 = vpop.f32.mrb[0].mxu0
      %v920 = vadd.f32 0.0, %v919
      %v921 = vpop.f32.mrb[0].mxu0
      %922 = vmatprep.mubr.f32.mxu0 0.0
      %923 = vmatmul.mubr.f32.gmra.mrb[0].mxu0 %v845
      %v924 = vpop.f32.mrb[0].mxu0
      %v925 = vadd.f32 0.0, %v924
      %v926 = vpop.f32.mrb[0].mxu0
      %927 = vmatprep.mubr.f32.mxu0 0.0
      %928 = vmatmul.mubr.f32.gmra.mrb[0].mxu0 %v848
      %v929 = vpop.f32.mrb[0].mxu0
      %v930 = vadd.f32 0.0, %v929
      %v931 = vpop.f32.mrb[0].mxu0
      %932 = vmatprep.mubr.f32.mxu0 0.0
      %933 = vmatmul.mubr.f32.gmra.mrb[0].mxu0 %v851
      %v934 = vpop.f32.mrb[0].mxu0
      %v935 = vadd.f32 0.0, %v934
      %v936 = vpop.f32.mrb[0].mxu0
      %937 = vdwg.mxu0
      %s938 = scalar_lea.vmem %s3, 8
      %v939 = vld [vmem:[%s938] sm:$0xff]
      %v941 = vsel %vm412, %v920, 0
      %v944 = vsel %vm412, %v925, 0
      %v947 = vsel %vm412, %v930, 0
      %v950 = vsel %vm412, %v935, 0
      %952 = vmatprep.subr.mxu0 0.0
      %953 = vmatpush1.msra.mxu0 %v939
      %954 = vmatprep.subr.mxu0 0.0
      %955 = vmatpush1.msra.mxu0 0.0
      %956 = vmatprep.subr.mxu0 0.0
      %957 = vmatpush1.msra.mxu0 0.0
      %958 = vmatprep.subr.mxu0 0.0
      %959 = vmatpush1.msra.mxu0 0.0
      %960 = vmatprep.subr.mxu0 0.0
      %961 = vmatpush1.msra.mxu0 0.0
      %962 = vmatprep.subr.mxu0 0.0
      %963 = vmatpush1.msra.mxu0 0.0
      %964 = vmatprep.subr.mxu0 0.0
      %965 = vmatpush1.msra.mxu0 0.0
      %966 = vmatprep.subr.mxu0 0.0
      %967 = vmatpush1.msra.mxu0 0.0
      %968 = vmatprep.subr.mxu0 0.0
      %969 = vmatpush1.msra.mxu0 0.0
      %970 = vmatprep.subr.mxu0 0.0
      %971 = vmatpush1.msra.mxu0 0.0
      %972 = vmatprep.subr.mxu0 0.0
      %973 = vmatpush1.msra.mxu0 0.0
      %974 = vmatprep.subr.mxu0 0.0
      %975 = vmatpush1.msra.mxu0 0.0
      %976 = vmatprep.subr.mxu0 0.0
      %977 = vmatpush1.msra.mxu0 0.0
      %978 = vmatprep.subr.mxu0 0.0
      %979 = vmatpush1.msra.mxu0 0.0
      %980 = vmatprep.subr.mxu0 0.0
      %981 = vmatpush1.msra.mxu0 0.0
      %982 = vmatprep.subr.mxu0 0.0
      %983 = vmatpush1.msra.mxu0 0.0
      %984 = vmatprep.subr.mxu0 0.0
      %985 = vmatpush1.msra.mxu0 0.0
      %986 = vmatprep.subr.mxu0 0.0
      %987 = vmatpush1.msra.mxu0 0.0
      %988 = vmatprep.subr.mxu0 0.0
      %989 = vmatpush1.msra.mxu0 0.0
      %990 = vmatprep.subr.mxu0 0.0
      %991 = vmatpush1.msra.mxu0 0.0
      %992 = vmatprep.subr.mxu0 0.0
      %993 = vmatpush1.msra.mxu0 0.0
      %994 = vmatprep.subr.mxu0 0.0
      %995 = vmatpush1.msra.mxu0 0.0
      %996 = vmatprep.subr.mxu0 0.0
      %997 = vmatpush1.msra.mxu0 0.0
      %998 = vmatprep.subr.mxu0 0.0
      %999 = vmatpush1.msra.mxu0 0.0
      %1000 = vmatprep.subr.mxu0 0.0
      %1001 = vmatpush1.msra.mxu0 0.0
      %1002 = vmatprep.subr.mxu0 0.0
      %1003 = vmatpush1.msra.mxu0 0.0
      %1004 = vmatprep.subr.mxu0 0.0
      %1005 = vmatpush1.msra.mxu0 0.0
      %1006 = vmatprep.subr.mxu0 0.0
      %1007 = vmatpush1.msra.mxu0 0.0
      %1008 = vmatprep.subr.mxu0 0.0
      %1009 = vmatpush1.msra.mxu0 0.0
      %1010 = vmatprep.subr.mxu0 0.0
      %1011 = vmatpush1.msra.mxu0 0.0
      %1012 = vmatprep.subr.mxu0 0.0
      %1013 = vmatpush1.msra.mxu0 0.0
      %1014 = vmatprep.subr.mxu0 0.0
      %1015 = vmatpush1.msra.mxu0 0.0
      %1016 = vmatprep.mubr.f32.mxu0 0.0
      %1017 = vmatmul.mubr.f32.gmra.mrb[0].mxu0 %v941
      %v1018 = vpop.f32.mrb[0].mxu0
      %v1019 = vadd.f32 0.0, %v1018
      %v1020 = vpop.f32.mrb[0].mxu0
      %1021 = vmatprep.mubr.f32.mxu0 0.0
      %1022 = vmatmul.mubr.f32.gmra.mrb[0].mxu0 %v944
      %v1023 = vpop.f32.mrb[0].mxu0
      %v1024 = vadd.f32 0.0, %v1023
      %v1025 = vpop.f32.mrb[0].mxu0
      %1026 = vmatprep.mubr.f32.mxu0 0.0
      %1027 = vmatmul.mubr.f32.gmra.mrb[0].mxu0 %v947
      %v1028 = vpop.f32.mrb[0].mxu0
      %v1029 = vadd.f32 0.0, %v1028
      %v1030 = vpop.f32.mrb[0].mxu0
      %1031 = vmatprep.mubr.f32.mxu0 0.0
      %1032 = vmatmul.mubr.f32.gmra.mrb[0].mxu0 %v950
      %v1033 = vpop.f32.mrb[0].mxu0
      %v1034 = vadd.f32 0.0, %v1033
      %v1035 = vpop.f32.mrb[0].mxu0
      %1036 = vdwg.mxu0
      %v1038 = vsel %vm412, %v649, 0
      %v1041 = vsel %vm412, %v654, 0
      %v1044 = vsel %vm412, %v659, 0
      %v1047 = vsel %vm412, %v664, 0
      %1049 = vmatprep.subr.mxu0 0.0
      %1050 = vmatpush1.msra.mxu0 %v667
      %1051 = vmatprep.subr.mxu0 0.0
      %1052 = vmatpush1.msra.mxu0 0.0
      %1053 = vmatprep.subr.mxu0 0.0
      %1054 = vmatpush1.msra.mxu0 0.0
      %1055 = vmatprep.subr.mxu0 0.0
      %1056 = vmatpush1.msra.mxu0 0.0
      %1057 = vmatprep.subr.mxu0 0.0
      %1058 = vmatpush1.msra.mxu0 0.0
      %1059 = vmatprep.subr.mxu0 0.0
      %1060 = vmatpush1.msra.mxu0 0.0
      %1061 = vmatprep.subr.mxu0 0.0
      %1062 = vmatpush1.msra.mxu0 0.0
      %1063 = vmatprep.subr.mxu0 0.0
      %1064 = vmatpush1.msra.mxu0 0.0
      %1065 = vmatprep.subr.mxu0 0.0
      %1066 = vmatpush1.msra.mxu0 0.0
      %1067 = vmatprep.subr.mxu0 0.0
      %1068 = vmatpush1.msra.mxu0 0.0
      %1069 = vmatprep.subr.mxu0 0.0
      %1070 = vmatpush1.msra.mxu0 0.0
      %1071 = vmatprep.subr.mxu0 0.0
      %1072 = vmatpush1.msra.mxu0 0.0
      %1073 = vmatprep.subr.mxu0 0.0
      %1074 = vmatpush1.msra.mxu0 0.0
      %1075 = vmatprep.subr.mxu0 0.0
      %1076 = vmatpush1.msra.mxu0 0.0
      %1077 = vmatprep.subr.mxu0 0.0
      %1078 = vmatpush1.msra.mxu0 0.0
      %1079 = vmatprep.subr.mxu0 0.0
      %1080 = vmatpush1.msra.mxu0 0.0
      %1081 = vmatprep.subr.mxu0 0.0
      %1082 = vmatpush1.msra.mxu0 0.0
      %1083 = vmatprep.subr.mxu0 0.0
      %1084 = vmatpush1.msra.mxu0 0.0
      %1085 = vmatprep.subr.mxu0 0.0
      %1086 = vmatpush1.msra.mxu0 0.0
      %1087 = vmatprep.subr.mxu0 0.0
      %1088 = vmatpush1.msra.mxu0 0.0
      %1089 = vmatprep.subr.mxu0 0.0
      %1090 = vmatpush1.msra.mxu0 0.0
      %1091 = vmatprep.subr.mxu0 0.0
      %1092 = vmatpush1.msra.mxu0 0.0
      %1093 = vmatprep.subr.mxu0 0.0
      %1094 = vmatpush1.msra.mxu0 0.0
      %1095 = vmatprep.subr.mxu0 0.0
      %1096 = vmatpush1.msra.mxu0 0.0
      %1097 = vmatprep.subr.mxu0 0.0
      %1098 = vmatpush1.msra.mxu0 0.0
      %1099 = vmatprep.subr.mxu0 0.0
      %1100 = vmatpush1.msra.mxu0 0.0
      %1101 = vmatprep.subr.mxu0 0.0
      %1102 = vmatpush1.msra.mxu0 0.0
      %1103 = vmatprep.subr.mxu0 0.0
      %1104 = vmatpush1.msra.mxu0 0.0
      %1105 = vmatprep.subr.mxu0 0.0
      %1106 = vmatpush1.msra.mxu0 0.0
      %1107 = vmatprep.subr.mxu0 0.0
      %1108 = vmatpush1.msra.mxu0 0.0
      %1109 = vmatprep.subr.mxu0 0.0
      %1110 = vmatpush1.msra.mxu0 0.0
      %1111 = vmatprep.subr.mxu0 0.0
      %1112 = vmatpush1.msra.mxu0 0.0
      %1113 = vmatprep.mubr.f32.mxu0 0.0
      %1114 = vmatmul.mubr.f32.gmra.mrb[0].mxu0 %v1038
      %v1115 = vpop.f32.mrb[0].mxu0
      %v1116 = vadd.f32 %v1019, %v1115
      %v1117 = vpop.f32.mrb[0].mxu0
      %1118 = vmatprep.mubr.f32.mxu0 0.0
      %1119 = vmatmul.mubr.f32.gmra.mrb[0].mxu0 %v1041
      %v1120 = vpop.f32.mrb[0].mxu0
      %v1121 = vadd.f32 %v1024, %v1120
      %v1122 = vpop.f32.mrb[0].mxu0
      %1123 = vmatprep.mubr.f32.mxu0 0.0
      %1124 = vmatmul.mubr.f32.gmra.mrb[0].mxu0 %v1044
      %v1125 = vpop.f32.mrb[0].mxu0
      %v1126 = vadd.f32 %v1029, %v1125
      %v1127 = vpop.f32.mrb[0].mxu0
      %1128 = vmatprep.mubr.f32.mxu0 0.0
      %1129 = vmatmul.mubr.f32.gmra.mrb[0].mxu0 %v1047
      %v1130 = vpop.f32.mrb[0].mxu0
      %v1131 = vadd.f32 %v1034, %v1130
      %v1132 = vpop.f32.mrb[0].mxu0
      %1133 = vdwg.mxu0
      %1134 = vrot.lane.b32.xlu0 %v396, 112
      %v1135 = vpop.permute.xlu0 %1134
      %1136 = vrot.lane.b32.xlu0 %v397, 112
      %v1137 = vpop.permute.xlu0 %1136
      %1138 = vrot.lane.b32.xlu0 %v398, 112
      %v1139 = vpop.permute.xlu0 %1138
      %1140 = vrot.lane.b32.xlu0 %v399, 112
      %v1141 = vpop.permute.xlu0 %1140
      %1142 = vrot.lane.b32.xlu0 %v396, 80
      %v1143 = vpop.permute.xlu0 %1142
      %1144 = vrot.lane.b32.xlu0 %v397, 80
      %v1145 = vpop.permute.xlu0 %1144
      %1146 = vrot.lane.b32.xlu0 %v398, 80
      %v1147 = vpop.permute.xlu0 %1146
      %1148 = vrot.lane.b32.xlu0 %v399, 80
      %v1149 = vpop.permute.xlu0 %1148
      %v1150 = vsel %vm412, %v1135, 0
      %v1152 = vsel %vm412, %v1137, 0
      %v1154 = vsel %vm412, %v1139, 0
      %v1156 = vsel %vm412, %v1141, 0
      %v1158 = vsel %vm412, %v1143, 0
      %v1160 = vsel %vm412, %v1145, 0
      %v1162 = vsel %vm412, %v1147, 0
      %v1164 = vsel %vm412, %v1149, 0
      %1166 = vmatprep.subr.mxu0 0.0
      %1167 = vmatpush1.xpose.msra.mxu0 %v1158
      %1168 = vmatprep.subr.mxu0 0.0
      %1169 = vmatpush1.xpose.msra.mxu0 %v1160
      %1170 = vmatprep.subr.mxu0 0.0
      %1171 = vmatpush1.xpose.msra.mxu0 %v1162
      %1172 = vmatprep.subr.mxu0 0.0
      %1173 = vmatpush1.xpose.msra.mxu0 %v1164
      %1174 = vmatprep.subr.mxu0 0.0
      %1175 = vmatpush1.xpose.msra.mxu0 0.0
      %1176 = vmatprep.subr.mxu0 0.0
      %1177 = vmatpush1.xpose.msra.mxu0 0.0
      %1178 = vmatprep.subr.mxu0 0.0
      %1179 = vmatpush1.xpose.msra.mxu0 0.0
      %1180 = vmatprep.subr.mxu0 0.0
      %1181 = vmatpush1.xpose.msra.mxu0 0.0
      %1182 = vmatprep.subr.mxu0 0.0
      %1183 = vmatpush1.xpose.msra.mxu0 0.0
      %1184 = vmatprep.subr.mxu0 0.0
      %1185 = vmatpush1.xpose.msra.mxu0 0.0
      %1186 = vmatprep.subr.mxu0 0.0
      %1187 = vmatpush1.xpose.msra.mxu0 0.0
      %1188 = vmatprep.subr.mxu0 0.0
      %1189 = vmatpush1.xpose.msra.mxu0 0.0
      %1190 = vmatprep.subr.mxu0 0.0
      %1191 = vmatpush1.xpose.msra.mxu0 0.0
      %1192 = vmatprep.subr.mxu0 0.0
      %1193 = vmatpush1.xpose.msra.mxu0 0.0
      %1194 = vmatprep.subr.mxu0 0.0
      %1195 = vmatpush1.xpose.msra.mxu0 0.0
      %1196 = vmatprep.subr.mxu0 0.0
      %1197 = vmatpush1.xpose.msra.mxu0 0.0
      %1198 = vmatprep.subr.mxu0 0.0
      %1199 = vmatpush1.xpose.msra.mxu0 0.0
      %1200 = vmatprep.subr.mxu0 0.0
      %1201 = vmatpush1.xpose.msra.mxu0 0.0
      %1202 = vmatprep.subr.mxu0 0.0
      %1203 = vmatpush1.xpose.msra.mxu0 0.0
      %1204 = vmatprep.subr.mxu0 0.0
      %1205 = vmatpush1.xpose.msra.mxu0 0.0
      %1206 = vmatprep.subr.mxu0 0.0
      %1207 = vmatpush1.xpose.msra.mxu0 0.0
      %1208 = vmatprep.subr.mxu0 0.0
      %1209 = vmatpush1.xpose.msra.mxu0 0.0
      %1210 = vmatprep.subr.mxu0 0.0
      %1211 = vmatpush1.xpose.msra.mxu0 0.0
      %1212 = vmatprep.subr.mxu0 0.0
      %1213 = vmatpush1.xpose.msra.mxu0 0.0
      %1214 = vmatprep.subr.mxu0 0.0
      %1215 = vmatpush1.xpose.msra.mxu0 0.0
      %1216 = vmatprep.subr.mxu0 0.0
      %1217 = vmatpush1.xpose.msra.mxu0 0.0
      %1218 = vmatprep.subr.mxu0 0.0
      %1219 = vmatpush1.xpose.msra.mxu0 0.0
      %1220 = vmatprep.subr.mxu0 0.0
      %1221 = vmatpush1.xpose.msra.mxu0 0.0
      %1222 = vmatprep.subr.mxu0 0.0
      %1223 = vmatpush1.xpose.msra.mxu0 0.0
      %1224 = vmatprep.subr.mxu0 0.0
      %1225 = vmatpush1.xpose.msra.mxu0 0.0
      %1226 = vmatprep.subr.mxu0 0.0
      %1227 = vmatpush1.xpose.msra.mxu0 0.0
      %1228 = vmatprep.subr.mxu0 0.0
      %1229 = vmatpush1.xpose.msra.mxu0 0.0
      %1230 = vmatprep.mubr.f32.mxu0 0.0
      %1231 = vmatmul.mubr.f32.gmra.mrb[0].mxu0 %v1150
      %v1232 = vpop.f32.mrb[0].mxu0
      %v1233 = vadd.f32 0.0, %v1232
      %v1234 = vpop.f32.mrb[0].mxu0
      %1235 = vmatprep.mubr.f32.mxu0 0.0
      %1236 = vmatmul.mubr.f32.gmra.mrb[0].mxu0 %v1152
      %v1237 = vpop.f32.mrb[0].mxu0
      %v1238 = vadd.f32 0.0, %v1237
      %v1239 = vpop.f32.mrb[0].mxu0
      %1240 = vmatprep.mubr.f32.mxu0 0.0
      %1241 = vmatmul.mubr.f32.gmra.mrb[0].mxu0 %v1154
      %v1242 = vpop.f32.mrb[0].mxu0
      %v1243 = vadd.f32 0.0, %v1242
      %v1244 = vpop.f32.mrb[0].mxu0
      %1245 = vmatprep.mubr.f32.mxu0 0.0
      %1246 = vmatmul.mubr.f32.gmra.mrb[0].mxu0 %v1156
      %v1247 = vpop.f32.mrb[0].mxu0
      %v1248 = vadd.f32 0.0, %v1247
      %v1249 = vpop.f32.mrb[0].mxu0
      %1250 = vdwg.mxu0
      %v1251 = vsel %vm229, %v1233, -inf
      %1252 = vmax.xlane.f32.xlu0 %v1251
      %v1253 = vpop.xlane.xlu0 %1252
      %v1254 = vsel %vm229, %v1238, -inf
      %1255 = vmax.xlane.f32.xlu0 %v1254
      %v1256 = vpop.xlane.xlu0 %1255
      %v1257 = vsel %vm229, %v1243, -inf
      %1258 = vmax.xlane.f32.xlu0 %v1257
      %v1259 = vpop.xlane.xlu0 %1258
      %v1260 = vsel %vm229, %v1248, -inf
      %1261 = vmax.xlane.f32.xlu0 %v1260
      %v1262 = vpop.xlane.xlu0 %1261
      %v1263 = vsub.f32 %v1233, %v1253
      %v1264 = vsub.f32 %v1238, %v1256
      %v1265 = vsub.f32 %v1243, %v1259
      %v1266 = vsub.f32 %v1248, %v1262
      %v1267 = vmul.f32 %v1263, 1.442695
      %v1268 = vpow.pop %v1267
      %v1269 = vmul.f32 %v1264, 1.442695
      %v1270 = vpow.pop %v1269
      %v1271 = vmul.f32 %v1265, 1.442695
      %v1272 = vpow.pop %v1271
      %v1273 = vmul.f32 %v1266, 1.442695
      %v1274 = vpow.pop %v1273
      %v1275 = vsel %vm229, %v1268, 0.0
      %1276 = vadd.xlane.f32.xlu0 %v1275
      %v1277 = vpop.xlane.xlu0 %1276
      %v1278 = vsel %vm229, %v1270, 0.0
      %1279 = vadd.xlane.f32.xlu0 %v1278
      %v1280 = vpop.xlane.xlu0 %1279
      %v1281 = vsel %vm229, %v1272, 0.0
      %1282 = vadd.xlane.f32.xlu0 %v1281
      %v1283 = vpop.xlane.xlu0 %1282
      %v1284 = vsel %vm229, %v1274, 0.0
      %1285 = vadd.xlane.f32.xlu0 %v1284
      %v1286 = vpop.xlane.xlu0 %1285
      %v1287 = vrcp.pop %v1277
      %v1288 = vrcp.pop %v1280
      %v1289 = vrcp.pop %v1283
      %v1290 = vrcp.pop %v1286
      %v1291 = vmul.f32 %v1268, %v1287
      %v1292 = vmul.f32 %v1270, %v1288
      %v1293 = vmul.f32 %v1272, %v1289
      %v1294 = vmul.f32 %v1274, %v1290
      %1295 = vrot.lane.b32.xlu0 %v396, 48
      %v1296 = vpop.permute.xlu0 %1295
      %1297 = vrot.lane.b32.xlu0 %v397, 48
      %v1298 = vpop.permute.xlu0 %1297
      %1299 = vrot.lane.b32.xlu0 %v398, 48
      %v1300 = vpop.permute.xlu0 %1299
      %1301 = vrot.lane.b32.xlu0 %v399, 48
      %v1302 = vpop.permute.xlu0 %1301
      %v1308 = vsel %vm229, %v1291, 0
      %v1311 = vsel %vm229, %v1292, 0
      %v1314 = vsel %vm229, %v1293, 0
      %v1317 = vsel %vm229, %v1294, 0
      %1319 = vmatprep.subr.mxu0 0.0
      %1320 = vmatpush1.msra.mxu0 %v1296
      %1321 = vmatprep.subr.mxu0 0.0
      %1322 = vmatpush1.msra.mxu0 %v1298
      %1323 = vmatprep.subr.mxu0 0.0
      %1324 = vmatpush1.msra.mxu0 %v1300
      %1325 = vmatprep.subr.mxu0 0.0
      %1326 = vmatpush1.msra.mxu0 %v1302
      %1327 = vmatprep.subr.mxu0 0.0
      %1328 = vmatpush1.msra.mxu0 0.0
      %1329 = vmatprep.subr.mxu0 0.0
      %1330 = vmatpush1.msra.mxu0 0.0
      %1331 = vmatprep.subr.mxu0 0.0
      %1332 = vmatpush1.msra.mxu0 0.0
      %1333 = vmatprep.subr.mxu0 0.0
      %1334 = vmatpush1.msra.mxu0 0.0
      %1335 = vmatprep.subr.mxu0 0.0
      %1336 = vmatpush1.msra.mxu0 0.0
      %1337 = vmatprep.subr.mxu0 0.0
      %1338 = vmatpush1.msra.mxu0 0.0
      %1339 = vmatprep.subr.mxu0 0.0
      %1340 = vmatpush1.msra.mxu0 0.0
      %1341 = vmatprep.subr.mxu0 0.0
      %1342 = vmatpush1.msra.mxu0 0.0
      %1343 = vmatprep.subr.mxu0 0.0
      %1344 = vmatpush1.msra.mxu0 0.0
      %1345 = vmatprep.subr.mxu0 0.0
      %1346 = vmatpush1.msra.mxu0 0.0
      %1347 = vmatprep.subr.mxu0 0.0
      %1348 = vmatpush1.msra.mxu0 0.0
      %1349 = vmatprep.subr.mxu0 0.0
      %1350 = vmatpush1.msra.mxu0 0.0
      %1351 = vmatprep.subr.mxu0 0.0
      %1352 = vmatpush1.msra.mxu0 0.0
      %1353 = vmatprep.subr.mxu0 0.0
      %1354 = vmatpush1.msra.mxu0 0.0
      %1355 = vmatprep.subr.mxu0 0.0
      %1356 = vmatpush1.msra.mxu0 0.0
      %1357 = vmatprep.subr.mxu0 0.0
      %1358 = vmatpush1.msra.mxu0 0.0
      %1359 = vmatprep.subr.mxu0 0.0
      %1360 = vmatpush1.msra.mxu0 0.0
      %1361 = vmatprep.subr.mxu0 0.0
      %1362 = vmatpush1.msra.mxu0 0.0
      %1363 = vmatprep.subr.mxu0 0.0
      %1364 = vmatpush1.msra.mxu0 0.0
      %1365 = vmatprep.subr.mxu0 0.0
      %1366 = vmatpush1.msra.mxu0 0.0
      %1367 = vmatprep.subr.mxu0 0.0
      %1368 = vmatpush1.msra.mxu0 0.0
      %1369 = vmatprep.subr.mxu0 0.0
      %1370 = vmatpush1.msra.mxu0 0.0
      %1371 = vmatprep.subr.mxu0 0.0
      %1372 = vmatpush1.msra.mxu0 0.0
      %1373 = vmatprep.subr.mxu0 0.0
      %1374 = vmatpush1.msra.mxu0 0.0
      %1375 = vmatprep.subr.mxu0 0.0
      %1376 = vmatpush1.msra.mxu0 0.0
      %1377 = vmatprep.subr.mxu0 0.0
      %1378 = vmatpush1.msra.mxu0 0.0
      %1379 = vmatprep.subr.mxu0 0.0
      %1380 = vmatpush1.msra.mxu0 0.0
      %1381 = vmatprep.subr.mxu0 0.0
      %1382 = vmatpush1.msra.mxu0 0.0
      %1383 = vmatprep.mubr.f32.mxu0 0.0
      %1384 = vmatmul.mubr.f32.gmra.mrb[0].mxu0 %v1308
      %v1385 = vpop.f32.mrb[0].mxu0
      %v1386 = vadd.f32 0.0, %v1385
      %v1387 = vpop.f32.mrb[0].mxu0
      %1388 = vmatprep.mubr.f32.mxu0 0.0
      %1389 = vmatmul.mubr.f32.gmra.mrb[0].mxu0 %v1311
      %v1390 = vpop.f32.mrb[0].mxu0
      %v1391 = vadd.f32 0.0, %v1390
      %v1392 = vpop.f32.mrb[0].mxu0
      %1393 = vmatprep.mubr.f32.mxu0 0.0
      %1394 = vmatmul.mubr.f32.gmra.mrb[0].mxu0 %v1314
      %v1395 = vpop.f32.mrb[0].mxu0
      %v1396 = vadd.f32 0.0, %v1395
      %v1397 = vpop.f32.mrb[0].mxu0
      %1398 = vmatprep.mubr.f32.mxu0 0.0
      %1399 = vmatmul.mubr.f32.gmra.mrb[0].mxu0 %v1317
      %v1400 = vpop.f32.mrb[0].mxu0
      %v1401 = vadd.f32 0.0, %v1400
      %v1402 = vpop.f32.mrb[0].mxu0
      %1403 = vdwg.mxu0
      %s1404 = scalar_lea.vmem %s3, 16
      %v1405 = vld [vmem:[%s1404] sm:$0xff]
      %v1407 = vsel %vm412, %v1386, 0
      %v1410 = vsel %vm412, %v1391, 0
      %v1413 = vsel %vm412, %v1396, 0
      %v1416 = vsel %vm412, %v1401, 0
      %1418 = vmatprep.subr.mxu0 0.0
      %1419 = vmatpush1.msra.mxu0 %v1405
      %1420 = vmatprep.subr.mxu0 0.0
      %1421 = vmatpush1.msra.mxu0 0.0
      %1422 = vmatprep.subr.mxu0 0.0
      %1423 = vmatpush1.msra.mxu0 0.0
      %1424 = vmatprep.subr.mxu0 0.0
      %1425 = vmatpush1.msra.mxu0 0.0
      %1426 = vmatprep.subr.mxu0 0.0
      %1427 = vmatpush1.msra.mxu0 0.0
      %1428 = vmatprep.subr.mxu0 0.0
      %1429 = vmatpush1.msra.mxu0 0.0
      %1430 = vmatprep.subr.mxu0 0.0
      %1431 = vmatpush1.msra.mxu0 0.0
      %1432 = vmatprep.subr.mxu0 0.0
      %1433 = vmatpush1.msra.mxu0 0.0
      %1434 = vmatprep.subr.mxu0 0.0
      %1435 = vmatpush1.msra.mxu0 0.0
      %1436 = vmatprep.subr.mxu0 0.0
      %1437 = vmatpush1.msra.mxu0 0.0
      %1438 = vmatprep.subr.mxu0 0.0
      %1439 = vmatpush1.msra.mxu0 0.0
      %1440 = vmatprep.subr.mxu0 0.0
      %1441 = vmatpush1.msra.mxu0 0.0
      %1442 = vmatprep.subr.mxu0 0.0
      %1443 = vmatpush1.msra.mxu0 0.0
      %1444 = vmatprep.subr.mxu0 0.0
      %1445 = vmatpush1.msra.mxu0 0.0
      %1446 = vmatprep.subr.mxu0 0.0
      %1447 = vmatpush1.msra.mxu0 0.0
      %1448 = vmatprep.subr.mxu0 0.0
      %1449 = vmatpush1.msra.mxu0 0.0
      %1450 = vmatprep.subr.mxu0 0.0
      %1451 = vmatpush1.msra.mxu0 0.0
      %1452 = vmatprep.subr.mxu0 0.0
      %1453 = vmatpush1.msra.mxu0 0.0
      %1454 = vmatprep.subr.mxu0 0.0
      %1455 = vmatpush1.msra.mxu0 0.0
      %1456 = vmatprep.subr.mxu0 0.0
      %1457 = vmatpush1.msra.mxu0 0.0
      %1458 = vmatprep.subr.mxu0 0.0
      %1459 = vmatpush1.msra.mxu0 0.0
      %1460 = vmatprep.subr.mxu0 0.0
      %1461 = vmatpush1.msra.mxu0 0.0
      %1462 = vmatprep.subr.mxu0 0.0
      %1463 = vmatpush1.msra.mxu0 0.0
      %1464 = vmatprep.subr.mxu0 0.0
      %1465 = vmatpush1.msra.mxu0 0.0
      %1466 = vmatprep.subr.mxu0 0.0
      %1467 = vmatpush1.msra.mxu0 0.0
      %1468 = vmatprep.subr.mxu0 0.0
      %1469 = vmatpush1.msra.mxu0 0.0
      %1470 = vmatprep.subr.mxu0 0.0
      %1471 = vmatpush1.msra.mxu0 0.0
      %1472 = vmatprep.subr.mxu0 0.0
      %1473 = vmatpush1.msra.mxu0 0.0
      %1474 = vmatprep.subr.mxu0 0.0
      %1475 = vmatpush1.msra.mxu0 0.0
      %1476 = vmatprep.subr.mxu0 0.0
      %1477 = vmatpush1.msra.mxu0 0.0
      %1478 = vmatprep.subr.mxu0 0.0
      %1479 = vmatpush1.msra.mxu0 0.0
      %1480 = vmatprep.subr.mxu0 0.0
      %1481 = vmatpush1.msra.mxu0 0.0
      %1482 = vmatprep.mubr.f32.mxu0 0.0
      %1483 = vmatmul.mubr.f32.gmra.mrb[0].mxu0 %v1407
      %v1484 = vpop.f32.mrb[0].mxu0
      %v1485 = vadd.f32 0.0, %v1484
      %v1486 = vpop.f32.mrb[0].mxu0
      %1487 = vmatprep.mubr.f32.mxu0 0.0
      %1488 = vmatmul.mubr.f32.gmra.mrb[0].mxu0 %v1410
      %v1489 = vpop.f32.mrb[0].mxu0
      %v1490 = vadd.f32 0.0, %v1489
      %v1491 = vpop.f32.mrb[0].mxu0
      %1492 = vmatprep.mubr.f32.mxu0 0.0
      %1493 = vmatmul.mubr.f32.gmra.mrb[0].mxu0 %v1413
      %v1494 = vpop.f32.mrb[0].mxu0
      %v1495 = vadd.f32 0.0, %v1494
      %v1496 = vpop.f32.mrb[0].mxu0
      %1497 = vmatprep.mubr.f32.mxu0 0.0
      %1498 = vmatmul.mubr.f32.gmra.mrb[0].mxu0 %v1416
      %v1499 = vpop.f32.mrb[0].mxu0
      %v1500 = vadd.f32 0.0, %v1499
      %v1501 = vpop.f32.mrb[0].mxu0
      %1502 = vdwg.mxu0
      %v1503 = vadd.f32 %v1116, %v1485
      %v1504 = vadd.f32 %v1121, %v1490
      %v1505 = vadd.f32 %v1126, %v1495
      %v1506 = vadd.f32 %v1131, %v1500
      %1507 = vrot.lane.b32.xlu0 %v396, 104
      %v1508 = vpop.permute.xlu0 %1507
      %1509 = vrot.lane.b32.xlu0 %v397, 104
      %v1510 = vpop.permute.xlu0 %1509
      %1511 = vrot.lane.b32.xlu0 %v398, 104
      %v1512 = vpop.permute.xlu0 %1511
      %1513 = vrot.lane.b32.xlu0 %v399, 104
      %v1514 = vpop.permute.xlu0 %1513
      %1515 = vrot.lane.b32.xlu0 %v396, 72
      %v1516 = vpop.permute.xlu0 %1515
      %1517 = vrot.lane.b32.xlu0 %v397, 72
      %v1518 = vpop.permute.xlu0 %1517
      %1519 = vrot.lane.b32.xlu0 %v398, 72
      %v1520 = vpop.permute.xlu0 %1519
      %1521 = vrot.lane.b32.xlu0 %v399, 72
      %v1522 = vpop.permute.xlu0 %1521
      %v1523 = vsel %vm412, %v1508, 0
      %v1525 = vsel %vm412, %v1510, 0
      %v1527 = vsel %vm412, %v1512, 0
      %v1529 = vsel %vm412, %v1514, 0
      %v1531 = vsel %vm412, %v1516, 0
      %v1533 = vsel %vm412, %v1518, 0
      %v1535 = vsel %vm412, %v1520, 0
      %v1537 = vsel %vm412, %v1522, 0
      %1539 = vmatprep.subr.mxu0 0.0
      %1540 = vmatpush1.xpose.msra.mxu0 %v1531
      %1541 = vmatprep.subr.mxu0 0.0
      %1542 = vmatpush1.xpose.msra.mxu0 %v1533
      %1543 = vmatprep.subr.mxu0 0.0
      %1544 = vmatpush1.xpose.msra.mxu0 %v1535
      %1545 = vmatprep.subr.mxu0 0.0
      %1546 = vmatpush1.xpose.msra.mxu0 %v1537
      %1547 = vmatprep.subr.mxu0 0.0
      %1548 = vmatpush1.xpose.msra.mxu0 0.0
      %1549 = vmatprep.subr.mxu0 0.0
      %1550 = vmatpush1.xpose.msra.mxu0 0.0
      %1551 = vmatprep.subr.mxu0 0.0
      %1552 = vmatpush1.xpose.msra.mxu0 0.0
      %1553 = vmatprep.subr.mxu0 0.0
      %1554 = vmatpush1.xpose.msra.mxu0 0.0
      %1555 = vmatprep.subr.mxu0 0.0
      %1556 = vmatpush1.xpose.msra.mxu0 0.0
      %1557 = vmatprep.subr.mxu0 0.0
      %1558 = vmatpush1.xpose.msra.mxu0 0.0
      %1559 = vmatprep.subr.mxu0 0.0
      %1560 = vmatpush1.xpose.msra.mxu0 0.0
      %1561 = vmatprep.subr.mxu0 0.0
      %1562 = vmatpush1.xpose.msra.mxu0 0.0
      %1563 = vmatprep.subr.mxu0 0.0
      %1564 = vmatpush1.xpose.msra.mxu0 0.0
      %1565 = vmatprep.subr.mxu0 0.0
      %1566 = vmatpush1.xpose.msra.mxu0 0.0
      %1567 = vmatprep.subr.mxu0 0.0
      %1568 = vmatpush1.xpose.msra.mxu0 0.0
      %1569 = vmatprep.subr.mxu0 0.0
      %1570 = vmatpush1.xpose.msra.mxu0 0.0
      %1571 = vmatprep.subr.mxu0 0.0
      %1572 = vmatpush1.xpose.msra.mxu0 0.0
      %1573 = vmatprep.subr.mxu0 0.0
      %1574 = vmatpush1.xpose.msra.mxu0 0.0
      %1575 = vmatprep.subr.mxu0 0.0
      %1576 = vmatpush1.xpose.msra.mxu0 0.0
      %1577 = vmatprep.subr.mxu0 0.0
      %1578 = vmatpush1.xpose.msra.mxu0 0.0
      %1579 = vmatprep.subr.mxu0 0.0
      %1580 = vmatpush1.xpose.msra.mxu0 0.0
      %1581 = vmatprep.subr.mxu0 0.0
      %1582 = vmatpush1.xpose.msra.mxu0 0.0
      %1583 = vmatprep.subr.mxu0 0.0
      %1584 = vmatpush1.xpose.msra.mxu0 0.0
      %1585 = vmatprep.subr.mxu0 0.0
      %1586 = vmatpush1.xpose.msra.mxu0 0.0
      %1587 = vmatprep.subr.mxu0 0.0
      %1588 = vmatpush1.xpose.msra.mxu0 0.0
      %1589 = vmatprep.subr.mxu0 0.0
      %1590 = vmatpush1.xpose.msra.mxu0 0.0
      %1591 = vmatprep.subr.mxu0 0.0
      %1592 = vmatpush1.xpose.msra.mxu0 0.0
      %1593 = vmatprep.subr.mxu0 0.0
      %1594 = vmatpush1.xpose.msra.mxu0 0.0
      %1595 = vmatprep.subr.mxu0 0.0
      %1596 = vmatpush1.xpose.msra.mxu0 0.0
      %1597 = vmatprep.subr.mxu0 0.0
      %1598 = vmatpush1.xpose.msra.mxu0 0.0
      %1599 = vmatprep.subr.mxu0 0.0
      %1600 = vmatpush1.xpose.msra.mxu0 0.0
      %1601 = vmatprep.subr.mxu0 0.0
      %1602 = vmatpush1.xpose.msra.mxu0 0.0
      %1603 = vmatprep.mubr.f32.mxu0 0.0
      %1604 = vmatmul.mubr.f32.gmra.mrb[0].mxu0 %v1523
      %v1605 = vpop.f32.mrb[0].mxu0
      %v1606 = vadd.f32 0.0, %v1605
      %v1607 = vpop.f32.mrb[0].mxu0
      %1608 = vmatprep.mubr.f32.mxu0 0.0
      %1609 = vmatmul.mubr.f32.gmra.mrb[0].mxu0 %v1525
      %v1610 = vpop.f32.mrb[0].mxu0
      %v1611 = vadd.f32 0.0, %v1610
      %v1612 = vpop.f32.mrb[0].mxu0
      %1613 = vmatprep.mubr.f32.mxu0 0.0
      %1614 = vmatmul.mubr.f32.gmra.mrb[0].mxu0 %v1527
      %v1615 = vpop.f32.mrb[0].mxu0
      %v1616 = vadd.f32 0.0, %v1615
      %v1617 = vpop.f32.mrb[0].mxu0
      %1618 = vmatprep.mubr.f32.mxu0 0.0
      %1619 = vmatmul.mubr.f32.gmra.mrb[0].mxu0 %v1529
      %v1620 = vpop.f32.mrb[0].mxu0
      %v1621 = vadd.f32 0.0, %v1620
      %v1622 = vpop.f32.mrb[0].mxu0
      %1623 = vdwg.mxu0
      %v1624 = vsel %vm229, %v1606, -inf
      %1625 = vmax.xlane.f32.xlu0 %v1624
      %v1626 = vpop.xlane.xlu0 %1625
      %v1627 = vsel %vm229, %v1611, -inf
      %1628 = vmax.xlane.f32.xlu0 %v1627
      %v1629 = vpop.xlane.xlu0 %1628
      %v1630 = vsel %vm229, %v1616, -inf
      %1631 = vmax.xlane.f32.xlu0 %v1630
      %v1632 = vpop.xlane.xlu0 %1631
      %v1633 = vsel %vm229, %v1621, -inf
      %1634 = vmax.xlane.f32.xlu0 %v1633
      %v1635 = vpop.xlane.xlu0 %1634
      %v1636 = vsub.f32 %v1606, %v1626
      %v1637 = vsub.f32 %v1611, %v1629
      %v1638 = vsub.f32 %v1616, %v1632
      %v1639 = vsub.f32 %v1621, %v1635
      %v1640 = vmul.f32 %v1636, 1.442695
      %v1641 = vpow.pop %v1640
      %v1642 = vmul.f32 %v1637, 1.442695
      %v1643 = vpow.pop %v1642
      %v1644 = vmul.f32 %v1638, 1.442695
      %v1645 = vpow.pop %v1644
      %v1646 = vmul.f32 %v1639, 1.442695
      %v1647 = vpow.pop %v1646
      %v1648 = vsel %vm229, %v1641, 0.0
      %1649 = vadd.xlane.f32.xlu0 %v1648
      %v1650 = vpop.xlane.xlu0 %1649
      %v1651 = vsel %vm229, %v1643, 0.0
      %1652 = vadd.xlane.f32.xlu0 %v1651
      %v1653 = vpop.xlane.xlu0 %1652
      %v1654 = vsel %vm229, %v1645, 0.0
      %1655 = vadd.xlane.f32.xlu0 %v1654
      %v1656 = vpop.xlane.xlu0 %1655
      %v1657 = vsel %vm229, %v1647, 0.0
      %1658 = vadd.xlane.f32.xlu0 %v1657
      %v1659 = vpop.xlane.xlu0 %1658
      %v1660 = vrcp.pop %v1650
      %v1661 = vrcp.pop %v1653
      %v1662 = vrcp.pop %v1656
      %v1663 = vrcp.pop %v1659
      %v1664 = vmul.f32 %v1641, %v1660
      %v1665 = vmul.f32 %v1643, %v1661
      %v1666 = vmul.f32 %v1645, %v1662
      %v1667 = vmul.f32 %v1647, %v1663
      %1668 = vrot.lane.b32.xlu0 %v396, 40
      %v1669 = vpop.permute.xlu0 %1668
      %1670 = vrot.lane.b32.xlu0 %v397, 40
      %v1671 = vpop.permute.xlu0 %1670
      %1672 = vrot.lane.b32.xlu0 %v398, 40
      %v1673 = vpop.permute.xlu0 %1672
      %1674 = vrot.lane.b32.xlu0 %v399, 40
      %v1675 = vpop.permute.xlu0 %1674
      %v1681 = vsel %vm229, %v1664, 0
      %v1684 = vsel %vm229, %v1665, 0
      %v1687 = vsel %vm229, %v1666, 0
      %v1690 = vsel %vm229, %v1667, 0
      %1692 = vmatprep.subr.mxu0 0.0
      %1693 = vmatpush1.msra.mxu0 %v1669
      %1694 = vmatprep.subr.mxu0 0.0
      %1695 = vmatpush1.msra.mxu0 %v1671
      %1696 = vmatprep.subr.mxu0 0.0
      %1697 = vmatpush1.msra.mxu0 %v1673
      %1698 = vmatprep.subr.mxu0 0.0
      %1699 = vmatpush1.msra.mxu0 %v1675
      %1700 = vmatprep.subr.mxu0 0.0
      %1701 = vmatpush1.msra.mxu0 0.0
      %1702 = vmatprep.subr.mxu0 0.0
      %1703 = vmatpush1.msra.mxu0 0.0
      %1704 = vmatprep.subr.mxu0 0.0
      %1705 = vmatpush1.msra.mxu0 0.0
      %1706 = vmatprep.subr.mxu0 0.0
      %1707 = vmatpush1.msra.mxu0 0.0
      %1708 = vmatprep.subr.mxu0 0.0
      %1709 = vmatpush1.msra.mxu0 0.0
      %1710 = vmatprep.subr.mxu0 0.0
      %1711 = vmatpush1.msra.mxu0 0.0
      %1712 = vmatprep.subr.mxu0 0.0
      %1713 = vmatpush1.msra.mxu0 0.0
      %1714 = vmatprep.subr.mxu0 0.0
      %1715 = vmatpush1.msra.mxu0 0.0
      %1716 = vmatprep.subr.mxu0 0.0
      %1717 = vmatpush1.msra.mxu0 0.0
      %1718 = vmatprep.subr.mxu0 0.0
      %1719 = vmatpush1.msra.mxu0 0.0
      %1720 = vmatprep.subr.mxu0 0.0
      %1721 = vmatpush1.msra.mxu0 0.0
      %1722 = vmatprep.subr.mxu0 0.0
      %1723 = vmatpush1.msra.mxu0 0.0
      %1724 = vmatprep.subr.mxu0 0.0
      %1725 = vmatpush1.msra.mxu0 0.0
      %1726 = vmatprep.subr.mxu0 0.0
      %1727 = vmatpush1.msra.mxu0 0.0
      %1728 = vmatprep.subr.mxu0 0.0
      %1729 = vmatpush1.msra.mxu0 0.0
      %1730 = vmatprep.subr.mxu0 0.0
      %1731 = vmatpush1.msra.mxu0 0.0
      %1732 = vmatprep.subr.mxu0 0.0
      %1733 = vmatpush1.msra.mxu0 0.0
      %1734 = vmatprep.subr.mxu0 0.0
      %1735 = vmatpush1.msra.mxu0 0.0
      %1736 = vmatprep.subr.mxu0 0.0
      %1737 = vmatpush1.msra.mxu0 0.0
      %1738 = vmatprep.subr.mxu0 0.0
      %1739 = vmatpush1.msra.mxu0 0.0
      %1740 = vmatprep.subr.mxu0 0.0
      %1741 = vmatpush1.msra.mxu0 0.0
      %1742 = vmatprep.subr.mxu0 0.0
      %1743 = vmatpush1.msra.mxu0 0.0
      %1744 = vmatprep.subr.mxu0 0.0
      %1745 = vmatpush1.msra.mxu0 0.0
      %1746 = vmatprep.subr.mxu0 0.0
      %1747 = vmatpush1.msra.mxu0 0.0
      %1748 = vmatprep.subr.mxu0 0.0
      %1749 = vmatpush1.msra.mxu0 0.0
      %1750 = vmatprep.subr.mxu0 0.0
      %1751 = vmatpush1.msra.mxu0 0.0
      %1752 = vmatprep.subr.mxu0 0.0
      %1753 = vmatpush1.msra.mxu0 0.0
      %1754 = vmatprep.subr.mxu0 0.0
      %1755 = vmatpush1.msra.mxu0 0.0
      %1756 = vmatprep.mubr.f32.mxu0 0.0
      %1757 = vmatmul.mubr.f32.gmra.mrb[0].mxu0 %v1681
      %v1758 = vpop.f32.mrb[0].mxu0
      %v1759 = vadd.f32 0.0, %v1758
      %v1760 = vpop.f32.mrb[0].mxu0
      %1761 = vmatprep.mubr.f32.mxu0 0.0
      %1762 = vmatmul.mubr.f32.gmra.mrb[0].mxu0 %v1684
      %v1763 = vpop.f32.mrb[0].mxu0
      %v1764 = vadd.f32 0.0, %v1763
      %v1765 = vpop.f32.mrb[0].mxu0
      %1766 = vmatprep.mubr.f32.mxu0 0.0
      %1767 = vmatmul.mubr.f32.gmra.mrb[0].mxu0 %v1687
      %v1768 = vpop.f32.mrb[0].mxu0
      %v1769 = vadd.f32 0.0, %v1768
      %v1770 = vpop.f32.mrb[0].mxu0
      %1771 = vmatprep.mubr.f32.mxu0 0.0
      %1772 = vmatmul.mubr.f32.gmra.mrb[0].mxu0 %v1690
      %v1773 = vpop.f32.mrb[0].mxu0
      %v1774 = vadd.f32 0.0, %v1773
      %v1775 = vpop.f32.mrb[0].mxu0
      %1776 = vdwg.mxu0
      %s1777 = scalar_lea.vmem %s3, 24
      %v1778 = vld [vmem:[%s1777] sm:$0xff]
      %v1780 = vsel %vm412, %v1759, 0
      %v1783 = vsel %vm412, %v1764, 0
      %v1786 = vsel %vm412, %v1769, 0
      %v1789 = vsel %vm412, %v1774, 0
      %1791 = vmatprep.subr.mxu0 0.0
      %1792 = vmatpush1.msra.mxu0 %v1778
      %1793 = vmatprep.subr.mxu0 0.0
      %1794 = vmatpush1.msra.mxu0 0.0
      %1795 = vmatprep.subr.mxu0 0.0
      %1796 = vmatpush1.msra.mxu0 0.0
      %1797 = vmatprep.subr.mxu0 0.0
      %1798 = vmatpush1.msra.mxu0 0.0
      %1799 = vmatprep.subr.mxu0 0.0
      %1800 = vmatpush1.msra.mxu0 0.0
      %1801 = vmatprep.subr.mxu0 0.0
      %1802 = vmatpush1.msra.mxu0 0.0
      %1803 = vmatprep.subr.mxu0 0.0
      %1804 = vmatpush1.msra.mxu0 0.0
      %1805 = vmatprep.subr.mxu0 0.0
      %1806 = vmatpush1.msra.mxu0 0.0
      %1807 = vmatprep.subr.mxu0 0.0
      %1808 = vmatpush1.msra.mxu0 0.0
      %1809 = vmatprep.subr.mxu0 0.0
      %1810 = vmatpush1.msra.mxu0 0.0
      %1811 = vmatprep.subr.mxu0 0.0
      %1812 = vmatpush1.msra.mxu0 0.0
      %1813 = vmatprep.subr.mxu0 0.0
      %1814 = vmatpush1.msra.mxu0 0.0
      %1815 = vmatprep.subr.mxu0 0.0
      %1816 = vmatpush1.msra.mxu0 0.0
      %1817 = vmatprep.subr.mxu0 0.0
      %1818 = vmatpush1.msra.mxu0 0.0
      %1819 = vmatprep.subr.mxu0 0.0
      %1820 = vmatpush1.msra.mxu0 0.0
      %1821 = vmatprep.subr.mxu0 0.0
      %1822 = vmatpush1.msra.mxu0 0.0
      %1823 = vmatprep.subr.mxu0 0.0
      %1824 = vmatpush1.msra.mxu0 0.0
      %1825 = vmatprep.subr.mxu0 0.0
      %1826 = vmatpush1.msra.mxu0 0.0
      %1827 = vmatprep.subr.mxu0 0.0
      %1828 = vmatpush1.msra.mxu0 0.0
      %1829 = vmatprep.subr.mxu0 0.0
      %1830 = vmatpush1.msra.mxu0 0.0
      %1831 = vmatprep.subr.mxu0 0.0
      %1832 = vmatpush1.msra.mxu0 0.0
      %1833 = vmatprep.subr.mxu0 0.0
      %1834 = vmatpush1.msra.mxu0 0.0
      %1835 = vmatprep.subr.mxu0 0.0
      %1836 = vmatpush1.msra.mxu0 0.0
      %1837 = vmatprep.subr.mxu0 0.0
      %1838 = vmatpush1.msra.mxu0 0.0
      %1839 = vmatprep.subr.mxu0 0.0
      %1840 = vmatpush1.msra.mxu0 0.0
      %1841 = vmatprep.subr.mxu0 0.0
      %1842 = vmatpush1.msra.mxu0 0.0
      %1843 = vmatprep.subr.mxu0 0.0
      %1844 = vmatpush1.msra.mxu0 0.0
      %1845 = vmatprep.subr.mxu0 0.0
      %1846 = vmatpush1.msra.mxu0 0.0
      %1847 = vmatprep.subr.mxu0 0.0
      %1848 = vmatpush1.msra.mxu0 0.0
      %1849 = vmatprep.subr.mxu0 0.0
      %1850 = vmatpush1.msra.mxu0 0.0
      %1851 = vmatprep.subr.mxu0 0.0
      %1852 = vmatpush1.msra.mxu0 0.0
      %1853 = vmatprep.subr.mxu0 0.0
      %1854 = vmatpush1.msra.mxu0 0.0
      %1855 = vmatprep.mubr.f32.mxu0 0.0
      %1856 = vmatmul.mubr.f32.gmra.mrb[0].mxu0 %v1780
      %v1857 = vpop.f32.mrb[0].mxu0
      %v1858 = vadd.f32 0.0, %v1857
      %v1859 = vpop.f32.mrb[0].mxu0
      %1860 = vmatprep.mubr.f32.mxu0 0.0
      %1861 = vmatmul.mubr.f32.gmra.mrb[0].mxu0 %v1783
      %v1862 = vpop.f32.mrb[0].mxu0
      %v1863 = vadd.f32 0.0, %v1862
      %v1864 = vpop.f32.mrb[0].mxu0
      %1865 = vmatprep.mubr.f32.mxu0 0.0
      %1866 = vmatmul.mubr.f32.gmra.mrb[0].mxu0 %v1786
      %v1867 = vpop.f32.mrb[0].mxu0
      %v1868 = vadd.f32 0.0, %v1867
      %v1869 = vpop.f32.mrb[0].mxu0
      %1870 = vmatprep.mubr.f32.mxu0 0.0
      %1871 = vmatmul.mubr.f32.gmra.mrb[0].mxu0 %v1789
      %v1872 = vpop.f32.mrb[0].mxu0
      %v1873 = vadd.f32 0.0, %v1872
      %v1874 = vpop.f32.mrb[0].mxu0
      %1875 = vdwg.mxu0
      %v1876 = vadd.f32 %v1503, %v1858
      %v1877 = vadd.f32 %v1504, %v1863
      %v1878 = vadd.f32 %v1505, %v1868
      %v1879 = vadd.f32 %v1506, %v1873
      %v1880 = vld [vmem:[%s219] sm:$0xff]
      %v1881 = vld [vmem:[%s219 + $0x8] sm:$0xff]
      %v1882 = vld [vmem:[%s219 + $0x10] sm:$0xff]
      %v1883 = vld [vmem:[%s219 + $0x18] sm:$0xff]
      %v1884 = vld [vmem:[%s4] sm:$0x1]
      %v1886 = vlaneseq
      %v1887 = vshrl.u32 %v1886, 7
      %v1888 = vsub.s32 0, %v1887
      %v1889 = vrot.slane %v1884, %v1888
      %v1891 = vadd.f32 %v1876, %v1889
      %v1892 = vadd.f32 %v1877, %v1889
      %v1893 = vadd.f32 %v1878, %v1889
      %v1894 = vadd.f32 %v1879, %v1889
      %v1895 = vadd.f32 %v1891, %v1880
      %v1896 = vadd.f32 %v1892, %v1881
      %v1897 = vadd.f32 %v1893, %v1882
      %v1898 = vadd.f32 %v1894, %v1883
      %1899 = vst.msk [vmem:[%s224] sm:$0xff] %vm229, %v1895
      %1900 = vst.msk [vmem:[%s224 + $0x8] sm:$0xff] %vm229, %v1896
      %1901 = vst.msk [vmem:[%s224 + $0x10] sm:$0xff] %vm229, %v1897
      %1902 = vst.msk [vmem:[%s224 + $0x18] sm:$0xff] %vm229, %v1898
      %p1903 = scmp.lt.s32.totalorder %s16, 1
      %s1904 = scalar_select %p1903, %s16, 1
      %s1905 = smul.addr %s1904, 4
      %s1906 = smul.addr %s1905, 8
      %s1907 = scalar_lea.vmem %s5, %s1906
      // Predicated region
      $region41: #{projet_transformer_forward.4} parent=39 // pred_check
        %p1908 = pneg %p144
      $region42: #{projet_transformer_forward.4} parent=39 // pred_check_branch
        %1910 = sbr.rel (%p1908) target = $region44
      $region43: #{projet_transformer_forward.4} parent=39 // pred_region
        _
      $region44: #{projet_transformer_forward.4} parent=39 // pred_fallthru
        _
    $region40: #{projet_transformer_forward.4} parent=5 // pred_fallthru
      _
    %p1911 = scmp.le.s32.totalorder 2, %s11
    // Predicated region
    $region45: #{projet_transformer_forward.4} parent=5 // pred_check
      %p1912 = pneg %p1911
    $region46: #{projet_transformer_forward.4} parent=5 // pred_check_branch
      %1914 = sbr.rel (%p1912) target = $region48
    $region47: #{projet_transformer_forward.4} parent=5 // pred_region
      %s1915 = ssub.s32 %s11, 2
      // Predicated region
      $region49: #{projet_transformer_forward.4} parent=47 // pred_check
        %p1916 = pneg %p150
      $region50: #{projet_transformer_forward.4} parent=47 // pred_check_branch
        %1918 = sbr.rel (%p1916) target = $region52
      $region51: #{projet_transformer_forward.4} parent=47 // pred_region
        %p1919 = scmp.lt.s32.totalorder %s17, 1
        %s1920 = scalar_select %p1919, %s17, 1
        %s1921 = smul.addr %s1920, 4
        %s1922 = smul.addr %s1921, 8
        %s1923 = scalar_lea.vmem %s5, %s1922
      $region52: #{projet_transformer_forward.4} parent=47 // pred_fallthru
        _
    $region48: #{projet_transformer_forward.4} parent=5 // pred_fallthru
      _
  $region6: #{projet_transformer_forward.4} parent=0 // loop_footer
    %s15 = sadd.s32 1, %s11
  $region7: #{projet_transformer_forward.4} parent=0 // loop_footer_branch
    %10 = sbr.rel target = $region3
  $region8: #{projet_transformer_forward.4} parent=0 // loop_exit
    _

</llo_original>
